<compile_context>
chip_gen: v7x
topology: tpu7x:2x2x1
jax: 0.10.0
libtpu: 0.0.40
codegen_flags: <defaults>
</compile_context>

<pallas_src>
import math
import functools

import jax
import jax.numpy as jnp
from jax.experimental import pallas as pl
from jax.experimental.pallas import tpu as pltpu

# ---------------- model hyper-parameters (small test sizes) ----------------
BATCH = 2
SEQ = 16          # backbone sequence length L
VOCAB = 20
EMBED_DIM = 32    # backbone.config.hidden_size
HIDDEN_DIM = 32   # FFN hidden dim (hidden_dim arg; defaults to embed_dim)
NUM_LATENTS = 8
NUM_HEADS = 4
HEAD_DIM = EMBED_DIM // NUM_HEADS
NUM_PERCEIVER_LAYERS = 1
NUM_SELF_LAYERS = 1

WEIGHT_ORDER = ("lnq_g", "lnq_b", "lnkv_g", "lnkv_b", "lnf_g", "lnf_b",
                "wq", "wkv", "wo", "w1", "w2")
_BF16_WEIGHTS = frozenset({"wq", "wkv", "wo", "w1", "w2"})
_PER_LAYER = len(WEIGHT_ORDER)


# =====================================================================
# Fused perceiver kernel: one grid step per branch (ligand / receptor).
#   refs = [emb, cross_bias, self_bias, latents, pool_mat,
#           11 weight refs per layer (cross layers first, then self layers),
#           out_ref, attn_scratch]
# =====================================================================
def _perceiver_kernel(n_cross, n_self, *refs):
    n_in = 5 + _PER_LAYER * (n_cross + n_self)
    emb_ref, xbias_ref, sbias_ref, lat_ref, pool_ref = refs[:5]
    w_refs = refs[5:n_in]
    out_ref = refs[n_in]
    attn_scr = refs[n_in + 1]          # VMEM scratch (B*N, D) f32

    emb = emb_ref[0].astype(jnp.float32)        # (B*L, D)  branch embeddings
    xbias = xbias_ref[0]                        # (B*N, B*L) additive mask
    sbias = sbias_ref[...]                      # (B*N, B*N) additive mask
    x = lat_ref[...].astype(jnp.float32)        # (B*N, D)  tiled latents

    def layernorm(z, g_ref, b_ref):
        mu = jnp.mean(z, axis=-1, keepdims=True)
        c = z - mu
        var = jnp.mean(c * c, axis=-1, keepdims=True)
        return c * jax.lax.rsqrt(var + 1e-5) * g_ref[...] + b_ref[...]

    scale = 1.0 / math.sqrt(HEAD_DIM)
    contract_last = (((1,), (1,)), ((), ()))    # dot_general: Q @ K^T w/o transpose

    def block(x, kv, bias, w):
        (lnq_g, lnq_b, lnkv_g, lnkv_b, lnf_g, lnf_b,
         wq, wkv, wo, w1, w2) = w
        # pre-LN in f32, bf16 into the MXU, f32 accumulation
        q_in = layernorm(x, lnq_g, lnq_b).astype(jnp.bfloat16)
        kv_in = layernorm(kv, lnkv_g, lnkv_b).astype(jnp.bfloat16)
        q = jnp.dot(q_in, wq[...], preferred_element_type=jnp.float32)      # (Mq, D)
        kvp = jnp.dot(kv_in, wkv[...], preferred_element_type=jnp.float32)  # (Mk, 2D)
        k = kvp[:, :EMBED_DIM]
        v = kvp[:, EMBED_DIM:]

        # multi-head attention: head outputs land in a VMEM scratch at static
        # lane offsets (no concatenate), then one full-width W_o matmul.
        for h in range(NUM_HEADS):               # static unroll (NUM_HEADS = 4)
            lo = h * HEAD_DIM
            qh = q[:, lo:lo + HEAD_DIM].astype(jnp.bfloat16)
            kh = k[:, lo:lo + HEAD_DIM].astype(jnp.bfloat16)
            vh = v[:, lo:lo + HEAD_DIM].astype(jnp.bfloat16)
            s = jax.lax.dot_general(qh, kh, contract_last,
                                    preferred_element_type=jnp.float32)
            s = s * scale + bias                 # block-diag batch mask + padding
            m = jnp.max(s, axis=-1, keepdims=True)
            p = jnp.exp(s - m)
            inv = pl.reciprocal(jnp.sum(p, axis=-1, keepdims=True), approx=True)
            p = p * inv
            attn_scr[:, lo:lo + HEAD_DIM] = jnp.dot(
                p.astype(jnp.bfloat16), vh, preferred_element_type=jnp.float32)

        attn = jnp.dot(attn_scr[...].astype(jnp.bfloat16), wo[...],
                       preferred_element_type=jnp.float32)                  # (Mq, D)
        x = x + attn                                                        # residual 1

        # pre-LN SiLU FFN: bf16 matmuls, f32 elementwise
        f_in = layernorm(x, lnf_g, lnf_b).astype(jnp.bfloat16)
        h1 = jnp.dot(f_in, w1[...], preferred_element_type=jnp.float32)
        h1 = h1 * jax.nn.sigmoid(h1)                                        # SiLU
        ff = jnp.dot(h1.astype(jnp.bfloat16), w2[...],
                     preferred_element_type=jnp.float32)
        return x + ff                                                       # residual 2

    li = 0
    for _ in range(n_cross):                     # latents <- embeddings
        x = block(x, emb, xbias, tuple(w_refs[_PER_LAYER * li:_PER_LAYER * (li + 1)]))
        li += 1
    for _ in range(n_self):                      # latent self-attention
        x = block(x, x, sbias, tuple(w_refs[_PER_LAYER * li:_PER_LAYER * (li + 1)]))
        li += 1

    # mean-pool over latents per batch row via a block-diagonal pooling matrix
    out_ref[0] = jnp.dot(pool_ref[...], x,
                         preferred_element_type=jnp.float32).astype(out_ref.dtype)


def fused_perceiver(emb_stacked, cross_bias, self_bias, lat_tiled, pool_mat,
                    cross_layers, self_layers):
    """emb_stacked: (2, B*L, D). Returns per-branch mean-pooled latents (2, B, D)."""
    n_br, ML, D = emb_stacked.shape
    Mq = lat_tiled.shape[0]                      # B * NUM_LATENTS
    B = pool_mat.shape[0]

    branch3 = lambda g: (g, 0, 0)
    shared2 = lambda g: (0, 0)

    args = [emb_stacked, cross_bias, self_bias, lat_tiled, pool_mat]
    in_specs = [
        pl.BlockSpec((1, ML, D), branch3),       # embeddings (per branch)
        pl.BlockSpec((1, Mq, ML), branch3),      # cross-attn additive mask
        pl.BlockSpec((Mq, Mq), shared2),         # self-attn additive mask
        pl.BlockSpec((Mq, D), shared2),          # tiled initial latents
        pl.BlockSpec((B, Mq), shared2),          # mean-pool matrix
    ]
    # TODO(synk): at real sizes (D~1024, L~1-4K) tile the weight K dimension /
    # use pipeline_mode=pl.Buffered(1) and set vmem_limit_bytes (v7x: 64 MiB VMEM).
    for lp in list(cross_layers) + list(self_layers):
        for name in WEIGHT_ORDER:
            w = lp[name]
            if name in _BF16_WEIGHTS:
                w = w.astype(jnp.bfloat16)       # halve weight DMA / vreg traffic
            args.append(w)
            in_specs.append(pl.BlockSpec(w.shape, shared2))

    kernel = functools.partial(_perceiver_kernel,
                               len(cross_layers), len(self_layers))
    return pl.pallas_call(
        kernel,
        out_shape=jax.ShapeDtypeStruct((n_br, B, D), jnp.float32),
        grid=(n_br,),
        in_specs=in_specs,
        out_specs=pl.BlockSpec((1, B, D), branch3),
        scratch_shapes=[pltpu.VMEM((Mq, D), jnp.float32)],
        compiler_params=pltpu.CompilerParams(
            dimension_semantics=("parallel",)),  # v7x: one branch per TensorCore
    )(*args)


# =====================================================================
# Parameter construction (deterministic, synthetic; bias=False everywhere
# except the output head, matching the module defaults).
# =====================================================================
def _block_params(key, d, h):
    ks = jax.random.split(key, 5)
    init = lambda k, shape: (0.02 * jax.random.normal(k, shape)).astype(jnp.float32)
    return {
        "lnq_g": jnp.ones((1, d), jnp.float32), "lnq_b": jnp.zeros((1, d), jnp.float32),
        "lnkv_g": jnp.ones((1, d), jnp.float32), "lnkv_b": jnp.zeros((1, d), jnp.float32),
        "lnf_g": jnp.ones((1, d), jnp.float32), "lnf_b": jnp.zeros((1, d), jnp.float32),
        "wq": init(ks[0], (d, d)),
        "wkv": init(ks[1], (d, 2 * d)),          # W_k | W_v fused along output dim
        "wo": init(ks[2], (d, d)),
        "w1": init(ks[3], (d, h)), "w2": init(ks[4], (h, d)),
    }


def make_params(key):
    keys = jax.random.split(key, 4 + NUM_PERCEIVER_LAYERS + NUM_SELF_LAYERS)
    return {
        # TODO(synk): real backbone is an arbitrary HF transformer; synthetic
        # deterministic embedding table stands in for BackbonePairEmbeddingExtraction.
        "embed_table": (0.1 * jax.random.normal(keys[0], (VOCAB, EMBED_DIM))
                        ).astype(jnp.float32),
        "latents": (0.02 * jax.random.normal(keys[1], (NUM_LATENTS, EMBED_DIM))
                    ).astype(jnp.float32),
        "cross_layers": [_block_params(keys[4 + i], EMBED_DIM, HIDDEN_DIM)
                         for i in range(NUM_PERCEIVER_LAYERS)],
        "self_layers": [_block_params(keys[4 + NUM_PERCEIVER_LAYERS + i],
                                      EMBED_DIM, HIDDEN_DIM)
                        for i in range(NUM_SELF_LAYERS)],
        # output head: weight ~ U(-0.1, 0.1), bias = 0 (reset_parameters)
        "w_out": jax.random.uniform(keys[2], (EMBED_DIM, 1),
                                    minval=-0.1, maxval=0.1).astype(jnp.float32),
        "b_out": jnp.zeros((1, 1), jnp.float32),
    }


# =====================================================================
# Forward pass
# =====================================================================
@jax.jit
def model_forward(params, ligand_ids, receptor_ids,
                  ligand_mask, receptor_mask, labels):
    B, L = ligand_ids.shape
    N, D = NUM_LATENTS, EMBED_DIM

    # backbone: pair embedding extraction (synthetic lookup)
    ligand_embed = jnp.take(params["embed_table"], ligand_ids, axis=0)      # (B, L, D)
    receptor_embed = jnp.take(params["embed_table"], receptor_ids, axis=0)
    emb_stacked = jnp.stack([ligand_embed.reshape(B * L, D),
                             receptor_embed.reshape(B * L, D)])             # (2, B*L, D)

    # block-diagonal (batch-folded) additive attention masks
    q_batch = jnp.arange(B * N) // N
    k_batch = jnp.arange(B * L) // L
    same_b = q_batch[:, None] == k_batch[None, :]                           # (B*N, B*L)

    def cross_bias(mask):
        valid = same_b & (mask.reshape(B * L)[None, :] > 0.5)
        # note: every latent row always has >=1 valid key (its own batch block)
        return jnp.where(valid, 0.0, -1e30).astype(jnp.float32)

    xbias = jnp.stack([cross_bias(ligand_mask.astype(jnp.float32)),
                       cross_bias(receptor_mask.astype(jnp.float32))])      # (2, B*N, B*L)
    sbias = jnp.where(q_batch[:, None] == q_batch[None, :],
                      0.0, -1e30).astype(jnp.float32)                       # (B*N, B*N)

    lat_tiled = jnp.tile(params["latents"], (B, 1))                         # (B*N, D)
    pool_mat = ((jnp.arange(B)[:, None] == q_batch[None, :])
                .astype(jnp.float32) / N)                                   # (B, B*N)

    pooled_br = fused_perceiver(emb_stacked, xbias, sbias, lat_tiled, pool_mat,
                                params["cross_layers"], params["self_layers"])

    # head: mean pooler is linear, so pool(o1 + o2) == pool(o1) + pool(o2);
    # the remaining ~hundred FLOPs (sum, Linear, MSE) stay in plain XLA.
    # TODO(synk): pooler is configurable in the module; mean pooling assumed.
    pooled = pooled_br[0] + pooled_br[1]                                    # (B, D)
    logits = pooled @ params["w_out"] + params["b_out"]                     # (B, 1)
    loss = jnp.mean((logits - labels) ** 2)
    return {"logits": logits, "loss": loss}


# =====================================================================
if __name__ == "__main__":
    key = jax.random.PRNGKey(0)
    kp, k1, k2, k3 = jax.random.split(key, 4)

    params = make_params(kp)

    ligand_ids = jax.random.randint(k1, (BATCH, SEQ), 0, VOCAB, dtype=jnp.int32)
    receptor_ids = jax.random.randint(k2, (BATCH, SEQ), 0, VOCAB, dtype=jnp.int32)
    # attention masks: last few tokens of each receptor sequence are padding
    ligand_mask = jnp.ones((BATCH, SEQ), jnp.int32)
    receptor_mask = (jnp.arange(SEQ)[None, :] < (SEQ - 3)).astype(jnp.int32)
    receptor_mask = jnp.broadcast_to(receptor_mask, (BATCH, SEQ))
    labels = jax.random.normal(k3, (BATCH, 1), dtype=jnp.float32)

    out = model_forward(params, ligand_ids, receptor_ids,
                        ligand_mask, receptor_mask, labels)
    jax.block_until_ready(out)

    assert out["logits"].shape == (BATCH, 1)
    assert jnp.isfinite(out["logits"]).all()
    assert jnp.isfinite(out["loss"])
    print("KERNEL_OK")
</pallas_src>

<mosaic_0001>
module attributes {stable_mosaic.version = 11 : i64} {
  func.func @_perceiver_kernel(%arg0: i32, %arg1: memref<1x32x32xf32, #tpu.memory_space<vmem>>, %arg2: memref<1x16x32xf32, #tpu.memory_space<vmem>>, %arg3: memref<16x16xf32, #tpu.memory_space<vmem>>, %arg4: memref<16x32xf32, #tpu.memory_space<vmem>>, %arg5: memref<2x16xf32, #tpu.memory_space<vmem>>, %arg6: memref<1x32xf32, #tpu.memory_space<vmem>>, %arg7: memref<1x32xf32, #tpu.memory_space<vmem>>, %arg8: memref<1x32xf32, #tpu.memory_space<vmem>>, %arg9: memref<1x32xf32, #tpu.memory_space<vmem>>, %arg10: memref<1x32xf32, #tpu.memory_space<vmem>>, %arg11: memref<1x32xf32, #tpu.memory_space<vmem>>, %arg12: memref<32x32xbf16, #tpu.memory_space<vmem>>, %arg13: memref<32x64xbf16, #tpu.memory_space<vmem>>, %arg14: memref<32x32xbf16, #tpu.memory_space<vmem>>, %arg15: memref<32x32xbf16, #tpu.memory_space<vmem>>, %arg16: memref<32x32xbf16, #tpu.memory_space<vmem>>, %arg17: memref<1x32xf32, #tpu.memory_space<vmem>>, %arg18: memref<1x32xf32, #tpu.memory_space<vmem>>, %arg19: memref<1x32xf32, #tpu.memory_space<vmem>>, %arg20: memref<1x32xf32, #tpu.memory_space<vmem>>, %arg21: memref<1x32xf32, #tpu.memory_space<vmem>>, %arg22: memref<1x32xf32, #tpu.memory_space<vmem>>, %arg23: memref<32x32xbf16, #tpu.memory_space<vmem>>, %arg24: memref<32x64xbf16, #tpu.memory_space<vmem>>, %arg25: memref<32x32xbf16, #tpu.memory_space<vmem>>, %arg26: memref<32x32xbf16, #tpu.memory_space<vmem>>, %arg27: memref<32x32xbf16, #tpu.memory_space<vmem>>, %arg28: memref<1x2x32xf32, #tpu.memory_space<vmem>>, %arg29: memref<16x32xf32, #tpu.memory_space<vmem>>) attributes {dimension_semantics = [#tpu.dimension_semantics<parallel>], iteration_bounds = array<i64: 2>, scalar_prefetch = 0 : i64, scratch_operands = 1 : i64, tpu.core_type = #tpu.core_type<tc>, window_params = [{transform_indices = @transform_0, window_bounds = array<i64: 1, 32, 32>}, {transform_indices = @transform_1, window_bounds = array<i64: 1, 16, 32>}, {pipeline_mode = #tpu.pipeline_mode<synchronous>, transform_indices = @transform_2, window_bounds = array<i64: 16, 16>}, {pipeline_mode = #tpu.pipeline_mode<synchronous>, transform_indices = @transform_3, window_bounds = array<i64: 16, 32>}, {pipeline_mode = #tpu.pipeline_mode<synchronous>, transform_indices = @transform_4, window_bounds = array<i64: 2, 16>}, {pipeline_mode = #tpu.pipeline_mode<synchronous>, transform_indices = @transform_5, window_bounds = array<i64: 1, 32>}, {pipeline_mode = #tpu.pipeline_mode<synchronous>, transform_indices = @transform_6, window_bounds = array<i64: 1, 32>}, {pipeline_mode = #tpu.pipeline_mode<synchronous>, transform_indices = @transform_7, window_bounds = array<i64: 1, 32>}, {pipeline_mode = #tpu.pipeline_mode<synchronous>, transform_indices = @transform_8, window_bounds = array<i64: 1, 32>}, {pipeline_mode = #tpu.pipeline_mode<synchronous>, transform_indices = @transform_9, window_bounds = array<i64: 1, 32>}, {pipeline_mode = #tpu.pipeline_mode<synchronous>, transform_indices = @transform_10, window_bounds = array<i64: 1, 32>}, {pipeline_mode = #tpu.pipeline_mode<synchronous>, transform_indices = @transform_11, window_bounds = array<i64: 32, 32>}, {pipeline_mode = #tpu.pipeline_mode<synchronous>, transform_indices = @transform_12, window_bounds = array<i64: 32, 64>}, {pipeline_mode = #tpu.pipeline_mode<synchronous>, transform_indices = @transform_13, window_bounds = array<i64: 32, 32>}, {pipeline_mode = #tpu.pipeline_mode<synchronous>, transform_indices = @transform_14, window_bounds = array<i64: 32, 32>}, {pipeline_mode = #tpu.pipeline_mode<synchronous>, transform_indices = @transform_15, window_bounds = array<i64: 32, 32>}, {pipeline_mode = #tpu.pipeline_mode<synchronous>, transform_indices = @transform_16, window_bounds = array<i64: 1, 32>}, {pipeline_mode = #tpu.pipeline_mode<synchronous>, transform_indices = @transform_17, window_bounds = array<i64: 1, 32>}, {pipeline_mode = #tpu.pipeline_mode<synchronous>, transform_indices = @transform_18, window_bounds = array<i64: 1, 32>}, {pipeline_mode = #tpu.pipeline_mode<synchronous>, transform_indices = @transform_19, window_bounds = array<i64: 1, 32>}, {pipeline_mode = #tpu.pipeline_mode<synchronous>, transform_indices = @transform_20, window_bounds = array<i64: 1, 32>}, {pipeline_mode = #tpu.pipeline_mode<synchronous>, transform_indices = @transform_21, window_bounds = array<i64: 1, 32>}, {pipeline_mode = #tpu.pipeline_mode<synchronous>, transform_indices = @transform_22, window_bounds = array<i64: 32, 32>}, {pipeline_mode = #tpu.pipeline_mode<synchronous>, transform_indices = @transform_23, window_bounds = array<i64: 32, 64>}, {pipeline_mode = #tpu.pipeline_mode<synchronous>, transform_indices = @transform_24, window_bounds = array<i64: 32, 32>}, {pipeline_mode = #tpu.pipeline_mode<synchronous>, transform_indices = @transform_25, window_bounds = array<i64: 32, 32>}, {pipeline_mode = #tpu.pipeline_mode<synchronous>, transform_indices = @transform_26, window_bounds = array<i64: 32, 32>}, {transform_indices = @transform_27, window_bounds = array<i64: 1, 2, 32>}]} {
    %c0 = arith.constant 0 : index
    %c0_0 = arith.constant 0 : index
    %c0_1 = arith.constant 0 : index
    %0 = vector.load %arg1[%c0, %c0_0, %c0_1] : memref<1x32x32xf32, #tpu.memory_space<vmem>>, vector<1x32x32xf32>
    %1 = vector.shape_cast %0 : vector<1x32x32xf32> to vector<32x32xf32>
    %c0_2 = arith.constant 0 : index
    %c0_3 = arith.constant 0 : index
    %c0_4 = arith.constant 0 : index
    %2 = vector.load %arg2[%c0_2, %c0_3, %c0_4] : memref<1x16x32xf32, #tpu.memory_space<vmem>>, vector<1x16x32xf32>
    %3 = vector.shape_cast %2 : vector<1x16x32xf32> to vector<16x32xf32>
    %c0_5 = arith.constant 0 : index
    %c0_6 = arith.constant 0 : index
    %4 = vector.load %arg3[%c0_5, %c0_6] : memref<16x16xf32, #tpu.memory_space<vmem>>, vector<16x16xf32>
    %c0_7 = arith.constant 0 : index
    %c0_8 = arith.constant 0 : index
    %5 = vector.load %arg4[%c0_7, %c0_8] : memref<16x32xf32, #tpu.memory_space<vmem>>, vector<16x32xf32>
    %cst = arith.constant dense<0.000000e+00> : vector<16xf32>
    %6 = vector.multi_reduction <add>, %5, %cst [1] : vector<16x32xf32> to vector<16xf32>
    %7 = vector.shape_cast %6 : vector<16xf32> to vector<16x1xf32>
    %cst_9 = arith.constant 3.200000e+01 : f32
    %8 = vector.broadcast %cst_9 : f32 to vector<16x1xf32>
    %9 = arith.divf %7, %8 : vector<16x1xf32>
    %10 = vector.broadcast %9 : vector<16x1xf32> to vector<16x32xf32>
    %11 = arith.subf %5, %10 : vector<16x32xf32>
    %12 = arith.mulf %11, %11 : vector<16x32xf32>
    %cst_10 = arith.constant dense<0.000000e+00> : vector<16xf32>
    %13 = vector.multi_reduction <add>, %12, %cst_10 [1] : vector<16x32xf32> to vector<16xf32>
    %14 = vector.shape_cast %13 : vector<16xf32> to vector<16x1xf32>
    %cst_11 = arith.constant 3.200000e+01 : f32
    %15 = vector.broadcast %cst_11 : f32 to vector<16x1xf32>
    %16 = arith.divf %14, %15 : vector<16x1xf32>
    %cst_12 = arith.constant 9.99999974E-6 : f32
    %17 = vector.broadcast %cst_12 : f32 to vector<16x1xf32>
    %18 = arith.addf %16, %17 : vector<16x1xf32>
    %19 = math.rsqrt %18 : vector<16x1xf32>
    %20 = vector.broadcast %19 : vector<16x1xf32> to vector<16x32xf32>
    %21 = arith.mulf %11, %20 : vector<16x32xf32>
    %c0_13 = arith.constant 0 : index
    %c0_14 = arith.constant 0 : index
    %22 = vector.load %arg6[%c0_13, %c0_14] : memref<1x32xf32, #tpu.memory_space<vmem>>, vector<1x32xf32>
    %23 = vector.broadcast %22 : vector<1x32xf32> to vector<16x32xf32>
    %24 = arith.mulf %21, %23 : vector<16x32xf32>
    %c0_15 = arith.constant 0 : index
    %c0_16 = arith.constant 0 : index
    %25 = vector.load %arg7[%c0_15, %c0_16] : memref<1x32xf32, #tpu.memory_space<vmem>>, vector<1x32xf32>
    %26 = vector.broadcast %25 : vector<1x32xf32> to vector<16x32xf32>
    %27 = arith.addf %24, %26 : vector<16x32xf32>
    %28 = arith.truncf %27 : vector<16x32xf32> to vector<16x32xbf16>
    %cst_17 = arith.constant dense<0.000000e+00> : vector<32xf32>
    %29 = vector.multi_reduction <add>, %1, %cst_17 [1] : vector<32x32xf32> to vector<32xf32>
    %30 = vector.shape_cast %29 : vector<32xf32> to vector<32x1xf32>
    %cst_18 = arith.constant 3.200000e+01 : f32
    %31 = vector.broadcast %cst_18 : f32 to vector<32x1xf32>
    %32 = arith.divf %30, %31 : vector<32x1xf32>
    %33 = vector.broadcast %32 : vector<32x1xf32> to vector<32x32xf32>
    %34 = arith.subf %1, %33 : vector<32x32xf32>
    %35 = arith.mulf %34, %34 : vector<32x32xf32>
    %cst_19 = arith.constant dense<0.000000e+00> : vector<32xf32>
    %36 = vector.multi_reduction <add>, %35, %cst_19 [1] : vector<32x32xf32> to vector<32xf32>
    %37 = vector.shape_cast %36 : vector<32xf32> to vector<32x1xf32>
    %cst_20 = arith.constant 3.200000e+01 : f32
    %38 = vector.broadcast %cst_20 : f32 to vector<32x1xf32>
    %39 = arith.divf %37, %38 : vector<32x1xf32>
    %cst_21 = arith.constant 9.99999974E-6 : f32
    %40 = vector.broadcast %cst_21 : f32 to vector<32x1xf32>
    %41 = arith.addf %39, %40 : vector<32x1xf32>
    %42 = math.rsqrt %41 : vector<32x1xf32>
    %43 = vector.broadcast %42 : vector<32x1xf32> to vector<32x32xf32>
    %44 = arith.mulf %34, %43 : vector<32x32xf32>
    %c0_22 = arith.constant 0 : index
    %c0_23 = arith.constant 0 : index
    %45 = vector.load %arg8[%c0_22, %c0_23] : memref<1x32xf32, #tpu.memory_space<vmem>>, vector<1x32xf32>
    %46 = vector.broadcast %45 : vector<1x32xf32> to vector<32x32xf32>
    %47 = arith.mulf %44, %46 : vector<32x32xf32>
    %c0_24 = arith.constant 0 : index
    %c0_25 = arith.constant 0 : index
    %48 = vector.load %arg9[%c0_24, %c0_25] : memref<1x32xf32, #tpu.memory_space<vmem>>, vector<1x32xf32>
    %49 = vector.broadcast %48 : vector<1x32xf32> to vector<32x32xf32>
    %50 = arith.addf %47, %49 : vector<32x32xf32>
    %51 = arith.truncf %50 : vector<32x32xf32> to vector<32x32xbf16>
    %c0_26 = arith.constant 0 : index
    %c0_27 = arith.constant 0 : index
    %52 = vector.load %arg12[%c0_26, %c0_27] : memref<32x32xbf16, #tpu.memory_space<vmem>>, vector<32x32xbf16>
    %cst_28 = arith.constant dense<0.000000e+00> : vector<16x32xf32>
    %53 = tpu.matmul %28, %52, %cst_28 {dimension_numbers = #tpu.dot_dimension_numbers<[1], [0], [0], [1], [0, 0, 1, 1], [], []>} : vector<16x32xbf16>, vector<32x32xbf16>, vector<16x32xf32> -> vector<16x32xf32>
    %c0_29 = arith.constant 0 : index
    %c0_30 = arith.constant 0 : index
    %54 = vector.load %arg13[%c0_29, %c0_30] : memref<32x64xbf16, #tpu.memory_space<vmem>>, vector<32x64xbf16>
    %cst_31 = arith.constant dense<0.000000e+00> : vector<32x64xf32>
    %55 = tpu.matmul %51, %54, %cst_31 {dimension_numbers = #tpu.dot_dimension_numbers<[1], [0], [0], [1], [0, 0, 1, 1], [], []>} : vector<32x32xbf16>, vector<32x64xbf16>, vector<32x64xf32> -> vector<32x64xf32>
    %56 = vector.extract_strided_slice %55 {offsets = [0, 0], sizes = [32, 32], strides = [1, 1]} : vector<32x64xf32> to vector<32x32xf32>
    %57 = vector.extract_strided_slice %55 {offsets = [0, 32], sizes = [32, 32], strides = [1, 1]} : vector<32x64xf32> to vector<32x32xf32>
    %58 = vector.extract_strided_slice %53 {offsets = [0, 0], sizes = [16, 8], strides = [1, 1]} : vector<16x32xf32> to vector<16x8xf32>
    %59 = arith.truncf %58 : vector<16x8xf32> to vector<16x8xbf16>
    %60 = vector.extract_strided_slice %56 {offsets = [0, 0], sizes = [32, 8], strides = [1, 1]} : vector<32x32xf32> to vector<32x8xf32>
    %61 = arith.truncf %60 : vector<32x8xf32> to vector<32x8xbf16>
    %62 = vector.extract_strided_slice %57 {offsets = [0, 0], sizes = [32, 8], strides = [1, 1]} : vector<32x32xf32> to vector<32x8xf32>
    %63 = arith.truncf %62 : vector<32x8xf32> to vector<32x8xbf16>
    %cst_32 = arith.constant dense<0.000000e+00> : vector<16x32xf32>
    %64 = tpu.matmul %59, %61, %cst_32 {dimension_numbers = #tpu.dot_dimension_numbers<[1], [1], [0], [0], [0, 0, 1, 0], [], []>} : vector<16x8xbf16>, vector<32x8xbf16>, vector<16x32xf32> -> vector<16x32xf32>
    %cst_33 = arith.constant 0.353553385 : f32
    %65 = vector.broadcast %cst_33 : f32 to vector<16x32xf32>
    %66 = arith.mulf %64, %65 : vector<16x32xf32>
    %67 = arith.addf %66, %3 : vector<16x32xf32>
    %cst_34 = arith.constant dense<0xFF800000> : vector<16xf32>
    %68 = vector.multi_reduction <maximumf>, %67, %cst_34 [1] : vector<16x32xf32> to vector<16xf32>
    %69 = vector.shape_cast %68 : vector<16xf32> to vector<16x1xf32>
    %70 = vector.broadcast %69 : vector<16x1xf32> to vector<16x32xf32>
    %71 = arith.subf %67, %70 : vector<16x32xf32>
    %72 = math.exp %71 : vector<16x32xf32>
    %cst_35 = arith.constant dense<0.000000e+00> : vector<16xf32>
    %73 = vector.multi_reduction <add>, %72, %cst_35 [1] : vector<16x32xf32> to vector<16xf32>
    %74 = vector.shape_cast %73 : vector<16xf32> to vector<16x1xf32>
    %75 = tpu.reciprocal %74 {approx = true} : vector<16x1xf32> -> vector<16x1xf32>
    %76 = vector.broadcast %75 : vector<16x1xf32> to vector<16x32xf32>
    %77 = arith.mulf %72, %76 : vector<16x32xf32>
    %78 = arith.truncf %77 : vector<16x32xf32> to vector<16x32xbf16>
    %cst_36 = arith.constant dense<0.000000e+00> : vector<16x8xf32>
    %79 = tpu.matmul %78, %63, %cst_36 {dimension_numbers = #tpu.dot_dimension_numbers<[1], [0], [0], [1], [0, 0, 1, 1], [], []>} : vector<16x32xbf16>, vector<32x8xbf16>, vector<16x8xf32> -> vector<16x8xf32>
    %c0_37 = arith.constant 0 : index
    %c0_38 = arith.constant 0 : index
    %80 = vector.load %arg29[%c0_37, %c0_38] : memref<16x32xf32, #tpu.memory_space<vmem>>, vector<16x8xf32>
    tpu.vector_store %arg29[%c0_37, %c0_38], %79 {strides = array<i32>} : memref<16x32xf32, #tpu.memory_space<vmem>>, vector<16x8xf32>,
    %81 = vector.extract_strided_slice %53 {offsets = [0, 8], sizes = [16, 8], strides = [1, 1]} : vector<16x32xf32> to vector<16x8xf32>
    %82 = arith.truncf %81 : vector<16x8xf32> to vector<16x8xbf16>
    %83 = vector.extract_strided_slice %56 {offsets = [0, 8], sizes = [32, 8], strides = [1, 1]} : vector<32x32xf32> to vector<32x8xf32>
    %84 = arith.truncf %83 : vector<32x8xf32> to vector<32x8xbf16>
    %85 = vector.extract_strided_slice %57 {offsets = [0, 8], sizes = [32, 8], strides = [1, 1]} : vector<32x32xf32> to vector<32x8xf32>
    %86 = arith.truncf %85 : vector<32x8xf32> to vector<32x8xbf16>
    %cst_39 = arith.constant dense<0.000000e+00> : vector<16x32xf32>
    %87 = tpu.matmul %82, %84, %cst_39 {dimension_numbers = #tpu.dot_dimension_numbers<[1], [1], [0], [0], [0, 0, 1, 0], [], []>} : vector<16x8xbf16>, vector<32x8xbf16>, vector<16x32xf32> -> vector<16x32xf32>
    %cst_40 = arith.constant 0.353553385 : f32
    %88 = vector.broadcast %cst_40 : f32 to vector<16x32xf32>
    %89 = arith.mulf %87, %88 : vector<16x32xf32>
    %90 = arith.addf %89, %3 : vector<16x32xf32>
    %cst_41 = arith.constant dense<0xFF800000> : vector<16xf32>
    %91 = vector.multi_reduction <maximumf>, %90, %cst_41 [1] : vector<16x32xf32> to vector<16xf32>
    %92 = vector.shape_cast %91 : vector<16xf32> to vector<16x1xf32>
    %93 = vector.broadcast %92 : vector<16x1xf32> to vector<16x32xf32>
    %94 = arith.subf %90, %93 : vector<16x32xf32>
    %95 = math.exp %94 : vector<16x32xf32>
    %cst_42 = arith.constant dense<0.000000e+00> : vector<16xf32>
    %96 = vector.multi_reduction <add>, %95, %cst_42 [1] : vector<16x32xf32> to vector<16xf32>
    %97 = vector.shape_cast %96 : vector<16xf32> to vector<16x1xf32>
    %98 = tpu.reciprocal %97 {approx = true} : vector<16x1xf32> -> vector<16x1xf32>
    %99 = vector.broadcast %98 : vector<16x1xf32> to vector<16x32xf32>
    %100 = arith.mulf %95, %99 : vector<16x32xf32>
    %101 = arith.truncf %100 : vector<16x32xf32> to vector<16x32xbf16>
    %cst_43 = arith.constant dense<0.000000e+00> : vector<16x8xf32>
    %102 = tpu.matmul %101, %86, %cst_43 {dimension_numbers = #tpu.dot_dimension_numbers<[1], [0], [0], [1], [0, 0, 1, 1], [], []>} : vector<16x32xbf16>, vector<32x8xbf16>, vector<16x8xf32> -> vector<16x8xf32>
    %c0_44 = arith.constant 0 : index
    %c8 = arith.constant 8 : index
    %103 = vector.load %arg29[%c0_44, %c8] : memref<16x32xf32, #tpu.memory_space<vmem>>, vector<16x8xf32>
    tpu.vector_store %arg29[%c0_44, %c8], %102 {strides = array<i32>} : memref<16x32xf32, #tpu.memory_space<vmem>>, vector<16x8xf32>,
    %104 = vector.extract_strided_slice %53 {offsets = [0, 16], sizes = [16, 8], strides = [1, 1]} : vector<16x32xf32> to vector<16x8xf32>
    %105 = arith.truncf %104 : vector<16x8xf32> to vector<16x8xbf16>
    %106 = vector.extract_strided_slice %56 {offsets = [0, 16], sizes = [32, 8], strides = [1, 1]} : vector<32x32xf32> to vector<32x8xf32>
    %107 = arith.truncf %106 : vector<32x8xf32> to vector<32x8xbf16>
    %108 = vector.extract_strided_slice %57 {offsets = [0, 16], sizes = [32, 8], strides = [1, 1]} : vector<32x32xf32> to vector<32x8xf32>
    %109 = arith.truncf %108 : vector<32x8xf32> to vector<32x8xbf16>
    %cst_45 = arith.constant dense<0.000000e+00> : vector<16x32xf32>
    %110 = tpu.matmul %105, %107, %cst_45 {dimension_numbers = #tpu.dot_dimension_numbers<[1], [1], [0], [0], [0, 0, 1, 0], [], []>} : vector<16x8xbf16>, vector<32x8xbf16>, vector<16x32xf32> -> vector<16x32xf32>
    %cst_46 = arith.constant 0.353553385 : f32
    %111 = vector.broadcast %cst_46 : f32 to vector<16x32xf32>
    %112 = arith.mulf %110, %111 : vector<16x32xf32>
    %113 = arith.addf %112, %3 : vector<16x32xf32>
    %cst_47 = arith.constant dense<0xFF800000> : vector<16xf32>
    %114 = vector.multi_reduction <maximumf>, %113, %cst_47 [1] : vector<16x32xf32> to vector<16xf32>
    %115 = vector.shape_cast %114 : vector<16xf32> to vector<16x1xf32>
    %116 = vector.broadcast %115 : vector<16x1xf32> to vector<16x32xf32>
    %117 = arith.subf %113, %116 : vector<16x32xf32>
    %118 = math.exp %117 : vector<16x32xf32>
    %cst_48 = arith.constant dense<0.000000e+00> : vector<16xf32>
    %119 = vector.multi_reduction <add>, %118, %cst_48 [1] : vector<16x32xf32> to vector<16xf32>
    %120 = vector.shape_cast %119 : vector<16xf32> to vector<16x1xf32>
    %121 = tpu.reciprocal %120 {approx = true} : vector<16x1xf32> -> vector<16x1xf32>
    %122 = vector.broadcast %121 : vector<16x1xf32> to vector<16x32xf32>
    %123 = arith.mulf %118, %122 : vector<16x32xf32>
    %124 = arith.truncf %123 : vector<16x32xf32> to vector<16x32xbf16>
    %cst_49 = arith.constant dense<0.000000e+00> : vector<16x8xf32>
    %125 = tpu.matmul %124, %109, %cst_49 {dimension_numbers = #tpu.dot_dimension_numbers<[1], [0], [0], [1], [0, 0, 1, 1], [], []>} : vector<16x32xbf16>, vector<32x8xbf16>, vector<16x8xf32> -> vector<16x8xf32>
    %c0_50 = arith.constant 0 : index
    %c16 = arith.constant 16 : index
    %126 = vector.load %arg29[%c0_50, %c16] : memref<16x32xf32, #tpu.memory_space<vmem>>, vector<16x8xf32>
    tpu.vector_store %arg29[%c0_50, %c16], %125 {strides = array<i32>} : memref<16x32xf32, #tpu.memory_space<vmem>>, vector<16x8xf32>,
    %127 = vector.extract_strided_slice %53 {offsets = [0, 24], sizes = [16, 8], strides = [1, 1]} : vector<16x32xf32> to vector<16x8xf32>
    %128 = arith.truncf %127 : vector<16x8xf32> to vector<16x8xbf16>
    %129 = vector.extract_strided_slice %56 {offsets = [0, 24], sizes = [32, 8], strides = [1, 1]} : vector<32x32xf32> to vector<32x8xf32>
    %130 = arith.truncf %129 : vector<32x8xf32> to vector<32x8xbf16>
    %131 = vector.extract_strided_slice %57 {offsets = [0, 24], sizes = [32, 8], strides = [1, 1]} : vector<32x32xf32> to vector<32x8xf32>
    %132 = arith.truncf %131 : vector<32x8xf32> to vector<32x8xbf16>
    %cst_51 = arith.constant dense<0.000000e+00> : vector<16x32xf32>
    %133 = tpu.matmul %128, %130, %cst_51 {dimension_numbers = #tpu.dot_dimension_numbers<[1], [1], [0], [0], [0, 0, 1, 0], [], []>} : vector<16x8xbf16>, vector<32x8xbf16>, vector<16x32xf32> -> vector<16x32xf32>
    %cst_52 = arith.constant 0.353553385 : f32
    %134 = vector.broadcast %cst_52 : f32 to vector<16x32xf32>
    %135 = arith.mulf %133, %134 : vector<16x32xf32>
    %136 = arith.addf %135, %3 : vector<16x32xf32>
    %cst_53 = arith.constant dense<0xFF800000> : vector<16xf32>
    %137 = vector.multi_reduction <maximumf>, %136, %cst_53 [1] : vector<16x32xf32> to vector<16xf32>
    %138 = vector.shape_cast %137 : vector<16xf32> to vector<16x1xf32>
    %139 = vector.broadcast %138 : vector<16x1xf32> to vector<16x32xf32>
    %140 = arith.subf %136, %139 : vector<16x32xf32>
    %141 = math.exp %140 : vector<16x32xf32>
    %cst_54 = arith.constant dense<0.000000e+00> : vector<16xf32>
    %142 = vector.multi_reduction <add>, %141, %cst_54 [1] : vector<16x32xf32> to vector<16xf32>
    %143 = vector.shape_cast %142 : vector<16xf32> to vector<16x1xf32>
    %144 = tpu.reciprocal %143 {approx = true} : vector<16x1xf32> -> vector<16x1xf32>
    %145 = vector.broadcast %144 : vector<16x1xf32> to vector<16x32xf32>
    %146 = arith.mulf %141, %145 : vector<16x32xf32>
    %147 = arith.truncf %146 : vector<16x32xf32> to vector<16x32xbf16>
    %cst_55 = arith.constant dense<0.000000e+00> : vector<16x8xf32>
    %148 = tpu.matmul %147, %132, %cst_55 {dimension_numbers = #tpu.dot_dimension_numbers<[1], [0], [0], [1], [0, 0, 1, 1], [], []>} : vector<16x32xbf16>, vector<32x8xbf16>, vector<16x8xf32> -> vector<16x8xf32>
    %c0_56 = arith.constant 0 : index
    %c24 = arith.constant 24 : index
    %149 = vector.load %arg29[%c0_56, %c24] : memref<16x32xf32, #tpu.memory_space<vmem>>, vector<16x8xf32>
    tpu.vector_store %arg29[%c0_56, %c24], %148 {strides = array<i32>} : memref<16x32xf32, #tpu.memory_space<vmem>>, vector<16x8xf32>,
    %c0_57 = arith.constant 0 : index
    %c0_58 = arith.constant 0 : index
    %150 = vector.load %arg29[%c0_57, %c0_58] : memref<16x32xf32, #tpu.memory_space<vmem>>, vector<16x32xf32>
    %151 = arith.truncf %150 : vector<16x32xf32> to vector<16x32xbf16>
    %c0_59 = arith.constant 0 : index
    %c0_60 = arith.constant 0 : index
    %152 = vector.load %arg14[%c0_59, %c0_60] : memref<32x32xbf16, #tpu.memory_space<vmem>>, vector<32x32xbf16>
    %cst_61 = arith.constant dense<0.000000e+00> : vector<16x32xf32>
    %153 = tpu.matmul %151, %152, %cst_61 {dimension_numbers = #tpu.dot_dimension_numbers<[1], [0], [0], [1], [0, 0, 1, 1], [], []>} : vector<16x32xbf16>, vector<32x32xbf16>, vector<16x32xf32> -> vector<16x32xf32>
    %154 = arith.addf %5, %153 : vector<16x32xf32>
    %cst_62 = arith.constant dense<0.000000e+00> : vector<16xf32>
    %155 = vector.multi_reduction <add>, %154, %cst_62 [1] : vector<16x32xf32> to vector<16xf32>
    %156 = vector.shape_cast %155 : vector<16xf32> to vector<16x1xf32>
    %cst_63 = arith.constant 3.200000e+01 : f32
    %157 = vector.broadcast %cst_63 : f32 to vector<16x1xf32>
    %158 = arith.divf %156, %157 : vector<16x1xf32>
    %159 = vector.broadcast %158 : vector<16x1xf32> to vector<16x32xf32>
    %160 = arith.subf %154, %159 : vector<16x32xf32>
    %161 = arith.mulf %160, %160 : vector<16x32xf32>
    %cst_64 = arith.constant dense<0.000000e+00> : vector<16xf32>
    %162 = vector.multi_reduction <add>, %161, %cst_64 [1] : vector<16x32xf32> to vector<16xf32>
    %163 = vector.shape_cast %162 : vector<16xf32> to vector<16x1xf32>
    %cst_65 = arith.constant 3.200000e+01 : f32
    %164 = vector.broadcast %cst_65 : f32 to vector<16x1xf32>
    %165 = arith.divf %163, %164 : vector<16x1xf32>
    %cst_66 = arith.constant 9.99999974E-6 : f32
    %166 = vector.broadcast %cst_66 : f32 to vector<16x1xf32>
    %167 = arith.addf %165, %166 : vector<16x1xf32>
    %168 = math.rsqrt %167 : vector<16x1xf32>
    %169 = vector.broadcast %168 : vector<16x1xf32> to vector<16x32xf32>
    %170 = arith.mulf %160, %169 : vector<16x32xf32>
    %c0_67 = arith.constant 0 : index
    %c0_68 = arith.constant 0 : index
    %171 = vector.load %arg10[%c0_67, %c0_68] : memref<1x32xf32, #tpu.memory_space<vmem>>, vector<1x32xf32>
    %172 = vector.broadcast %171 : vector<1x32xf32> to vector<16x32xf32>
    %173 = arith.mulf %170, %172 : vector<16x32xf32>
    %c0_69 = arith.constant 0 : index
    %c0_70 = arith.constant 0 : index
    %174 = vector.load %arg11[%c0_69, %c0_70] : memref<1x32xf32, #tpu.memory_space<vmem>>, vector<1x32xf32>
    %175 = vector.broadcast %174 : vector<1x32xf32> to vector<16x32xf32>
    %176 = arith.addf %173, %175 : vector<16x32xf32>
    %177 = arith.truncf %176 : vector<16x32xf32> to vector<16x32xbf16>
    %c0_71 = arith.constant 0 : index
    %c0_72 = arith.constant 0 : index
    %178 = vector.load %arg15[%c0_71, %c0_72] : memref<32x32xbf16, #tpu.memory_space<vmem>>, vector<32x32xbf16>
    %cst_73 = arith.constant dense<0.000000e+00> : vector<16x32xf32>
    %179 = tpu.matmul %177, %178, %cst_73 {dimension_numbers = #tpu.dot_dimension_numbers<[1], [0], [0], [1], [0, 0, 1, 1], [], []>} : vector<16x32xbf16>, vector<32x32xbf16>, vector<16x32xf32> -> vector<16x32xf32>
    %180 = arith.negf %179 : vector<16x32xf32>
    %181 = math.exp %180 : vector<16x32xf32>
    %cst_74 = arith.constant 1.000000e+00 : f32
    %182 = vector.broadcast %cst_74 : f32 to vector<16x32xf32>
    %183 = arith.addf %182, %181 : vector<16x32xf32>
    %184 = arith.divf %182, %183 : vector<16x32xf32>
    %185 = arith.mulf %179, %184 : vector<16x32xf32>
    %186 = arith.truncf %185 : vector<16x32xf32> to vector<16x32xbf16>
    %c0_75 = arith.constant 0 : index
    %c0_76 = arith.constant 0 : index
    %187 = vector.load %arg16[%c0_75, %c0_76] : memref<32x32xbf16, #tpu.memory_space<vmem>>, vector<32x32xbf16>
    %cst_77 = arith.constant dense<0.000000e+00> : vector<16x32xf32>
    %188 = tpu.matmul %186, %187, %cst_77 {dimension_numbers = #tpu.dot_dimension_numbers<[1], [0], [0], [1], [0, 0, 1, 1], [], []>} : vector<16x32xbf16>, vector<32x32xbf16>, vector<16x32xf32> -> vector<16x32xf32>
    %189 = arith.addf %154, %188 : vector<16x32xf32>
    %cst_78 = arith.constant dense<0.000000e+00> : vector<16xf32>
    %190 = vector.multi_reduction <add>, %189, %cst_78 [1] : vector<16x32xf32> to vector<16xf32>
    %191 = vector.shape_cast %190 : vector<16xf32> to vector<16x1xf32>
    %cst_79 = arith.constant 3.200000e+01 : f32
    %192 = vector.broadcast %cst_79 : f32 to vector<16x1xf32>
    %193 = arith.divf %191, %192 : vector<16x1xf32>
    %194 = vector.broadcast %193 : vector<16x1xf32> to vector<16x32xf32>
    %195 = arith.subf %189, %194 : vector<16x32xf32>
    %196 = arith.mulf %195, %195 : vector<16x32xf32>
    %cst_80 = arith.constant dense<0.000000e+00> : vector<16xf32>
    %197 = vector.multi_reduction <add>, %196, %cst_80 [1] : vector<16x32xf32> to vector<16xf32>
    %198 = vector.shape_cast %197 : vector<16xf32> to vector<16x1xf32>
    %cst_81 = arith.constant 3.200000e+01 : f32
    %199 = vector.broadcast %cst_81 : f32 to vector<16x1xf32>
    %200 = arith.divf %198, %199 : vector<16x1xf32>
    %cst_82 = arith.constant 9.99999974E-6 : f32
    %201 = vector.broadcast %cst_82 : f32 to vector<16x1xf32>
    %202 = arith.addf %200, %201 : vector<16x1xf32>
    %203 = math.rsqrt %202 : vector<16x1xf32>
    %204 = vector.broadcast %203 : vector<16x1xf32> to vector<16x32xf32>
    %205 = arith.mulf %195, %204 : vector<16x32xf32>
    %c0_83 = arith.constant 0 : index
    %c0_84 = arith.constant 0 : index
    %206 = vector.load %arg17[%c0_83, %c0_84] : memref<1x32xf32, #tpu.memory_space<vmem>>, vector<1x32xf32>
    %207 = vector.broadcast %206 : vector<1x32xf32> to vector<16x32xf32>
    %208 = arith.mulf %205, %207 : vector<16x32xf32>
    %c0_85 = arith.constant 0 : index
    %c0_86 = arith.constant 0 : index
    %209 = vector.load %arg18[%c0_85, %c0_86] : memref<1x32xf32, #tpu.memory_space<vmem>>, vector<1x32xf32>
    %210 = vector.broadcast %209 : vector<1x32xf32> to vector<16x32xf32>
    %211 = arith.addf %208, %210 : vector<16x32xf32>
    %212 = arith.truncf %211 : vector<16x32xf32> to vector<16x32xbf16>
    %cst_87 = arith.constant dense<0.000000e+00> : vector<16xf32>
    %213 = vector.multi_reduction <add>, %189, %cst_87 [1] : vector<16x32xf32> to vector<16xf32>
    %214 = vector.shape_cast %213 : vector<16xf32> to vector<16x1xf32>
    %cst_88 = arith.constant 3.200000e+01 : f32
    %215 = vector.broadcast %cst_88 : f32 to vector<16x1xf32>
    %216 = arith.divf %214, %215 : vector<16x1xf32>
    %217 = vector.broadcast %216 : vector<16x1xf32> to vector<16x32xf32>
    %218 = arith.subf %189, %217 : vector<16x32xf32>
    %219 = arith.mulf %218, %218 : vector<16x32xf32>
    %cst_89 = arith.constant dense<0.000000e+00> : vector<16xf32>
    %220 = vector.multi_reduction <add>, %219, %cst_89 [1] : vector<16x32xf32> to vector<16xf32>
    %221 = vector.shape_cast %220 : vector<16xf32> to vector<16x1xf32>
    %cst_90 = arith.constant 3.200000e+01 : f32
    %222 = vector.broadcast %cst_90 : f32 to vector<16x1xf32>
    %223 = arith.divf %221, %222 : vector<16x1xf32>
    %cst_91 = arith.constant 9.99999974E-6 : f32
    %224 = vector.broadcast %cst_91 : f32 to vector<16x1xf32>
    %225 = arith.addf %223, %224 : vector<16x1xf32>
    %226 = math.rsqrt %225 : vector<16x1xf32>
    %227 = vector.broadcast %226 : vector<16x1xf32> to vector<16x32xf32>
    %228 = arith.mulf %218, %227 : vector<16x32xf32>
    %c0_92 = arith.constant 0 : index
    %c0_93 = arith.constant 0 : index
    %229 = vector.load %arg19[%c0_92, %c0_93] : memref<1x32xf32, #tpu.memory_space<vmem>>, vector<1x32xf32>
    %230 = vector.broadcast %229 : vector<1x32xf32> to vector<16x32xf32>
    %231 = arith.mulf %228, %230 : vector<16x32xf32>
    %c0_94 = arith.constant 0 : index
    %c0_95 = arith.constant 0 : index
    %232 = vector.load %arg20[%c0_94, %c0_95] : memref<1x32xf32, #tpu.memory_space<vmem>>, vector<1x32xf32>
    %233 = vector.broadcast %232 : vector<1x32xf32> to vector<16x32xf32>
    %234 = arith.addf %231, %233 : vector<16x32xf32>
    %235 = arith.truncf %234 : vector<16x32xf32> to vector<16x32xbf16>
    %c0_96 = arith.constant 0 : index
    %c0_97 = arith.constant 0 : index
    %236 = vector.load %arg23[%c0_96, %c0_97] : memref<32x32xbf16, #tpu.memory_space<vmem>>, vector<32x32xbf16>
    %cst_98 = arith.constant dense<0.000000e+00> : vector<16x32xf32>
    %237 = tpu.matmul %212, %236, %cst_98 {dimension_numbers = #tpu.dot_dimension_numbers<[1], [0], [0], [1], [0, 0, 1, 1], [], []>} : vector<16x32xbf16>, vector<32x32xbf16>, vector<16x32xf32> -> vector<16x32xf32>
    %c0_99 = arith.constant 0 : index
    %c0_100 = arith.constant 0 : index
    %238 = vector.load %arg24[%c0_99, %c0_100] : memref<32x64xbf16, #tpu.memory_space<vmem>>, vector<32x64xbf16>
    %cst_101 = arith.constant dense<0.000000e+00> : vector<16x64xf32>
    %239 = tpu.matmul %235, %238, %cst_101 {dimension_numbers = #tpu.dot_dimension_numbers<[1], [0], [0], [1], [0, 0, 1, 1], [], []>} : vector<16x32xbf16>, vector<32x64xbf16>, vector<16x64xf32> -> vector<16x64xf32>
    %240 = vector.extract_strided_slice %239 {offsets = [0, 0], sizes = [16, 32], strides = [1, 1]} : vector<16x64xf32> to vector<16x32xf32>
    %241 = vector.extract_strided_slice %239 {offsets = [0, 32], sizes = [16, 32], strides = [1, 1]} : vector<16x64xf32> to vector<16x32xf32>
    %242 = vector.extract_strided_slice %237 {offsets = [0, 0], sizes = [16, 8], strides = [1, 1]} : vector<16x32xf32> to vector<16x8xf32>
    %243 = arith.truncf %242 : vector<16x8xf32> to vector<16x8xbf16>
    %244 = vector.extract_strided_slice %240 {offsets = [0, 0], sizes = [16, 8], strides = [1, 1]} : vector<16x32xf32> to vector<16x8xf32>
    %245 = arith.truncf %244 : vector<16x8xf32> to vector<16x8xbf16>
    %246 = vector.extract_strided_slice %241 {offsets = [0, 0], sizes = [16, 8], strides = [1, 1]} : vector<16x32xf32> to vector<16x8xf32>
    %247 = arith.truncf %246 : vector<16x8xf32> to vector<16x8xbf16>
    %cst_102 = arith.constant dense<0.000000e+00> : vector<16x16xf32>
    %248 = tpu.matmul %243, %245, %cst_102 {dimension_numbers = #tpu.dot_dimension_numbers<[1], [1], [0], [0], [0, 0, 1, 0], [], []>} : vector<16x8xbf16>, vector<16x8xbf16>, vector<16x16xf32> -> vector<16x16xf32>
    %cst_103 = arith.constant 0.353553385 : f32
    %249 = vector.broadcast %cst_103 : f32 to vector<16x16xf32>
    %250 = arith.mulf %248, %249 : vector<16x16xf32>
    %251 = arith.addf %250, %4 : vector<16x16xf32>
    %cst_104 = arith.constant dense<0xFF800000> : vector<16xf32>
    %252 = vector.multi_reduction <maximumf>, %251, %cst_104 [1] : vector<16x16xf32> to vector<16xf32>
    %253 = vector.shape_cast %252 : vector<16xf32> to vector<16x1xf32>
    %254 = vector.broadcast %253 : vector<16x1xf32> to vector<16x16xf32>
    %255 = arith.subf %251, %254 : vector<16x16xf32>
    %256 = math.exp %255 : vector<16x16xf32>
    %cst_105 = arith.constant dense<0.000000e+00> : vector<16xf32>
    %257 = vector.multi_reduction <add>, %256, %cst_105 [1] : vector<16x16xf32> to vector<16xf32>
    %258 = vector.shape_cast %257 : vector<16xf32> to vector<16x1xf32>
    %259 = tpu.reciprocal %258 {approx = true} : vector<16x1xf32> -> vector<16x1xf32>
    %260 = vector.broadcast %259 : vector<16x1xf32> to vector<16x16xf32>
    %261 = arith.mulf %256, %260 : vector<16x16xf32>
    %262 = arith.truncf %261 : vector<16x16xf32> to vector<16x16xbf16>
    %cst_106 = arith.constant dense<0.000000e+00> : vector<16x8xf32>
    %263 = tpu.matmul %262, %247, %cst_106 {dimension_numbers = #tpu.dot_dimension_numbers<[1], [0], [0], [1], [0, 0, 1, 1], [], []>} : vector<16x16xbf16>, vector<16x8xbf16>, vector<16x8xf32> -> vector<16x8xf32>
    %c0_107 = arith.constant 0 : index
    %c0_108 = arith.constant 0 : index
    %264 = vector.load %arg29[%c0_107, %c0_108] : memref<16x32xf32, #tpu.memory_space<vmem>>, vector<16x8xf32>
    tpu.vector_store %arg29[%c0_107, %c0_108], %263 {strides = array<i32>} : memref<16x32xf32, #tpu.memory_space<vmem>>, vector<16x8xf32>,
    %265 = vector.extract_strided_slice %237 {offsets = [0, 8], sizes = [16, 8], strides = [1, 1]} : vector<16x32xf32> to vector<16x8xf32>
    %266 = arith.truncf %265 : vector<16x8xf32> to vector<16x8xbf16>
    %267 = vector.extract_strided_slice %240 {offsets = [0, 8], sizes = [16, 8], strides = [1, 1]} : vector<16x32xf32> to vector<16x8xf32>
    %268 = arith.truncf %267 : vector<16x8xf32> to vector<16x8xbf16>
    %269 = vector.extract_strided_slice %241 {offsets = [0, 8], sizes = [16, 8], strides = [1, 1]} : vector<16x32xf32> to vector<16x8xf32>
    %270 = arith.truncf %269 : vector<16x8xf32> to vector<16x8xbf16>
    %cst_109 = arith.constant dense<0.000000e+00> : vector<16x16xf32>
    %271 = tpu.matmul %266, %268, %cst_109 {dimension_numbers = #tpu.dot_dimension_numbers<[1], [1], [0], [0], [0, 0, 1, 0], [], []>} : vector<16x8xbf16>, vector<16x8xbf16>, vector<16x16xf32> -> vector<16x16xf32>
    %cst_110 = arith.constant 0.353553385 : f32
    %272 = vector.broadcast %cst_110 : f32 to vector<16x16xf32>
    %273 = arith.mulf %271, %272 : vector<16x16xf32>
    %274 = arith.addf %273, %4 : vector<16x16xf32>
    %cst_111 = arith.constant dense<0xFF800000> : vector<16xf32>
    %275 = vector.multi_reduction <maximumf>, %274, %cst_111 [1] : vector<16x16xf32> to vector<16xf32>
    %276 = vector.shape_cast %275 : vector<16xf32> to vector<16x1xf32>
    %277 = vector.broadcast %276 : vector<16x1xf32> to vector<16x16xf32>
    %278 = arith.subf %274, %277 : vector<16x16xf32>
    %279 = math.exp %278 : vector<16x16xf32>
    %cst_112 = arith.constant dense<0.000000e+00> : vector<16xf32>
    %280 = vector.multi_reduction <add>, %279, %cst_112 [1] : vector<16x16xf32> to vector<16xf32>
    %281 = vector.shape_cast %280 : vector<16xf32> to vector<16x1xf32>
    %282 = tpu.reciprocal %281 {approx = true} : vector<16x1xf32> -> vector<16x1xf32>
    %283 = vector.broadcast %282 : vector<16x1xf32> to vector<16x16xf32>
    %284 = arith.mulf %279, %283 : vector<16x16xf32>
    %285 = arith.truncf %284 : vector<16x16xf32> to vector<16x16xbf16>
    %cst_113 = arith.constant dense<0.000000e+00> : vector<16x8xf32>
    %286 = tpu.matmul %285, %270, %cst_113 {dimension_numbers = #tpu.dot_dimension_numbers<[1], [0], [0], [1], [0, 0, 1, 1], [], []>} : vector<16x16xbf16>, vector<16x8xbf16>, vector<16x8xf32> -> vector<16x8xf32>
    %c0_114 = arith.constant 0 : index
    %c8_115 = arith.constant 8 : index
    %287 = vector.load %arg29[%c0_114, %c8_115] : memref<16x32xf32, #tpu.memory_space<vmem>>, vector<16x8xf32>
    tpu.vector_store %arg29[%c0_114, %c8_115], %286 {strides = array<i32>} : memref<16x32xf32, #tpu.memory_space<vmem>>, vector<16x8xf32>,
    %288 = vector.extract_strided_slice %237 {offsets = [0, 16], sizes = [16, 8], strides = [1, 1]} : vector<16x32xf32> to vector<16x8xf32>
    %289 = arith.truncf %288 : vector<16x8xf32> to vector<16x8xbf16>
    %290 = vector.extract_strided_slice %240 {offsets = [0, 16], sizes = [16, 8], strides = [1, 1]} : vector<16x32xf32> to vector<16x8xf32>
    %291 = arith.truncf %290 : vector<16x8xf32> to vector<16x8xbf16>
    %292 = vector.extract_strided_slice %241 {offsets = [0, 16], sizes = [16, 8], strides = [1, 1]} : vector<16x32xf32> to vector<16x8xf32>
    %293 = arith.truncf %292 : vector<16x8xf32> to vector<16x8xbf16>
    %cst_116 = arith.constant dense<0.000000e+00> : vector<16x16xf32>
    %294 = tpu.matmul %289, %291, %cst_116 {dimension_numbers = #tpu.dot_dimension_numbers<[1], [1], [0], [0], [0, 0, 1, 0], [], []>} : vector<16x8xbf16>, vector<16x8xbf16>, vector<16x16xf32> -> vector<16x16xf32>
    %cst_117 = arith.constant 0.353553385 : f32
    %295 = vector.broadcast %cst_117 : f32 to vector<16x16xf32>
    %296 = arith.mulf %294, %295 : vector<16x16xf32>
    %297 = arith.addf %296, %4 : vector<16x16xf32>
    %cst_118 = arith.constant dense<0xFF800000> : vector<16xf32>
    %298 = vector.multi_reduction <maximumf>, %297, %cst_118 [1] : vector<16x16xf32> to vector<16xf32>
    %299 = vector.shape_cast %298 : vector<16xf32> to vector<16x1xf32>
    %300 = vector.broadcast %299 : vector<16x1xf32> to vector<16x16xf32>
    %301 = arith.subf %297, %300 : vector<16x16xf32>
    %302 = math.exp %301 : vector<16x16xf32>
    %cst_119 = arith.constant dense<0.000000e+00> : vector<16xf32>
    %303 = vector.multi_reduction <add>, %302, %cst_119 [1] : vector<16x16xf32> to vector<16xf32>
    %304 = vector.shape_cast %303 : vector<16xf32> to vector<16x1xf32>
    %305 = tpu.reciprocal %304 {approx = true} : vector<16x1xf32> -> vector<16x1xf32>
    %306 = vector.broadcast %305 : vector<16x1xf32> to vector<16x16xf32>
    %307 = arith.mulf %302, %306 : vector<16x16xf32>
    %308 = arith.truncf %307 : vector<16x16xf32> to vector<16x16xbf16>
    %cst_120 = arith.constant dense<0.000000e+00> : vector<16x8xf32>
    %309 = tpu.matmul %308, %293, %cst_120 {dimension_numbers = #tpu.dot_dimension_numbers<[1], [0], [0], [1], [0, 0, 1, 1], [], []>} : vector<16x16xbf16>, vector<16x8xbf16>, vector<16x8xf32> -> vector<16x8xf32>
    %c0_121 = arith.constant 0 : index
    %c16_122 = arith.constant 16 : index
    %310 = vector.load %arg29[%c0_121, %c16_122] : memref<16x32xf32, #tpu.memory_space<vmem>>, vector<16x8xf32>
    tpu.vector_store %arg29[%c0_121, %c16_122], %309 {strides = array<i32>} : memref<16x32xf32, #tpu.memory_space<vmem>>, vector<16x8xf32>,
    %311 = vector.extract_strided_slice %237 {offsets = [0, 24], sizes = [16, 8], strides = [1, 1]} : vector<16x32xf32> to vector<16x8xf32>
    %312 = arith.truncf %311 : vector<16x8xf32> to vector<16x8xbf16>
    %313 = vector.extract_strided_slice %240 {offsets = [0, 24], sizes = [16, 8], strides = [1, 1]} : vector<16x32xf32> to vector<16x8xf32>
    %314 = arith.truncf %313 : vector<16x8xf32> to vector<16x8xbf16>
    %315 = vector.extract_strided_slice %241 {offsets = [0, 24], sizes = [16, 8], strides = [1, 1]} : vector<16x32xf32> to vector<16x8xf32>
    %316 = arith.truncf %315 : vector<16x8xf32> to vector<16x8xbf16>
    %cst_123 = arith.constant dense<0.000000e+00> : vector<16x16xf32>
    %317 = tpu.matmul %312, %314, %cst_123 {dimension_numbers = #tpu.dot_dimension_numbers<[1], [1], [0], [0], [0, 0, 1, 0], [], []>} : vector<16x8xbf16>, vector<16x8xbf16>, vector<16x16xf32> -> vector<16x16xf32>
    %cst_124 = arith.constant 0.353553385 : f32
    %318 = vector.broadcast %cst_124 : f32 to vector<16x16xf32>
    %319 = arith.mulf %317, %318 : vector<16x16xf32>
    %320 = arith.addf %319, %4 : vector<16x16xf32>
    %cst_125 = arith.constant dense<0xFF800000> : vector<16xf32>
    %321 = vector.multi_reduction <maximumf>, %320, %cst_125 [1] : vector<16x16xf32> to vector<16xf32>
    %322 = vector.shape_cast %321 : vector<16xf32> to vector<16x1xf32>
    %323 = vector.broadcast %322 : vector<16x1xf32> to vector<16x16xf32>
    %324 = arith.subf %320, %323 : vector<16x16xf32>
    %325 = math.exp %324 : vector<16x16xf32>
    %cst_126 = arith.constant dense<0.000000e+00> : vector<16xf32>
    %326 = vector.multi_reduction <add>, %325, %cst_126 [1] : vector<16x16xf32> to vector<16xf32>
    %327 = vector.shape_cast %326 : vector<16xf32> to vector<16x1xf32>
    %328 = tpu.reciprocal %327 {approx = true} : vector<16x1xf32> -> vector<16x1xf32>
    %329 = vector.broadcast %328 : vector<16x1xf32> to vector<16x16xf32>
    %330 = arith.mulf %325, %329 : vector<16x16xf32>
    %331 = arith.truncf %330 : vector<16x16xf32> to vector<16x16xbf16>
    %cst_127 = arith.constant dense<0.000000e+00> : vector<16x8xf32>
    %332 = tpu.matmul %331, %316, %cst_127 {dimension_numbers = #tpu.dot_dimension_numbers<[1], [0], [0], [1], [0, 0, 1, 1], [], []>} : vector<16x16xbf16>, vector<16x8xbf16>, vector<16x8xf32> -> vector<16x8xf32>
    %c0_128 = arith.constant 0 : index
    %c24_129 = arith.constant 24 : index
    %333 = vector.load %arg29[%c0_128, %c24_129] : memref<16x32xf32, #tpu.memory_space<vmem>>, vector<16x8xf32>
    tpu.vector_store %arg29[%c0_128, %c24_129], %332 {strides = array<i32>} : memref<16x32xf32, #tpu.memory_space<vmem>>, vector<16x8xf32>,
    %c0_130 = arith.constant 0 : index
    %c0_131 = arith.constant 0 : index
    %334 = vector.load %arg29[%c0_130, %c0_131] : memref<16x32xf32, #tpu.memory_space<vmem>>, vector<16x32xf32>
    %335 = arith.truncf %334 : vector<16x32xf32> to vector<16x32xbf16>
    %c0_132 = arith.constant 0 : index
    %c0_133 = arith.constant 0 : index
    %336 = vector.load %arg25[%c0_132, %c0_133] : memref<32x32xbf16, #tpu.memory_space<vmem>>, vector<32x32xbf16>
    %cst_134 = arith.constant dense<0.000000e+00> : vector<16x32xf32>
    %337 = tpu.matmul %335, %336, %cst_134 {dimension_numbers = #tpu.dot_dimension_numbers<[1], [0], [0], [1], [0, 0, 1, 1], [], []>} : vector<16x32xbf16>, vector<32x32xbf16>, vector<16x32xf32> -> vector<16x32xf32>
    %338 = arith.addf %189, %337 : vector<16x32xf32>
    %cst_135 = arith.constant dense<0.000000e+00> : vector<16xf32>
    %339 = vector.multi_reduction <add>, %338, %cst_135 [1] : vector<16x32xf32> to vector<16xf32>
    %340 = vector.shape_cast %339 : vector<16xf32> to vector<16x1xf32>
    %cst_136 = arith.constant 3.200000e+01 : f32
    %341 = vector.broadcast %cst_136 : f32 to vector<16x1xf32>
    %342 = arith.divf %340, %341 : vector<16x1xf32>
    %343 = vector.broadcast %342 : vector<16x1xf32> to vector<16x32xf32>
    %344 = arith.subf %338, %343 : vector<16x32xf32>
    %345 = arith.mulf %344, %344 : vector<16x32xf32>
    %cst_137 = arith.constant dense<0.000000e+00> : vector<16xf32>
    %346 = vector.multi_reduction <add>, %345, %cst_137 [1] : vector<16x32xf32> to vector<16xf32>
    %347 = vector.shape_cast %346 : vector<16xf32> to vector<16x1xf32>
    %cst_138 = arith.constant 3.200000e+01 : f32
    %348 = vector.broadcast %cst_138 : f32 to vector<16x1xf32>
    %349 = arith.divf %347, %348 : vector<16x1xf32>
    %cst_139 = arith.constant 9.99999974E-6 : f32
    %350 = vector.broadcast %cst_139 : f32 to vector<16x1xf32>
    %351 = arith.addf %349, %350 : vector<16x1xf32>
    %352 = math.rsqrt %351 : vector<16x1xf32>
    %353 = vector.broadcast %352 : vector<16x1xf32> to vector<16x32xf32>
    %354 = arith.mulf %344, %353 : vector<16x32xf32>
    %c0_140 = arith.constant 0 : index
    %c0_141 = arith.constant 0 : index
    %355 = vector.load %arg21[%c0_140, %c0_141] : memref<1x32xf32, #tpu.memory_space<vmem>>, vector<1x32xf32>
    %356 = vector.broadcast %355 : vector<1x32xf32> to vector<16x32xf32>
    %357 = arith.mulf %354, %356 : vector<16x32xf32>
    %c0_142 = arith.constant 0 : index
    %c0_143 = arith.constant 0 : index
    %358 = vector.load %arg22[%c0_142, %c0_143] : memref<1x32xf32, #tpu.memory_space<vmem>>, vector<1x32xf32>
    %359 = vector.broadcast %358 : vector<1x32xf32> to vector<16x32xf32>
    %360 = arith.addf %357, %359 : vector<16x32xf32>
    %361 = arith.truncf %360 : vector<16x32xf32> to vector<16x32xbf16>
    %c0_144 = arith.constant 0 : index
    %c0_145 = arith.constant 0 : index
    %362 = vector.load %arg26[%c0_144, %c0_145] : memref<32x32xbf16, #tpu.memory_space<vmem>>, vector<32x32xbf16>
    %cst_146 = arith.constant dense<0.000000e+00> : vector<16x32xf32>
    %363 = tpu.matmul %361, %362, %cst_146 {dimension_numbers = #tpu.dot_dimension_numbers<[1], [0], [0], [1], [0, 0, 1, 1], [], []>} : vector<16x32xbf16>, vector<32x32xbf16>, vector<16x32xf32> -> vector<16x32xf32>
    %364 = arith.negf %363 : vector<16x32xf32>
    %365 = math.exp %364 : vector<16x32xf32>
    %cst_147 = arith.constant 1.000000e+00 : f32
    %366 = vector.broadcast %cst_147 : f32 to vector<16x32xf32>
    %367 = arith.addf %366, %365 : vector<16x32xf32>
    %368 = arith.divf %366, %367 : vector<16x32xf32>
    %369 = arith.mulf %363, %368 : vector<16x32xf32>
    %370 = arith.truncf %369 : vector<16x32xf32> to vector<16x32xbf16>
    %c0_148 = arith.constant 0 : index
    %c0_149 = arith.constant 0 : index
    %371 = vector.load %arg27[%c0_148, %c0_149] : memref<32x32xbf16, #tpu.memory_space<vmem>>, vector<32x32xbf16>
    %cst_150 = arith.constant dense<0.000000e+00> : vector<16x32xf32>
    %372 = tpu.matmul %370, %371, %cst_150 {dimension_numbers = #tpu.dot_dimension_numbers<[1], [0], [0], [1], [0, 0, 1, 1], [], []>} : vector<16x32xbf16>, vector<32x32xbf16>, vector<16x32xf32> -> vector<16x32xf32>
    %373 = arith.addf %338, %372 : vector<16x32xf32>
    %c0_151 = arith.constant 0 : index
    %c0_152 = arith.constant 0 : index
    %374 = vector.load %arg5[%c0_151, %c0_152] : memref<2x16xf32, #tpu.memory_space<vmem>>, vector<2x16xf32>
    %cst_153 = arith.constant dense<0.000000e+00> : vector<2x32xf32>
    %375 = tpu.matmul %374, %373, %cst_153 {dimension_numbers = #tpu.dot_dimension_numbers<[1], [0], [0], [1], [0, 0, 1, 1], [], []>} : vector<2x16xf32>, vector<16x32xf32>, vector<2x32xf32> -> vector<2x32xf32>
    %c0_154 = arith.constant 0 : index
    %c0_155 = arith.constant 0 : index
    %c0_156 = arith.constant 0 : index
    %376 = vector.load %arg28[%c0_154, %c0_155, %c0_156] : memref<1x2x32xf32, #tpu.memory_space<vmem>>, vector<1x2x32xf32>
    %377 = vector.shape_cast %376 : vector<1x2x32xf32> to vector<2x32xf32>
    %378 = vector.shape_cast %375 : vector<2x32xf32> to vector<1x2x32xf32>
    tpu.vector_store %arg28[%c0_154, %c0_155, %c0_156], %378 {strides = array<i32>} : memref<1x2x32xf32, #tpu.memory_space<vmem>>, vector<1x2x32xf32>,
    return
  }
  func.func @transform_0(%arg0: i32) -> (i32, i32, i32) {
    %c0_i32 = arith.constant 0 : i32
    %c0_i32_0 = arith.constant 0 : i32
    %c0_i32_1 = arith.constant 0 : i32
    return %arg0, %c0_i32, %c0_i32_0 : i32, i32, i32
  }
  func.func @transform_1(%arg0: i32) -> (i32, i32, i32) {
    %c0_i32 = arith.constant 0 : i32
    %c0_i32_0 = arith.constant 0 : i32
    %c0_i32_1 = arith.constant 0 : i32
    return %arg0, %c0_i32, %c0_i32_0 : i32, i32, i32
  }
  func.func @transform_2(%arg0: i32) -> (i32, i32) {
    %c0_i32 = arith.constant 0 : i32
    %c0_i32_0 = arith.constant 0 : i32
    %c0_i32_1 = arith.constant 0 : i32
    return %c0_i32, %c0_i32_0 : i32, i32
  }
  func.func @transform_3(%arg0: i32) -> (i32, i32) {
    %c0_i32 = arith.constant 0 : i32
    %c0_i32_0 = arith.constant 0 : i32
    %c0_i32_1 = arith.constant 0 : i32
    return %c0_i32, %c0_i32_0 : i32, i32
  }
  func.func @transform_4(%arg0: i32) -> (i32, i32) {
    %c0_i32 = arith.constant 0 : i32
    %c0_i32_0 = arith.constant 0 : i32
    %c0_i32_1 = arith.constant 0 : i32
    return %c0_i32, %c0_i32_0 : i32, i32
  }
  func.func @transform_5(%arg0: i32) -> (i32, i32) {
    %c0_i32 = arith.constant 0 : i32
    %c0_i32_0 = arith.constant 0 : i32
    %c0_i32_1 = arith.constant 0 : i32
    return %c0_i32, %c0_i32_0 : i32, i32
  }
  func.func @transform_6(%arg0: i32) -> (i32, i32) {
    %c0_i32 = arith.constant 0 : i32
    %c0_i32_0 = arith.constant 0 : i32
    %c0_i32_1 = arith.constant 0 : i32
    return %c0_i32, %c0_i32_0 : i32, i32
  }
  func.func @transform_7(%arg0: i32) -> (i32, i32) {
    %c0_i32 = arith.constant 0 : i32
    %c0_i32_0 = arith.constant 0 : i32
    %c0_i32_1 = arith.constant 0 : i32
    return %c0_i32, %c0_i32_0 : i32, i32
  }
  func.func @transform_8(%arg0: i32) -> (i32, i32) {
    %c0_i32 = arith.constant 0 : i32
    %c0_i32_0 = arith.constant 0 : i32
    %c0_i32_1 = arith.constant 0 : i32
    return %c0_i32, %c0_i32_0 : i32, i32
  }
  func.func @transform_9(%arg0: i32) -> (i32, i32) {
    %c0_i32 = arith.constant 0 : i32
    %c0_i32_0 = arith.constant 0 : i32
    %c0_i32_1 = arith.constant 0 : i32
    return %c0_i32, %c0_i32_0 : i32, i32
  }
  func.func @transform_10(%arg0: i32) -> (i32, i32) {
    %c0_i32 = arith.constant 0 : i32
    %c0_i32_0 = arith.constant 0 : i32
    %c0_i32_1 = arith.constant 0 : i32
    return %c0_i32, %c0_i32_0 : i32, i32
  }
  func.func @transform_11(%arg0: i32) -> (i32, i32) {
    %c0_i32 = arith.constant 0 : i32
    %c0_i32_0 = arith.constant 0 : i32
    %c0_i32_1 = arith.constant 0 : i32
    return %c0_i32, %c0_i32_0 : i32, i32
  }
  func.func @transform_12(%arg0: i32) -> (i32, i32) {
    %c0_i32 = arith.constant 0 : i32
    %c0_i32_0 = arith.constant 0 : i32
    %c0_i32_1 = arith.constant 0 : i32
    return %c0_i32, %c0_i32_0 : i32, i32
  }
  func.func @transform_13(%arg0: i32) -> (i32, i32) {
    %c0_i32 = arith.constant 0 : i32
    %c0_i32_0 = arith.constant 0 : i32
    %c0_i32_1 = arith.constant 0 : i32
    return %c0_i32, %c0_i32_0 : i32, i32
  }
  func.func @transform_14(%arg0: i32) -> (i32, i32) {
    %c0_i32 = arith.constant 0 : i32
    %c0_i32_0 = arith.constant 0 : i32
    %c0_i32_1 = arith.constant 0 : i32
    return %c0_i32, %c0_i32_0 : i32, i32
  }
  func.func @transform_15(%arg0: i32) -> (i32, i32) {
    %c0_i32 = arith.constant 0 : i32
    %c0_i32_0 = arith.constant 0 : i32
    %c0_i32_1 = arith.constant 0 : i32
    return %c0_i32, %c0_i32_0 : i32, i32
  }
  func.func @transform_16(%arg0: i32) -> (i32, i32) {
    %c0_i32 = arith.constant 0 : i32
    %c0_i32_0 = arith.constant 0 : i32
    %c0_i32_1 = arith.constant 0 : i32
    return %c0_i32, %c0_i32_0 : i32, i32
  }
  func.func @transform_17(%arg0: i32) -> (i32, i32) {
    %c0_i32 = arith.constant 0 : i32
    %c0_i32_0 = arith.constant 0 : i32
    %c0_i32_1 = arith.constant 0 : i32
    return %c0_i32, %c0_i32_0 : i32, i32
  }
  func.func @transform_18(%arg0: i32) -> (i32, i32) {
    %c0_i32 = arith.constant 0 : i32
    %c0_i32_0 = arith.constant 0 : i32
    %c0_i32_1 = arith.constant 0 : i32
    return %c0_i32, %c0_i32_0 : i32, i32
  }
  func.func @transform_19(%arg0: i32) -> (i32, i32) {
    %c0_i32 = arith.constant 0 : i32
    %c0_i32_0 = arith.constant 0 : i32
    %c0_i32_1 = arith.constant 0 : i32
    return %c0_i32, %c0_i32_0 : i32, i32
  }
  func.func @transform_20(%arg0: i32) -> (i32, i32) {
    %c0_i32 = arith.constant 0 : i32
    %c0_i32_0 = arith.constant 0 : i32
    %c0_i32_1 = arith.constant 0 : i32
    return %c0_i32, %c0_i32_0 : i32, i32
  }
  func.func @transform_21(%arg0: i32) -> (i32, i32) {
    %c0_i32 = arith.constant 0 : i32
    %c0_i32_0 = arith.constant 0 : i32
    %c0_i32_1 = arith.constant 0 : i32
    return %c0_i32, %c0_i32_0 : i32, i32
  }
  func.func @transform_22(%arg0: i32) -> (i32, i32) {
    %c0_i32 = arith.constant 0 : i32
    %c0_i32_0 = arith.constant 0 : i32
    %c0_i32_1 = arith.constant 0 : i32
    return %c0_i32, %c0_i32_0 : i32, i32
  }
  func.func @transform_23(%arg0: i32) -> (i32, i32) {
    %c0_i32 = arith.constant 0 : i32
    %c0_i32_0 = arith.constant 0 : i32
    %c0_i32_1 = arith.constant 0 : i32
    return %c0_i32, %c0_i32_0 : i32, i32
  }
  func.func @transform_24(%arg0: i32) -> (i32, i32) {
    %c0_i32 = arith.constant 0 : i32
    %c0_i32_0 = arith.constant 0 : i32
    %c0_i32_1 = arith.constant 0 : i32
    return %c0_i32, %c0_i32_0 : i32, i32
  }
  func.func @transform_25(%arg0: i32) -> (i32, i32) {
    %c0_i32 = arith.constant 0 : i32
    %c0_i32_0 = arith.constant 0 : i32
    %c0_i32_1 = arith.constant 0 : i32
    return %c0_i32, %c0_i32_0 : i32, i32
  }
  func.func @transform_26(%arg0: i32) -> (i32, i32) {
    %c0_i32 = arith.constant 0 : i32
    %c0_i32_0 = arith.constant 0 : i32
    %c0_i32_1 = arith.constant 0 : i32
    return %c0_i32, %c0_i32_0 : i32, i32
  }
  func.func @transform_27(%arg0: i32) -> (i32, i32, i32) {
    %c0_i32 = arith.constant 0 : i32
    %c0_i32_0 = arith.constant 0 : i32
    %c0_i32_1 = arith.constant 0 : i32
    return %arg0, %c0_i32, %c0_i32_0 : i32, i32, i32
  }
}

</mosaic_0001>

<llo_original>
// kernel: model_forward.1
$region0: #{model_forward.1}
  #allocation0 [shape = 'u32[]', space=smem, size = 0x4, offset = 0x4, fixed_abs, tag = 'smem constant byte address 0x4 - core index']
  #allocation1 [shape = 'u32[144,128]{1,0:T(1,128)}', space=vmem, size = 0x12000, scoped, tag = 'internal scratch']
  #allocation2 [shape = 'f32[16,32]{1,0:T(8,128)}', space=vmem, size = 0x2000, scoped, tag = 'scratch operand']
  %s0 = inlined_call_operand.vmem [shape: f32[2,32,32], index: 0, kind: input, shape index: {}]
  %s1 = inlined_call_operand.vmem [shape: f32[2,16,32], index: 1, kind: input, shape index: {}]
  %s2 = inlined_call_operand.vmem [shape: f32[16,16], index: 2, kind: input, shape index: {}]
  %s3 = inlined_call_operand.vmem [shape: f32[16,32], index: 3, kind: input, shape index: {}]
  %s4 = inlined_call_operand.vmem [shape: f32[2,16], index: 4, kind: input, shape index: {}]
  %s5 = inlined_call_operand.vmem [shape: f32[1,32], index: 5, kind: input, shape index: {}]
  %s6 = inlined_call_operand.vmem [shape: f32[1,32], index: 6, kind: input, shape index: {}]
  %s7 = inlined_call_operand.vmem [shape: f32[1,32], index: 7, kind: input, shape index: {}]
  %s8 = inlined_call_operand.vmem [shape: f32[1,32], index: 8, kind: input, shape index: {}]
  %s9 = inlined_call_operand.vmem [shape: f32[1,32], index: 9, kind: input, shape index: {}]
  %s10 = inlined_call_operand.vmem [shape: f32[1,32], index: 10, kind: input, shape index: {}]
  %s11 = inlined_call_operand.vmem [shape: bf16[32,32], index: 11, kind: input, shape index: {}]
  %s12 = inlined_call_operand.vmem [shape: bf16[32,64], index: 12, kind: input, shape index: {}]
  %s13 = inlined_call_operand.vmem [shape: bf16[32,32], index: 13, kind: input, shape index: {}]
  %s14 = inlined_call_operand.vmem [shape: bf16[32,32], index: 14, kind: input, shape index: {}]
  %s15 = inlined_call_operand.vmem [shape: bf16[32,32], index: 15, kind: input, shape index: {}]
  %s16 = inlined_call_operand.vmem [shape: f32[1,32], index: 16, kind: input, shape index: {}]
  %s17 = inlined_call_operand.vmem [shape: f32[1,32], index: 17, kind: input, shape index: {}]
  %s18 = inlined_call_operand.vmem [shape: f32[1,32], index: 18, kind: input, shape index: {}]
  %s19 = inlined_call_operand.vmem [shape: f32[1,32], index: 19, kind: input, shape index: {}]
  %s20 = inlined_call_operand.vmem [shape: f32[1,32], index: 20, kind: input, shape index: {}]
  %s21 = inlined_call_operand.vmem [shape: f32[1,32], index: 21, kind: input, shape index: {}]
  %s22 = inlined_call_operand.vmem [shape: bf16[32,32], index: 22, kind: input, shape index: {}]
  %s23 = inlined_call_operand.vmem [shape: bf16[32,64], index: 23, kind: input, shape index: {}]
  %s24 = inlined_call_operand.vmem [shape: bf16[32,32], index: 24, kind: input, shape index: {}]
  %s25 = inlined_call_operand.vmem [shape: bf16[32,32], index: 25, kind: input, shape index: {}]
  %s26 = inlined_call_operand.vmem [shape: bf16[32,32], index: 26, kind: input, shape index: {}]
  %s27 = inlined_call_operand.vmem [shape: f32[2,2,32], index: 27, kind: output, shape index: {}]
  %s28 = sld [smem:[#allocation0]]
  $region141: #{model_forward.1} parent=0
    _
  %s30 = ssub.s32 1, %s28
  %s31 = scalar_select 0, %s30, %s28
  loop: start=0, step=1, limit=4
  $region2: #{model_forward.1} parent=0 // loop_pre_header
    _
  $region3: #{model_forward.1} parent=0 // loop_header
    %s33 = sphi 0, %s37
    %p34 = scmp.ge.s32.totalorder %s33, 4
    %s43 = sphi 0, %s45
    %s46 = sphi 0, %s43
    %s47 = sphi 0, %s46
    %s63 = sphi 0, %s47
    %s69 = sphi 0, %s71
    %s72 = sphi 0, %s69
    %s73 = sphi 0, %s72
    %s89 = sphi 0, %s73
    %s93 = sphi 0, %s93
    %s95 = sphi 0, %s93
    %s96 = sphi 0, %s95
    %s110 = sphi 0, %s96
    %s114 = sphi 0, %s114
    %s116 = sphi 0, %s114
    %s117 = sphi 0, %s116
    %s131 = sphi 0, %s117
    %s135 = sphi 0, %s135
    %s137 = sphi 0, %s135
    %s138 = sphi 0, %s137
    %s152 = sphi 0, %s138
    %s156 = sphi 0, %s156
    %s158 = sphi 0, %s156
    %s159 = sphi 0, %s158
    %s173 = sphi 0, %s159
    %s177 = sphi 0, %s177
    %s179 = sphi 0, %s177
    %s180 = sphi 0, %s179
    %s194 = sphi 0, %s180
    %s198 = sphi 0, %s198
    %s200 = sphi 0, %s198
    %s201 = sphi 0, %s200
    %s215 = sphi 0, %s201
    %s219 = sphi 0, %s219
    %s221 = sphi 0, %s219
    %s222 = sphi 0, %s221
    %s236 = sphi 0, %s222
    %s240 = sphi 0, %s240
    %s242 = sphi 0, %s240
    %s243 = sphi 0, %s242
    %s257 = sphi 0, %s243
    %s261 = sphi 0, %s261
    %s263 = sphi 0, %s261
    %s264 = sphi 0, %s263
    %s278 = sphi 0, %s264
    %s282 = sphi 0, %s282
    %s284 = sphi 0, %s282
    %s285 = sphi 0, %s284
    %s299 = sphi 0, %s285
    %s303 = sphi 0, %s303
    %s305 = sphi 0, %s303
    %s306 = sphi 0, %s305
    %s320 = sphi 0, %s306
    %s324 = sphi 0, %s324
    %s326 = sphi 0, %s324
    %s327 = sphi 0, %s326
    %s341 = sphi 0, %s327
    %s345 = sphi 0, %s345
    %s347 = sphi 0, %s345
    %s348 = sphi 0, %s347
    %s362 = sphi 0, %s348
    %s366 = sphi 0, %s366
    %s368 = sphi 0, %s366
    %s369 = sphi 0, %s368
    %s383 = sphi 0, %s369
    %s387 = sphi 0, %s387
    %s389 = sphi 0, %s387
    %s390 = sphi 0, %s389
    %s404 = sphi 0, %s390
    %s408 = sphi 0, %s408
    %s410 = sphi 0, %s408
    %s411 = sphi 0, %s410
    %s425 = sphi 0, %s411
    %s429 = sphi 0, %s429
    %s431 = sphi 0, %s429
    %s432 = sphi 0, %s431
    %s446 = sphi 0, %s432
    %s450 = sphi 0, %s450
    %s452 = sphi 0, %s450
    %s453 = sphi 0, %s452
    %s467 = sphi 0, %s453
    %s471 = sphi 0, %s471
    %s473 = sphi 0, %s471
    %s474 = sphi 0, %s473
    %s488 = sphi 0, %s474
    %s492 = sphi 0, %s492
    %s494 = sphi 0, %s492
    %s495 = sphi 0, %s494
    %s509 = sphi 0, %s495
    %s513 = sphi 0, %s513
    %s515 = sphi 0, %s513
    %s516 = sphi 0, %s515
    %s530 = sphi 0, %s516
    %s534 = sphi 0, %s534
    %s536 = sphi 0, %s534
    %s537 = sphi 0, %s536
    %s551 = sphi 0, %s537
    %s555 = sphi 0, %s555
    %s557 = sphi 0, %s555
    %s558 = sphi 0, %s557
    %s572 = sphi 0, %s558
    %s576 = sphi 0, %s576
    %s578 = sphi 0, %s576
    %s579 = sphi 0, %s578
    %s593 = sphi 0, %s579
    %s597 = sphi 0, %s597
    %s599 = sphi 0, %s597
    %s600 = sphi 0, %s599
    %s614 = sphi 0, %s600
    %s620 = sphi 0, %s622
    %s623 = sphi 0, %s620
    %s624 = sphi 0, %s623
    %s640 = sphi 0, %s624
  $region4: #{model_forward.1} parent=0 // loop_header_branch
    %36 = sbr.rel (%p34) target = $region8
  $region5: #{model_forward.1} parent=0 // loop_body
    %s38 = ssub.s32 %s33, 1
    %s39 = ssub.s32 %s33, 2
    %s40 = sadd.s32 %s33, 1
    %s41 = ssub.s32 %s33, %s40
    %p42 = scmp.eq.s32.totalorder %s41, 0
    %s44 = sadd.s32 %s43, 1
    %s45 = scalar_select %p42, %s43, %s44
    %p48 = pneg %p42
    %p49 = scmp.eq.s32.totalorder %s33, 1
    %p50 = por %p48, %p49
    %p51 = scmp.ne.s32.totalorder %s43, %s46
    %p52 = scmp.eq.s32.totalorder %s33, 0
    %p53 = por %p51, %p52
    %p54 = scmp.ne.s32.totalorder %s43, %s46
    %p55 = scmp.eq.s32.totalorder %s38, 1
    %p56 = por %p54, %p55
    %p57 = scmp.ne.s32.totalorder %s46, %s47
    %p58 = scmp.eq.s32.totalorder %s38, 0
    %p59 = por %p57, %p58
    %p60 = scmp.ne.s32.totalorder %s46, %s47
    %p61 = scmp.eq.s32.totalorder %s39, 1
    %p62 = por %p60, %p61
    %p64 = scmp.ne.s32.totalorder %s47, %s63
    %p65 = scmp.eq.s32.totalorder %s39, 0
    %p66 = por %p64, %p65
    %s67 = ssub.s32 %s33, %s40
    %p68 = scmp.eq.s32.totalorder %s67, 0
    %s70 = sadd.s32 %s69, 1
    %s71 = scalar_select %p68, %s69, %s70
    %p74 = pneg %p68
    %p75 = scmp.eq.s32.totalorder %s33, 1
    %p76 = por %p74, %p75
    %p77 = scmp.ne.s32.totalorder %s69, %s72
    %p78 = scmp.eq.s32.totalorder %s33, 0
    %p79 = por %p77, %p78
    %p80 = scmp.ne.s32.totalorder %s69, %s72
    %p81 = scmp.eq.s32.totalorder %s38, 1
    %p82 = por %p80, %p81
    %p83 = scmp.ne.s32.totalorder %s72, %s73
    %p84 = scmp.eq.s32.totalorder %s38, 0
    %p85 = por %p83, %p84
    %p86 = scmp.ne.s32.totalorder %s72, %s73
    %p87 = scmp.eq.s32.totalorder %s39, 1
    %p88 = por %p86, %p87
    %p90 = scmp.ne.s32.totalorder %s73, %s89
    %p91 = scmp.eq.s32.totalorder %s39, 0
    %p92 = por %p90, %p91
    %s94 = sadd.s32 %s93, 1
    %p97 = scmp.eq.s32.totalorder %s33, 1
    %p98 = scmp.ne.s32.totalorder %s93, %s95
    %p99 = scmp.eq.s32.totalorder %s33, 0
    %p100 = por %p98, %p99
    %p101 = scmp.ne.s32.totalorder %s93, %s95
    %p102 = scmp.eq.s32.totalorder %s38, 1
    %p103 = por %p101, %p102
    %p104 = scmp.ne.s32.totalorder %s95, %s96
    %p105 = scmp.eq.s32.totalorder %s38, 0
    %p106 = por %p104, %p105
    %p107 = scmp.ne.s32.totalorder %s95, %s96
    %p108 = scmp.eq.s32.totalorder %s39, 1
    %p109 = por %p107, %p108
    %p111 = scmp.ne.s32.totalorder %s96, %s110
    %p112 = scmp.eq.s32.totalorder %s39, 0
    %p113 = por %p111, %p112
    %s115 = sadd.s32 %s114, 1
    %p118 = scmp.eq.s32.totalorder %s33, 1
    %p119 = scmp.ne.s32.totalorder %s114, %s116
    %p120 = scmp.eq.s32.totalorder %s33, 0
    %p121 = por %p119, %p120
    %p122 = scmp.ne.s32.totalorder %s114, %s116
    %p123 = scmp.eq.s32.totalorder %s38, 1
    %p124 = por %p122, %p123
    %p125 = scmp.ne.s32.totalorder %s116, %s117
    %p126 = scmp.eq.s32.totalorder %s38, 0
    %p127 = por %p125, %p126
    %p128 = scmp.ne.s32.totalorder %s116, %s117
    %p129 = scmp.eq.s32.totalorder %s39, 1
    %p130 = por %p128, %p129
    %p132 = scmp.ne.s32.totalorder %s117, %s131
    %p133 = scmp.eq.s32.totalorder %s39, 0
    %p134 = por %p132, %p133
    %s136 = sadd.s32 %s135, 1
    %p139 = scmp.eq.s32.totalorder %s33, 1
    %p140 = scmp.ne.s32.totalorder %s135, %s137
    %p141 = scmp.eq.s32.totalorder %s33, 0
    %p142 = por %p140, %p141
    %p143 = scmp.ne.s32.totalorder %s135, %s137
    %p144 = scmp.eq.s32.totalorder %s38, 1
    %p145 = por %p143, %p144
    %p146 = scmp.ne.s32.totalorder %s137, %s138
    %p147 = scmp.eq.s32.totalorder %s38, 0
    %p148 = por %p146, %p147
    %p149 = scmp.ne.s32.totalorder %s137, %s138
    %p150 = scmp.eq.s32.totalorder %s39, 1
    %p151 = por %p149, %p150
    %p153 = scmp.ne.s32.totalorder %s138, %s152
    %p154 = scmp.eq.s32.totalorder %s39, 0
    %p155 = por %p153, %p154
    %s157 = sadd.s32 %s156, 1
    %p160 = scmp.eq.s32.totalorder %s33, 1
    %p161 = scmp.ne.s32.totalorder %s156, %s158
    %p162 = scmp.eq.s32.totalorder %s33, 0
    %p163 = por %p161, %p162
    %p164 = scmp.ne.s32.totalorder %s156, %s158
    %p165 = scmp.eq.s32.totalorder %s38, 1
    %p166 = por %p164, %p165
    %p167 = scmp.ne.s32.totalorder %s158, %s159
    %p168 = scmp.eq.s32.totalorder %s38, 0
    %p169 = por %p167, %p168
    %p170 = scmp.ne.s32.totalorder %s158, %s159
    %p171 = scmp.eq.s32.totalorder %s39, 1
    %p172 = por %p170, %p171
    %p174 = scmp.ne.s32.totalorder %s159, %s173
    %p175 = scmp.eq.s32.totalorder %s39, 0
    %p176 = por %p174, %p175
    %s178 = sadd.s32 %s177, 1
    %p181 = scmp.eq.s32.totalorder %s33, 1
    %p182 = scmp.ne.s32.totalorder %s177, %s179
    %p183 = scmp.eq.s32.totalorder %s33, 0
    %p184 = por %p182, %p183
    %p185 = scmp.ne.s32.totalorder %s177, %s179
    %p186 = scmp.eq.s32.totalorder %s38, 1
    %p187 = por %p185, %p186
    %p188 = scmp.ne.s32.totalorder %s179, %s180
    %p189 = scmp.eq.s32.totalorder %s38, 0
    %p190 = por %p188, %p189
    %p191 = scmp.ne.s32.totalorder %s179, %s180
    %p192 = scmp.eq.s32.totalorder %s39, 1
    %p193 = por %p191, %p192
    %p195 = scmp.ne.s32.totalorder %s180, %s194
    %p196 = scmp.eq.s32.totalorder %s39, 0
    %p197 = por %p195, %p196
    %s199 = sadd.s32 %s198, 1
    %p202 = scmp.eq.s32.totalorder %s33, 1
    %p203 = scmp.ne.s32.totalorder %s198, %s200
    %p204 = scmp.eq.s32.totalorder %s33, 0
    %p205 = por %p203, %p204
    %p206 = scmp.ne.s32.totalorder %s198, %s200
    %p207 = scmp.eq.s32.totalorder %s38, 1
    %p208 = por %p206, %p207
    %p209 = scmp.ne.s32.totalorder %s200, %s201
    %p210 = scmp.eq.s32.totalorder %s38, 0
    %p211 = por %p209, %p210
    %p212 = scmp.ne.s32.totalorder %s200, %s201
    %p213 = scmp.eq.s32.totalorder %s39, 1
    %p214 = por %p212, %p213
    %p216 = scmp.ne.s32.totalorder %s201, %s215
    %p217 = scmp.eq.s32.totalorder %s39, 0
    %p218 = por %p216, %p217
    %s220 = sadd.s32 %s219, 1
    %p223 = scmp.eq.s32.totalorder %s33, 1
    %p224 = scmp.ne.s32.totalorder %s219, %s221
    %p225 = scmp.eq.s32.totalorder %s33, 0
    %p226 = por %p224, %p225
    %p227 = scmp.ne.s32.totalorder %s219, %s221
    %p228 = scmp.eq.s32.totalorder %s38, 1
    %p229 = por %p227, %p228
    %p230 = scmp.ne.s32.totalorder %s221, %s222
    %p231 = scmp.eq.s32.totalorder %s38, 0
    %p232 = por %p230, %p231
    %p233 = scmp.ne.s32.totalorder %s221, %s222
    %p234 = scmp.eq.s32.totalorder %s39, 1
    %p235 = por %p233, %p234
    %p237 = scmp.ne.s32.totalorder %s222, %s236
    %p238 = scmp.eq.s32.totalorder %s39, 0
    %p239 = por %p237, %p238
    %s241 = sadd.s32 %s240, 1
    %p244 = scmp.eq.s32.totalorder %s33, 1
    %p245 = scmp.ne.s32.totalorder %s240, %s242
    %p246 = scmp.eq.s32.totalorder %s33, 0
    %p247 = por %p245, %p246
    %p248 = scmp.ne.s32.totalorder %s240, %s242
    %p249 = scmp.eq.s32.totalorder %s38, 1
    %p250 = por %p248, %p249
    %p251 = scmp.ne.s32.totalorder %s242, %s243
    %p252 = scmp.eq.s32.totalorder %s38, 0
    %p253 = por %p251, %p252
    %p254 = scmp.ne.s32.totalorder %s242, %s243
    %p255 = scmp.eq.s32.totalorder %s39, 1
    %p256 = por %p254, %p255
    %p258 = scmp.ne.s32.totalorder %s243, %s257
    %p259 = scmp.eq.s32.totalorder %s39, 0
    %p260 = por %p258, %p259
    %s262 = sadd.s32 %s261, 1
    %p265 = scmp.eq.s32.totalorder %s33, 1
    %p266 = scmp.ne.s32.totalorder %s261, %s263
    %p267 = scmp.eq.s32.totalorder %s33, 0
    %p268 = por %p266, %p267
    %p269 = scmp.ne.s32.totalorder %s261, %s263
    %p270 = scmp.eq.s32.totalorder %s38, 1
    %p271 = por %p269, %p270
    %p272 = scmp.ne.s32.totalorder %s263, %s264
    %p273 = scmp.eq.s32.totalorder %s38, 0
    %p274 = por %p272, %p273
    %p275 = scmp.ne.s32.totalorder %s263, %s264
    %p276 = scmp.eq.s32.totalorder %s39, 1
    %p277 = por %p275, %p276
    %p279 = scmp.ne.s32.totalorder %s264, %s278
    %p280 = scmp.eq.s32.totalorder %s39, 0
    %p281 = por %p279, %p280
    %s283 = sadd.s32 %s282, 1
    %p286 = scmp.eq.s32.totalorder %s33, 1
    %p287 = scmp.ne.s32.totalorder %s282, %s284
    %p288 = scmp.eq.s32.totalorder %s33, 0
    %p289 = por %p287, %p288
    %p290 = scmp.ne.s32.totalorder %s282, %s284
    %p291 = scmp.eq.s32.totalorder %s38, 1
    %p292 = por %p290, %p291
    %p293 = scmp.ne.s32.totalorder %s284, %s285
    %p294 = scmp.eq.s32.totalorder %s38, 0
    %p295 = por %p293, %p294
    %p296 = scmp.ne.s32.totalorder %s284, %s285
    %p297 = scmp.eq.s32.totalorder %s39, 1
    %p298 = por %p296, %p297
    %p300 = scmp.ne.s32.totalorder %s285, %s299
    %p301 = scmp.eq.s32.totalorder %s39, 0
    %p302 = por %p300, %p301
    %s304 = sadd.s32 %s303, 1
    %p307 = scmp.eq.s32.totalorder %s33, 1
    %p308 = scmp.ne.s32.totalorder %s303, %s305
    %p309 = scmp.eq.s32.totalorder %s33, 0
    %p310 = por %p308, %p309
    %p311 = scmp.ne.s32.totalorder %s303, %s305
    %p312 = scmp.eq.s32.totalorder %s38, 1
    %p313 = por %p311, %p312
    %p314 = scmp.ne.s32.totalorder %s305, %s306
    %p315 = scmp.eq.s32.totalorder %s38, 0
    %p316 = por %p314, %p315
    %p317 = scmp.ne.s32.totalorder %s305, %s306
    %p318 = scmp.eq.s32.totalorder %s39, 1
    %p319 = por %p317, %p318
    %p321 = scmp.ne.s32.totalorder %s306, %s320
    %p322 = scmp.eq.s32.totalorder %s39, 0
    %p323 = por %p321, %p322
    %s325 = sadd.s32 %s324, 1
    %p328 = scmp.eq.s32.totalorder %s33, 1
    %p329 = scmp.ne.s32.totalorder %s324, %s326
    %p330 = scmp.eq.s32.totalorder %s33, 0
    %p331 = por %p329, %p330
    %p332 = scmp.ne.s32.totalorder %s324, %s326
    %p333 = scmp.eq.s32.totalorder %s38, 1
    %p334 = por %p332, %p333
    %p335 = scmp.ne.s32.totalorder %s326, %s327
    %p336 = scmp.eq.s32.totalorder %s38, 0
    %p337 = por %p335, %p336
    %p338 = scmp.ne.s32.totalorder %s326, %s327
    %p339 = scmp.eq.s32.totalorder %s39, 1
    %p340 = por %p338, %p339
    %p342 = scmp.ne.s32.totalorder %s327, %s341
    %p343 = scmp.eq.s32.totalorder %s39, 0
    %p344 = por %p342, %p343
    %s346 = sadd.s32 %s345, 1
    %p349 = scmp.eq.s32.totalorder %s33, 1
    %p350 = scmp.ne.s32.totalorder %s345, %s347
    %p351 = scmp.eq.s32.totalorder %s33, 0
    %p352 = por %p350, %p351
    %p353 = scmp.ne.s32.totalorder %s345, %s347
    %p354 = scmp.eq.s32.totalorder %s38, 1
    %p355 = por %p353, %p354
    %p356 = scmp.ne.s32.totalorder %s347, %s348
    %p357 = scmp.eq.s32.totalorder %s38, 0
    %p358 = por %p356, %p357
    %p359 = scmp.ne.s32.totalorder %s347, %s348
    %p360 = scmp.eq.s32.totalorder %s39, 1
    %p361 = por %p359, %p360
    %p363 = scmp.ne.s32.totalorder %s348, %s362
    %p364 = scmp.eq.s32.totalorder %s39, 0
    %p365 = por %p363, %p364
    %s367 = sadd.s32 %s366, 1
    %p370 = scmp.eq.s32.totalorder %s33, 1
    %p371 = scmp.ne.s32.totalorder %s366, %s368
    %p372 = scmp.eq.s32.totalorder %s33, 0
    %p373 = por %p371, %p372
    %p374 = scmp.ne.s32.totalorder %s366, %s368
    %p375 = scmp.eq.s32.totalorder %s38, 1
    %p376 = por %p374, %p375
    %p377 = scmp.ne.s32.totalorder %s368, %s369
    %p378 = scmp.eq.s32.totalorder %s38, 0
    %p379 = por %p377, %p378
    %p380 = scmp.ne.s32.totalorder %s368, %s369
    %p381 = scmp.eq.s32.totalorder %s39, 1
    %p382 = por %p380, %p381
    %p384 = scmp.ne.s32.totalorder %s369, %s383
    %p385 = scmp.eq.s32.totalorder %s39, 0
    %p386 = por %p384, %p385
    %s388 = sadd.s32 %s387, 1
    %p391 = scmp.eq.s32.totalorder %s33, 1
    %p392 = scmp.ne.s32.totalorder %s387, %s389
    %p393 = scmp.eq.s32.totalorder %s33, 0
    %p394 = por %p392, %p393
    %p395 = scmp.ne.s32.totalorder %s387, %s389
    %p396 = scmp.eq.s32.totalorder %s38, 1
    %p397 = por %p395, %p396
    %p398 = scmp.ne.s32.totalorder %s389, %s390
    %p399 = scmp.eq.s32.totalorder %s38, 0
    %p400 = por %p398, %p399
    %p401 = scmp.ne.s32.totalorder %s389, %s390
    %p402 = scmp.eq.s32.totalorder %s39, 1
    %p403 = por %p401, %p402
    %p405 = scmp.ne.s32.totalorder %s390, %s404
    %p406 = scmp.eq.s32.totalorder %s39, 0
    %p407 = por %p405, %p406
    %s409 = sadd.s32 %s408, 1
    %p412 = scmp.eq.s32.totalorder %s33, 1
    %p413 = scmp.ne.s32.totalorder %s408, %s410
    %p414 = scmp.eq.s32.totalorder %s33, 0
    %p415 = por %p413, %p414
    %p416 = scmp.ne.s32.totalorder %s408, %s410
    %p417 = scmp.eq.s32.totalorder %s38, 1
    %p418 = por %p416, %p417
    %p419 = scmp.ne.s32.totalorder %s410, %s411
    %p420 = scmp.eq.s32.totalorder %s38, 0
    %p421 = por %p419, %p420
    %p422 = scmp.ne.s32.totalorder %s410, %s411
    %p423 = scmp.eq.s32.totalorder %s39, 1
    %p424 = por %p422, %p423
    %p426 = scmp.ne.s32.totalorder %s411, %s425
    %p427 = scmp.eq.s32.totalorder %s39, 0
    %p428 = por %p426, %p427
    %s430 = sadd.s32 %s429, 1
    %p433 = scmp.eq.s32.totalorder %s33, 1
    %p434 = scmp.ne.s32.totalorder %s429, %s431
    %p435 = scmp.eq.s32.totalorder %s33, 0
    %p436 = por %p434, %p435
    %p437 = scmp.ne.s32.totalorder %s429, %s431
    %p438 = scmp.eq.s32.totalorder %s38, 1
    %p439 = por %p437, %p438
    %p440 = scmp.ne.s32.totalorder %s431, %s432
    %p441 = scmp.eq.s32.totalorder %s38, 0
    %p442 = por %p440, %p441
    %p443 = scmp.ne.s32.totalorder %s431, %s432
    %p444 = scmp.eq.s32.totalorder %s39, 1
    %p445 = por %p443, %p444
    %p447 = scmp.ne.s32.totalorder %s432, %s446
    %p448 = scmp.eq.s32.totalorder %s39, 0
    %p449 = por %p447, %p448
    %s451 = sadd.s32 %s450, 1
    %p454 = scmp.eq.s32.totalorder %s33, 1
    %p455 = scmp.ne.s32.totalorder %s450, %s452
    %p456 = scmp.eq.s32.totalorder %s33, 0
    %p457 = por %p455, %p456
    %p458 = scmp.ne.s32.totalorder %s450, %s452
    %p459 = scmp.eq.s32.totalorder %s38, 1
    %p460 = por %p458, %p459
    %p461 = scmp.ne.s32.totalorder %s452, %s453
    %p462 = scmp.eq.s32.totalorder %s38, 0
    %p463 = por %p461, %p462
    %p464 = scmp.ne.s32.totalorder %s452, %s453
    %p465 = scmp.eq.s32.totalorder %s39, 1
    %p466 = por %p464, %p465
    %p468 = scmp.ne.s32.totalorder %s453, %s467
    %p469 = scmp.eq.s32.totalorder %s39, 0
    %p470 = por %p468, %p469
    %s472 = sadd.s32 %s471, 1
    %p475 = scmp.eq.s32.totalorder %s33, 1
    %p476 = scmp.ne.s32.totalorder %s471, %s473
    %p477 = scmp.eq.s32.totalorder %s33, 0
    %p478 = por %p476, %p477
    %p479 = scmp.ne.s32.totalorder %s471, %s473
    %p480 = scmp.eq.s32.totalorder %s38, 1
    %p481 = por %p479, %p480
    %p482 = scmp.ne.s32.totalorder %s473, %s474
    %p483 = scmp.eq.s32.totalorder %s38, 0
    %p484 = por %p482, %p483
    %p485 = scmp.ne.s32.totalorder %s473, %s474
    %p486 = scmp.eq.s32.totalorder %s39, 1
    %p487 = por %p485, %p486
    %p489 = scmp.ne.s32.totalorder %s474, %s488
    %p490 = scmp.eq.s32.totalorder %s39, 0
    %p491 = por %p489, %p490
    %s493 = sadd.s32 %s492, 1
    %p496 = scmp.eq.s32.totalorder %s33, 1
    %p497 = scmp.ne.s32.totalorder %s492, %s494
    %p498 = scmp.eq.s32.totalorder %s33, 0
    %p499 = por %p497, %p498
    %p500 = scmp.ne.s32.totalorder %s492, %s494
    %p501 = scmp.eq.s32.totalorder %s38, 1
    %p502 = por %p500, %p501
    %p503 = scmp.ne.s32.totalorder %s494, %s495
    %p504 = scmp.eq.s32.totalorder %s38, 0
    %p505 = por %p503, %p504
    %p506 = scmp.ne.s32.totalorder %s494, %s495
    %p507 = scmp.eq.s32.totalorder %s39, 1
    %p508 = por %p506, %p507
    %p510 = scmp.ne.s32.totalorder %s495, %s509
    %p511 = scmp.eq.s32.totalorder %s39, 0
    %p512 = por %p510, %p511
    %s514 = sadd.s32 %s513, 1
    %p517 = scmp.eq.s32.totalorder %s33, 1
    %p518 = scmp.ne.s32.totalorder %s513, %s515
    %p519 = scmp.eq.s32.totalorder %s33, 0
    %p520 = por %p518, %p519
    %p521 = scmp.ne.s32.totalorder %s513, %s515
    %p522 = scmp.eq.s32.totalorder %s38, 1
    %p523 = por %p521, %p522
    %p524 = scmp.ne.s32.totalorder %s515, %s516
    %p525 = scmp.eq.s32.totalorder %s38, 0
    %p526 = por %p524, %p525
    %p527 = scmp.ne.s32.totalorder %s515, %s516
    %p528 = scmp.eq.s32.totalorder %s39, 1
    %p529 = por %p527, %p528
    %p531 = scmp.ne.s32.totalorder %s516, %s530
    %p532 = scmp.eq.s32.totalorder %s39, 0
    %p533 = por %p531, %p532
    %s535 = sadd.s32 %s534, 1
    %p538 = scmp.eq.s32.totalorder %s33, 1
    %p539 = scmp.ne.s32.totalorder %s534, %s536
    %p540 = scmp.eq.s32.totalorder %s33, 0
    %p541 = por %p539, %p540
    %p542 = scmp.ne.s32.totalorder %s534, %s536
    %p543 = scmp.eq.s32.totalorder %s38, 1
    %p544 = por %p542, %p543
    %p545 = scmp.ne.s32.totalorder %s536, %s537
    %p546 = scmp.eq.s32.totalorder %s38, 0
    %p547 = por %p545, %p546
    %p548 = scmp.ne.s32.totalorder %s536, %s537
    %p549 = scmp.eq.s32.totalorder %s39, 1
    %p550 = por %p548, %p549
    %p552 = scmp.ne.s32.totalorder %s537, %s551
    %p553 = scmp.eq.s32.totalorder %s39, 0
    %p554 = por %p552, %p553
    %s556 = sadd.s32 %s555, 1
    %p559 = scmp.eq.s32.totalorder %s33, 1
    %p560 = scmp.ne.s32.totalorder %s555, %s557
    %p561 = scmp.eq.s32.totalorder %s33, 0
    %p562 = por %p560, %p561
    %p563 = scmp.ne.s32.totalorder %s555, %s557
    %p564 = scmp.eq.s32.totalorder %s38, 1
    %p565 = por %p563, %p564
    %p566 = scmp.ne.s32.totalorder %s557, %s558
    %p567 = scmp.eq.s32.totalorder %s38, 0
    %p568 = por %p566, %p567
    %p569 = scmp.ne.s32.totalorder %s557, %s558
    %p570 = scmp.eq.s32.totalorder %s39, 1
    %p571 = por %p569, %p570
    %p573 = scmp.ne.s32.totalorder %s558, %s572
    %p574 = scmp.eq.s32.totalorder %s39, 0
    %p575 = por %p573, %p574
    %s577 = sadd.s32 %s576, 1
    %p580 = scmp.eq.s32.totalorder %s33, 1
    %p581 = scmp.ne.s32.totalorder %s576, %s578
    %p582 = scmp.eq.s32.totalorder %s33, 0
    %p583 = por %p581, %p582
    %p584 = scmp.ne.s32.totalorder %s576, %s578
    %p585 = scmp.eq.s32.totalorder %s38, 1
    %p586 = por %p584, %p585
    %p587 = scmp.ne.s32.totalorder %s578, %s579
    %p588 = scmp.eq.s32.totalorder %s38, 0
    %p589 = por %p587, %p588
    %p590 = scmp.ne.s32.totalorder %s578, %s579
    %p591 = scmp.eq.s32.totalorder %s39, 1
    %p592 = por %p590, %p591
    %p594 = scmp.ne.s32.totalorder %s579, %s593
    %p595 = scmp.eq.s32.totalorder %s39, 0
    %p596 = por %p594, %p595
    %s598 = sadd.s32 %s597, 1
    %p601 = scmp.eq.s32.totalorder %s33, 1
    %p602 = scmp.ne.s32.totalorder %s597, %s599
    %p603 = scmp.eq.s32.totalorder %s33, 0
    %p604 = por %p602, %p603
    %p605 = scmp.ne.s32.totalorder %s597, %s599
    %p606 = scmp.eq.s32.totalorder %s38, 1
    %p607 = por %p605, %p606
    %p608 = scmp.ne.s32.totalorder %s599, %s600
    %p609 = scmp.eq.s32.totalorder %s38, 0
    %p610 = por %p608, %p609
    %p611 = scmp.ne.s32.totalorder %s599, %s600
    %p612 = scmp.eq.s32.totalorder %s39, 1
    %p613 = por %p611, %p612
    %p615 = scmp.ne.s32.totalorder %s600, %s614
    %p616 = scmp.eq.s32.totalorder %s39, 0
    %p617 = por %p615, %p616
    %s618 = ssub.s32 %s33, %s40
    %p619 = scmp.eq.s32.totalorder %s618, 0
    %s621 = sadd.s32 %s620, 1
    %s622 = scalar_select %p619, %s620, %s621
    %p625 = pneg %p619
    %p626 = scmp.eq.s32.totalorder %s33, 1
    %p627 = por %p625, %p626
    %p628 = scmp.ne.s32.totalorder %s620, %s623
    %p629 = scmp.eq.s32.totalorder %s33, 0
    %p630 = por %p628, %p629
    %p631 = scmp.ne.s32.totalorder %s620, %s623
    %p632 = scmp.eq.s32.totalorder %s38, 1
    %p633 = por %p631, %p632
    %p634 = scmp.ne.s32.totalorder %s623, %s624
    %p635 = scmp.eq.s32.totalorder %s38, 0
    %p636 = por %p634, %p635
    %p637 = scmp.ne.s32.totalorder %s623, %s624
    %p638 = scmp.eq.s32.totalorder %s39, 1
    %p639 = por %p637, %p638
    %p641 = scmp.ne.s32.totalorder %s624, %s640
    %p642 = scmp.eq.s32.totalorder %s39, 0
    %p643 = por %p641, %p642
    %p644 = scmp.le.s32.totalorder 1, %s33
    %p645 = scmp.lt.s32.totalorder %s33, 3
    %p646 = pnand %p644, %p645
    %p647 = pneg %p646
    // Predicated region
    $region9: #{model_forward.1} parent=5 // pred_check
      _
    $region10: #{model_forward.1} parent=5 // pred_check_branch
      %649 = sbr.rel (%p646) target = $region12
    $region11: #{model_forward.1} parent=5 // pred_region
      %s650 = ssub.s32 %s33, 1
      // Predicated region
      $region13: #{model_forward.1} parent=11 // pred_check
        %p651 = pneg %p106
      $region14: #{model_forward.1} parent=11 // pred_check_branch
        %653 = sbr.rel (%p651) target = $region16
      $region15: #{model_forward.1} parent=11 // pred_region
        _
      $region16: #{model_forward.1} parent=11 // pred_fallthru
        _
      // Predicated region
      $region17: #{model_forward.1} parent=11 // pred_check
        %p654 = pneg %p127
      $region18: #{model_forward.1} parent=11 // pred_check_branch
        %656 = sbr.rel (%p654) target = $region20
      $region19: #{model_forward.1} parent=11 // pred_region
        _
      $region20: #{model_forward.1} parent=11 // pred_fallthru
        _
      // Predicated region
      $region21: #{model_forward.1} parent=11 // pred_check
        %p657 = pneg %p148
      $region22: #{model_forward.1} parent=11 // pred_check_branch
        %659 = sbr.rel (%p657) target = $region24
      $region23: #{model_forward.1} parent=11 // pred_region
        _
      $region24: #{model_forward.1} parent=11 // pred_fallthru
        _
      // Predicated region
      $region25: #{model_forward.1} parent=11 // pred_check
        %p660 = pneg %p169
      $region26: #{model_forward.1} parent=11 // pred_check_branch
        %662 = sbr.rel (%p660) target = $region28
      $region27: #{model_forward.1} parent=11 // pred_region
        _
      $region28: #{model_forward.1} parent=11 // pred_fallthru
        _
      // Predicated region
      $region29: #{model_forward.1} parent=11 // pred_check
        %p663 = pneg %p190
      $region30: #{model_forward.1} parent=11 // pred_check_branch
        %665 = sbr.rel (%p663) target = $region32
      $region31: #{model_forward.1} parent=11 // pred_region
        _
      $region32: #{model_forward.1} parent=11 // pred_fallthru
        _
      // Predicated region
      $region33: #{model_forward.1} parent=11 // pred_check
        %p666 = pneg %p211
      $region34: #{model_forward.1} parent=11 // pred_check_branch
        %668 = sbr.rel (%p666) target = $region36
      $region35: #{model_forward.1} parent=11 // pred_region
        _
      $region36: #{model_forward.1} parent=11 // pred_fallthru
        _
      // Predicated region
      $region37: #{model_forward.1} parent=11 // pred_check
        %p669 = pneg %p232
      $region38: #{model_forward.1} parent=11 // pred_check_branch
        %671 = sbr.rel (%p669) target = $region40
      $region39: #{model_forward.1} parent=11 // pred_region
        _
      $region40: #{model_forward.1} parent=11 // pred_fallthru
        _
      // Predicated region
      $region41: #{model_forward.1} parent=11 // pred_check
        %p672 = pneg %p253
      $region42: #{model_forward.1} parent=11 // pred_check_branch
        %674 = sbr.rel (%p672) target = $region44
      $region43: #{model_forward.1} parent=11 // pred_region
        _
      $region44: #{model_forward.1} parent=11 // pred_fallthru
        _
      // Predicated region
      $region45: #{model_forward.1} parent=11 // pred_check
        %p675 = pneg %p274
      $region46: #{model_forward.1} parent=11 // pred_check_branch
        %677 = sbr.rel (%p675) target = $region48
      $region47: #{model_forward.1} parent=11 // pred_region
        _
      $region48: #{model_forward.1} parent=11 // pred_fallthru
        _
      // Predicated region
      $region49: #{model_forward.1} parent=11 // pred_check
        %p678 = pneg %p295
      $region50: #{model_forward.1} parent=11 // pred_check_branch
        %680 = sbr.rel (%p678) target = $region52
      $region51: #{model_forward.1} parent=11 // pred_region
        _
      $region52: #{model_forward.1} parent=11 // pred_fallthru
        _
      // Predicated region
      $region53: #{model_forward.1} parent=11 // pred_check
        %p681 = pneg %p316
      $region54: #{model_forward.1} parent=11 // pred_check_branch
        %683 = sbr.rel (%p681) target = $region56
      $region55: #{model_forward.1} parent=11 // pred_region
        _
      $region56: #{model_forward.1} parent=11 // pred_fallthru
        _
      // Predicated region
      $region57: #{model_forward.1} parent=11 // pred_check
        %p684 = pneg %p337
      $region58: #{model_forward.1} parent=11 // pred_check_branch
        %686 = sbr.rel (%p684) target = $region60
      $region59: #{model_forward.1} parent=11 // pred_region
        _
      $region60: #{model_forward.1} parent=11 // pred_fallthru
        _
      // Predicated region
      $region61: #{model_forward.1} parent=11 // pred_check
        %p687 = pneg %p358
      $region62: #{model_forward.1} parent=11 // pred_check_branch
        %689 = sbr.rel (%p687) target = $region64
      $region63: #{model_forward.1} parent=11 // pred_region
        _
      $region64: #{model_forward.1} parent=11 // pred_fallthru
        _
      // Predicated region
      $region65: #{model_forward.1} parent=11 // pred_check
        %p690 = pneg %p379
      $region66: #{model_forward.1} parent=11 // pred_check_branch
        %692 = sbr.rel (%p690) target = $region68
      $region67: #{model_forward.1} parent=11 // pred_region
        _
      $region68: #{model_forward.1} parent=11 // pred_fallthru
        _
      // Predicated region
      $region69: #{model_forward.1} parent=11 // pred_check
        %p693 = pneg %p400
      $region70: #{model_forward.1} parent=11 // pred_check_branch
        %695 = sbr.rel (%p693) target = $region72
      $region71: #{model_forward.1} parent=11 // pred_region
        _
      $region72: #{model_forward.1} parent=11 // pred_fallthru
        _
      // Predicated region
      $region73: #{model_forward.1} parent=11 // pred_check
        %p696 = pneg %p421
      $region74: #{model_forward.1} parent=11 // pred_check_branch
        %698 = sbr.rel (%p696) target = $region76
      $region75: #{model_forward.1} parent=11 // pred_region
        _
      $region76: #{model_forward.1} parent=11 // pred_fallthru
        _
      // Predicated region
      $region77: #{model_forward.1} parent=11 // pred_check
        %p699 = pneg %p442
      $region78: #{model_forward.1} parent=11 // pred_check_branch
        %701 = sbr.rel (%p699) target = $region80
      $region79: #{model_forward.1} parent=11 // pred_region
        _
      $region80: #{model_forward.1} parent=11 // pred_fallthru
        _
      // Predicated region
      $region81: #{model_forward.1} parent=11 // pred_check
        %p702 = pneg %p463
      $region82: #{model_forward.1} parent=11 // pred_check_branch
        %704 = sbr.rel (%p702) target = $region84
      $region83: #{model_forward.1} parent=11 // pred_region
        _
      $region84: #{model_forward.1} parent=11 // pred_fallthru
        _
      // Predicated region
      $region85: #{model_forward.1} parent=11 // pred_check
        %p705 = pneg %p484
      $region86: #{model_forward.1} parent=11 // pred_check_branch
        %707 = sbr.rel (%p705) target = $region88
      $region87: #{model_forward.1} parent=11 // pred_region
        _
      $region88: #{model_forward.1} parent=11 // pred_fallthru
        _
      // Predicated region
      $region89: #{model_forward.1} parent=11 // pred_check
        %p708 = pneg %p505
      $region90: #{model_forward.1} parent=11 // pred_check_branch
        %710 = sbr.rel (%p708) target = $region92
      $region91: #{model_forward.1} parent=11 // pred_region
        _
      $region92: #{model_forward.1} parent=11 // pred_fallthru
        _
      // Predicated region
      $region93: #{model_forward.1} parent=11 // pred_check
        %p711 = pneg %p526
      $region94: #{model_forward.1} parent=11 // pred_check_branch
        %713 = sbr.rel (%p711) target = $region96
      $region95: #{model_forward.1} parent=11 // pred_region
        _
      $region96: #{model_forward.1} parent=11 // pred_fallthru
        _
      // Predicated region
      $region97: #{model_forward.1} parent=11 // pred_check
        %p714 = pneg %p547
      $region98: #{model_forward.1} parent=11 // pred_check_branch
        %716 = sbr.rel (%p714) target = $region100
      $region99: #{model_forward.1} parent=11 // pred_region
        _
      $region100: #{model_forward.1} parent=11 // pred_fallthru
        _
      // Predicated region
      $region101: #{model_forward.1} parent=11 // pred_check
        %p717 = pneg %p568
      $region102: #{model_forward.1} parent=11 // pred_check_branch
        %719 = sbr.rel (%p717) target = $region104
      $region103: #{model_forward.1} parent=11 // pred_region
        _
      $region104: #{model_forward.1} parent=11 // pred_fallthru
        _
      // Predicated region
      $region105: #{model_forward.1} parent=11 // pred_check
        %p720 = pneg %p589
      $region106: #{model_forward.1} parent=11 // pred_check_branch
        %722 = sbr.rel (%p720) target = $region108
      $region107: #{model_forward.1} parent=11 // pred_region
        _
      $region108: #{model_forward.1} parent=11 // pred_fallthru
        _
      // Predicated region
      $region109: #{model_forward.1} parent=11 // pred_check
        %p723 = pneg %p610
      $region110: #{model_forward.1} parent=11 // pred_check_branch
        %725 = sbr.rel (%p723) target = $region112
      $region111: #{model_forward.1} parent=11 // pred_region
        _
      $region112: #{model_forward.1} parent=11 // pred_fallthru
        _
    $region12: #{model_forward.1} parent=5 // pred_fallthru
      _
    %p726 = scmp.lt.s32.totalorder %s33, 2
    // Predicated region
    $region113: #{model_forward.1} parent=5 // pred_check
      %p727 = pneg %p726
    $region114: #{model_forward.1} parent=5 // pred_check_branch
      %729 = sbr.rel (%p727) target = $region116
    $region115: #{model_forward.1} parent=5 // pred_region
      // Predicated region
      $region117: #{model_forward.1} parent=115 // pred_check
        %p730 = pneg %p53
      $region118: #{model_forward.1} parent=115 // pred_check_branch
        %732 = sbr.rel (%p730) target = $region120
      $region119: #{model_forward.1} parent=115 // pred_region
        %p733 = scmp.lt.s32.totalorder %s33, 1
        %s734 = scalar_select %p733, %s33, 1
        %s735 = smul.addr %s734, 4
        %s736 = smul.addr %s735, 8
        %s737 = scalar_lea.vmem %s0, %s736
      $region120: #{model_forward.1} parent=115 // pred_fallthru
        _
      // Predicated region
      $region121: #{model_forward.1} parent=115 // pred_check
        %p738 = pneg %p79
      $region122: #{model_forward.1} parent=115 // pred_check_branch
        %740 = sbr.rel (%p738) target = $region124
      $region123: #{model_forward.1} parent=115 // pred_region
        %p741 = scmp.lt.s32.totalorder %s33, 1
        %s742 = scalar_select %p741, %s33, 1
        %s743 = smul.addr %s742, 2
        %s744 = smul.addr %s743, 8
        %s745 = scalar_lea.vmem %s1, %s744
      $region124: #{model_forward.1} parent=115 // pred_fallthru
        _
    $region116: #{model_forward.1} parent=5 // pred_fallthru
      _
    %p746 = scmp.le.s32.totalorder 1, %s33
    %p747 = scmp.lt.s32.totalorder %s33, 3
    %p748 = pnand %p746, %p747
    %p749 = pneg %p748
    // Predicated region
    $region125: #{model_forward.1} parent=5 // pred_check
      _
    $region126: #{model_forward.1} parent=5 // pred_check_branch
      %751 = sbr.rel (%p748) target = $region128
    $region127: #{model_forward.1} parent=5 // pred_region
      %s752 = ssub.s32 %s33, 1
      %p753 = scmp.lt.s32.totalorder %s38, 1
      %s754 = scalar_select %p753, %s38, 1
      %s755 = smul.addr %s754, 4
      %s756 = smul.addr %s755, 8
      %s757 = scalar_lea.vmem %s0, %s756
      %p758 = pneg %p59
      %p759 = pneg %p56
      %p760 = scmp.lt.s32.totalorder %s38, 1
      %s761 = scalar_select %p760, %s38, 1
      %s762 = smul.addr %s761, 2
      %s763 = smul.addr %s762, 8
      %s764 = scalar_lea.vmem %s1, %s763
      %p765 = pneg %p85
      %p766 = pneg %p82
      %p767 = pneg %p106
      %p768 = pneg %p103
      %p769 = pneg %p127
      %p770 = pneg %p124
      %p771 = pneg %p148
      %p772 = pneg %p145
      %p773 = pneg %p169
      %p774 = pneg %p166
      %p775 = pneg %p190
      %p776 = pneg %p187
      %p777 = pneg %p211
      %p778 = pneg %p208
      %p779 = pneg %p232
      %p780 = pneg %p229
      %p781 = pneg %p253
      %p782 = pneg %p250
      %p783 = pneg %p274
      %p784 = pneg %p271
      %p785 = pneg %p295
      %p786 = pneg %p292
      %p787 = pneg %p316
      %p788 = pneg %p313
      %p789 = pneg %p337
      %p790 = pneg %p334
      %p791 = pneg %p358
      %p792 = pneg %p355
      %p793 = pneg %p379
      %p794 = pneg %p376
      %p795 = pneg %p400
      %p796 = pneg %p397
      %p797 = pneg %p421
      %p798 = pneg %p418
      %p799 = pneg %p442
      %p800 = pneg %p439
      %p801 = pneg %p463
      %p802 = pneg %p460
      %p803 = pneg %p484
      %p804 = pneg %p481
      %p805 = pneg %p505
      %p806 = pneg %p502
      %p807 = pneg %p526
      %p808 = pneg %p523
      %p809 = pneg %p547
      %p810 = pneg %p544
      %p811 = pneg %p568
      %p812 = pneg %p565
      %p813 = pneg %p589
      %p814 = pneg %p586
      %p815 = pneg %p610
      %p816 = pneg %p607
      %p817 = pneg %p636
      %p818 = pneg %p633
      %p819 = scmp.lt.s32.totalorder %s38, 1
      %s820 = scalar_select %p819, %s38, 1
      %s821 = smul.addr %s820, 2
      %s822 = scalar_lea.vmem %s27, %s821
      %p823 = scmp.lt.s32.totalorder %s38, 1
      %s824 = scalar_select %p823, %s38, 1
      %s825 = smul.addr %s824, 4
      %s826 = smul.addr %s825, 8
      %s827 = scalar_lea.vmem %s0, %s826
      %p828 = scmp.lt.s32.totalorder %s38, 1
      %s829 = scalar_select %p828, %s38, 1
      %s830 = smul.addr %s829, 2
      %s831 = smul.addr %s830, 8
      %s832 = scalar_lea.vmem %s1, %s831
      %p833 = scmp.lt.s32.totalorder %s38, 1
      %s834 = scalar_select %p833, %s38, 1
      %s835 = smul.addr %s834, 2
      %s836 = scalar_lea.vmem %s27, %s835
      %v838 = vld [vmem:[%s827] sm:$0xff]
      %v839 = vld [vmem:[%s827 + $0x8] sm:$0xff]
      %v840 = vld [vmem:[%s827 + $0x10] sm:$0xff]
      %v841 = vld [vmem:[%s827 + $0x18] sm:$0xff]
      %v842 = vld [vmem:[%s832] sm:$0xff]
      %v843 = vld [vmem:[%s832 + $0x8] sm:$0xff]
      %v844 = vld [vmem:[%s2] sm:$0xff]
      %v845 = vld [vmem:[%s2 + $0x8] sm:$0xff]
      %v846 = vld [vmem:[%s3] sm:$0xff]
      %v847 = vld [vmem:[%s3 + $0x8] sm:$0xff]
      %vm848 = vcmask 261120
      %v849 = vsel %vm848, %v846, 0.0
      %850 = vadd.xlane.f32.xlu0 %v849
      %v851 = vpop.xlane.xlu0 %850
      %v852 = vsel %vm848, %v847, 0.0
      %853 = vadd.xlane.f32.xlu0 %v852
      %v854 = vpop.xlane.xlu0 %853
      %v855 = vrcp.pop 32.0
      %v856 = vmul.f32 %v851, %v855
      %v857 = vmul.f32 %v854, %v855
      %v858 = vsub.f32 %v846, %v856
      %v859 = vsub.f32 %v847, %v857
      %v860 = vmul.f32 %v858, %v858
      %v861 = vmul.f32 %v859, %v859
      %v862 = vsel %vm848, %v860, 0.0
      %863 = vadd.xlane.f32.xlu0 %v862
      %v864 = vpop.xlane.xlu0 %863
      %v865 = vsel %vm848, %v861, 0.0
      %866 = vadd.xlane.f32.xlu0 %v865
      %v867 = vpop.xlane.xlu0 %866
      %v868 = vmul.f32 %v864, %v855
      %v869 = vmul.f32 %v867, %v855
      %v870 = vadd.f32 %v868, 1e-05
      %v871 = vadd.f32 %v869, 1e-05
      %v872 = vrsqrt.pop %v870
      %v873 = vrsqrt.pop %v871
      %v874 = vmul.f32 %v858, %v872
      %v875 = vmul.f32 %v859, %v873
      %v876 = vld [vmem:[%s5] sm:$0x1]
      %v878 = vlaneseq
      %v879 = vshrl.u32 %v878, 7
      %v880 = vsub.s32 0, %v879
      %v881 = vrot.slane %v876, %v880
      %v883 = vmul.f32 %v874, %v881
      %v884 = vmul.f32 %v875, %v881
      %v885 = vld [vmem:[%s6] sm:$0x1]
      %v887 = vlaneseq
      %v888 = vshrl.u32 %v887, 7
      %v889 = vsub.s32 0, %v888
      %v890 = vrot.slane %v885, %v889
      %v892 = vadd.f32 %v883, %v890
      %v893 = vadd.f32 %v884, %v890
      %v894 = vpack.c.bf16 %v893, %v892
      %v895 = vsel %vm848, %v838, 0.0
      %896 = vadd.xlane.f32.xlu0 %v895
      %v897 = vpop.xlane.xlu0 %896
      %v898 = vsel %vm848, %v839, 0.0
      %899 = vadd.xlane.f32.xlu0 %v898
      %v900 = vpop.xlane.xlu0 %899
      %v901 = vsel %vm848, %v840, 0.0
      %902 = vadd.xlane.f32.xlu0 %v901
      %v903 = vpop.xlane.xlu0 %902
      %v904 = vsel %vm848, %v841, 0.0
      %905 = vadd.xlane.f32.xlu0 %v904
      %v906 = vpop.xlane.xlu0 %905
      %v907 = vmul.f32 %v897, %v855
      %v908 = vmul.f32 %v900, %v855
      %v909 = vmul.f32 %v903, %v855
      %v910 = vmul.f32 %v906, %v855
      %v911 = vsub.f32 %v838, %v907
      %v912 = vsub.f32 %v839, %v908
      %v913 = vsub.f32 %v840, %v909
      %v914 = vsub.f32 %v841, %v910
      %v915 = vmul.f32 %v911, %v911
      %v916 = vmul.f32 %v912, %v912
      %v917 = vmul.f32 %v913, %v913
      %v918 = vmul.f32 %v914, %v914
      %v919 = vsel %vm848, %v915, 0.0
      %920 = vadd.xlane.f32.xlu0 %v919
      %v921 = vpop.xlane.xlu0 %920
      %v922 = vsel %vm848, %v916, 0.0
      %923 = vadd.xlane.f32.xlu0 %v922
      %v924 = vpop.xlane.xlu0 %923
      %v925 = vsel %vm848, %v917, 0.0
      %926 = vadd.xlane.f32.xlu0 %v925
      %v927 = vpop.xlane.xlu0 %926
      %v928 = vsel %vm848, %v918, 0.0
      %929 = vadd.xlane.f32.xlu0 %v928
      %v930 = vpop.xlane.xlu0 %929
      %v931 = vmul.f32 %v921, %v855
      %v932 = vmul.f32 %v924, %v855
      %v933 = vmul.f32 %v927, %v855
      %v934 = vmul.f32 %v930, %v855
      %v935 = vadd.f32 %v931, 1e-05
      %v936 = vadd.f32 %v932, 1e-05
      %v937 = vadd.f32 %v933, 1e-05
      %v938 = vadd.f32 %v934, 1e-05
      %v939 = vrsqrt.pop %v935
      %v940 = vrsqrt.pop %v936
      %v941 = vrsqrt.pop %v937
      %v942 = vrsqrt.pop %v938
      %v943 = vmul.f32 %v911, %v939
      %v944 = vmul.f32 %v912, %v940
      %v945 = vmul.f32 %v913, %v941
      %v946 = vmul.f32 %v914, %v942
      %v947 = vld [vmem:[%s7] sm:$0x1]
      %v949 = vlaneseq
      %v950 = vshrl.u32 %v949, 7
      %v951 = vsub.s32 0, %v950
      %v952 = vrot.slane %v947, %v951
      %v954 = vmul.f32 %v943, %v952
      %v955 = vmul.f32 %v944, %v952
      %v956 = vmul.f32 %v945, %v952
      %v957 = vmul.f32 %v946, %v952
      %v958 = vld [vmem:[%s8] sm:$0x1]
      %v960 = vlaneseq
      %v961 = vshrl.u32 %v960, 7
      %v962 = vsub.s32 0, %v961
      %v963 = vrot.slane %v958, %v962
      %v965 = vadd.f32 %v954, %v963
      %v966 = vadd.f32 %v955, %v963
      %v967 = vadd.f32 %v956, %v963
      %v968 = vadd.f32 %v957, %v963
      %v969 = vpack.c.bf16 %v966, %v965
      %v970 = vpack.c.bf16 %v968, %v967
      %v971 = vld [vmem:[%s11] sm:$0xf]
      %v972 = vld [vmem:[%s11 + $0x4] sm:$0xf]
      %v973 = vld [vmem:[%s11 + $0x8] sm:$0xf]
      %v974 = vld [vmem:[%s11 + $0xc] sm:$0xf]
      %v979 = vunpack.c.l.b16 %v971
      %v980 = vunpack.c.l.b16 %v972
      %v981 = vunpack.c.l.b16 %v973
      %v982 = vunpack.c.l.b16 %v974
      %v983 = vpack.c.b16 %v980, %v979
      %v984 = vpack.c.b16 %v982, %v981
      %v988 = vsel %vm848, %v894, 0
      %990 = vmatprep.subr.bf16.mxu0 0
      %991 = vmatpush1.bf16.msra.mxu0 %v983
      %992 = vmatprep.subr.bf16.mxu0 0
      %993 = vmatpush1.bf16.msra.mxu0 %v984
      %994 = vmatprep.subr.bf16.mxu0 0
      %995 = vmatpush1.bf16.msra.mxu0 0
      %996 = vmatprep.subr.bf16.mxu0 0
      %997 = vmatpush1.bf16.msra.mxu0 0
      %998 = vmatprep.subr.bf16.mxu0 0
      %999 = vmatpush1.bf16.msra.mxu0 0
      %1000 = vmatprep.subr.bf16.mxu0 0
      %1001 = vmatpush1.bf16.msra.mxu0 0
      %1002 = vmatprep.subr.bf16.mxu0 0
      %1003 = vmatpush1.bf16.msra.mxu0 0
      %1004 = vmatprep.subr.bf16.mxu0 0
      %1005 = vmatpush1.bf16.msra.mxu0 0
      %1006 = vmatprep.subr.bf16.mxu0 0
      %1007 = vmatpush1.bf16.msra.mxu0 0
      %1008 = vmatprep.subr.bf16.mxu0 0
      %1009 = vmatpush1.bf16.msra.mxu0 0
      %1010 = vmatprep.subr.bf16.mxu0 0
      %1011 = vmatpush1.bf16.msra.mxu0 0
      %1012 = vmatprep.subr.bf16.mxu0 0
      %1013 = vmatpush1.bf16.msra.mxu0 0
      %1014 = vmatprep.subr.bf16.mxu0 0
      %1015 = vmatpush1.bf16.msra.mxu0 0
      %1016 = vmatprep.subr.bf16.mxu0 0
      %1017 = vmatpush1.bf16.msra.mxu0 0
      %1018 = vmatprep.subr.bf16.mxu0 0
      %1019 = vmatpush1.bf16.msra.mxu0 0
      %1020 = vmatprep.subr.bf16.mxu0 0
      %1021 = vmatpush1.bf16.msra.mxu0 0
      %1022 = vmatprep.mubr.bf16.mxu0 0
      %1023 = vmatmul.mubr.bf16.gmra.mrb[0].mxu0 %v988
      %v1024 = vpop.f32.mrb[0].mxu0
      %v1025 = vadd.f32 0.0, %v1024
      %v1026 = vpop.f32.mrb[0].mxu0
      %v1027 = vpop.f32.mrb[0].mxu0
      %v1028 = vadd.f32 0.0, %v1027
      %v1029 = vpop.f32.mrb[0].mxu0
      %1030 = vdwg.mxu0
      %v1031 = vld [vmem:[%s12] sm:$0xf]
      %v1032 = vld [vmem:[%s12 + $0x4] sm:$0xf]
      %v1033 = vld [vmem:[%s12 + $0x8] sm:$0xf]
      %v1034 = vld [vmem:[%s12 + $0xc] sm:$0xf]
      %v1039 = vunpack.c.l.b16 %v1031
      %v1040 = vunpack.c.l.b16 %v1032
      %v1041 = vunpack.c.l.b16 %v1033
      %v1042 = vunpack.c.l.b16 %v1034
      %v1043 = vpack.c.b16 %v1040, %v1039
      %v1044 = vpack.c.b16 %v1042, %v1041
      %v1048 = vsel %vm848, %v969, 0
      %v1051 = vsel %vm848, %v970, 0
      %1053 = vmatprep.subr.bf16.mxu0 0
      %1054 = vmatpush1.bf16.msra.mxu0 %v1043
      %1055 = vmatprep.subr.bf16.mxu0 0
      %1056 = vmatpush1.bf16.msra.mxu0 %v1044
      %1057 = vmatprep.subr.bf16.mxu0 0
      %1058 = vmatpush1.bf16.msra.mxu0 0
      %1059 = vmatprep.subr.bf16.mxu0 0
      %1060 = vmatpush1.bf16.msra.mxu0 0
      %1061 = vmatprep.subr.bf16.mxu0 0
      %1062 = vmatpush1.bf16.msra.mxu0 0
      %1063 = vmatprep.subr.bf16.mxu0 0
      %1064 = vmatpush1.bf16.msra.mxu0 0
      %1065 = vmatprep.subr.bf16.mxu0 0
      %1066 = vmatpush1.bf16.msra.mxu0 0
      %1067 = vmatprep.subr.bf16.mxu0 0
      %1068 = vmatpush1.bf16.msra.mxu0 0
      %1069 = vmatprep.subr.bf16.mxu0 0
      %1070 = vmatpush1.bf16.msra.mxu0 0
      %1071 = vmatprep.subr.bf16.mxu0 0
      %1072 = vmatpush1.bf16.msra.mxu0 0
      %1073 = vmatprep.subr.bf16.mxu0 0
      %1074 = vmatpush1.bf16.msra.mxu0 0
      %1075 = vmatprep.subr.bf16.mxu0 0
      %1076 = vmatpush1.bf16.msra.mxu0 0
      %1077 = vmatprep.subr.bf16.mxu0 0
      %1078 = vmatpush1.bf16.msra.mxu0 0
      %1079 = vmatprep.subr.bf16.mxu0 0
      %1080 = vmatpush1.bf16.msra.mxu0 0
      %1081 = vmatprep.subr.bf16.mxu0 0
      %1082 = vmatpush1.bf16.msra.mxu0 0
      %1083 = vmatprep.subr.bf16.mxu0 0
      %1084 = vmatpush1.bf16.msra.mxu0 0
      %1085 = vmatprep.mubr.bf16.mxu0 0
      %1086 = vmatmul.mubr.bf16.gmra.mrb[0].mxu0 %v1048
      %v1087 = vpop.f32.mrb[0].mxu0
      %v1088 = vadd.f32 0.0, %v1087
      %v1089 = vpop.f32.mrb[0].mxu0
      %v1090 = vpop.f32.mrb[0].mxu0
      %v1091 = vadd.f32 0.0, %v1090
      %v1092 = vpop.f32.mrb[0].mxu0
      %1093 = vmatprep.mubr.bf16.mxu0 0
      %1094 = vmatmul.mubr.bf16.gmra.mrb[0].mxu0 %v1051
      %v1095 = vpop.f32.mrb[0].mxu0
      %v1096 = vadd.f32 0.0, %v1095
      %v1097 = vpop.f32.mrb[0].mxu0
      %v1098 = vpop.f32.mrb[0].mxu0
      %v1099 = vadd.f32 0.0, %v1098
      %v1100 = vpop.f32.mrb[0].mxu0
      %1101 = vdwg.mxu0
      %v1102 = vpack.c.bf16 %v1028, %v1025
      %v1103 = vpack.c.bf16 %v1091, %v1088
      %v1104 = vpack.c.bf16 %v1099, %v1096
      %vm1105 = vcmask 64512
      %v1107 = vsel %vm1105, %v1102, 0
      %v1110 = vsel %vm1105, %v1103, 0
      %v1113 = vsel %vm1105, %v1104, 0
      %1115 = vmatprep.subr.bf16.mxu0 0
      %1116 = vmatpush1.bf16.xpose.msra.mxu0 %v1110
      %1117 = vmatprep.subr.bf16.mxu0 0
      %1118 = vmatpush1.bf16.xpose.msra.mxu0 %v1113
      %1119 = vmatprep.subr.bf16.mxu0 0
      %1120 = vmatpush1.bf16.xpose.msra.mxu0 0
      %1121 = vmatprep.subr.bf16.mxu0 0
      %1122 = vmatpush1.bf16.xpose.msra.mxu0 0
      %1123 = vmatprep.subr.bf16.mxu0 0
      %1124 = vmatpush1.bf16.xpose.msra.mxu0 0
      %1125 = vmatprep.subr.bf16.mxu0 0
      %1126 = vmatpush1.bf16.xpose.msra.mxu0 0
      %1127 = vmatprep.subr.bf16.mxu0 0
      %1128 = vmatpush1.bf16.xpose.msra.mxu0 0
      %1129 = vmatprep.subr.bf16.mxu0 0
      %1130 = vmatpush1.bf16.xpose.msra.mxu0 0
      %1131 = vmatprep.subr.bf16.mxu0 0
      %1132 = vmatpush1.bf16.xpose.msra.mxu0 0
      %1133 = vmatprep.subr.bf16.mxu0 0
      %1134 = vmatpush1.bf16.xpose.msra.mxu0 0
      %1135 = vmatprep.subr.bf16.mxu0 0
      %1136 = vmatpush1.bf16.xpose.msra.mxu0 0
      %1137 = vmatprep.subr.bf16.mxu0 0
      %1138 = vmatpush1.bf16.xpose.msra.mxu0 0
      %1139 = vmatprep.subr.bf16.mxu0 0
      %1140 = vmatpush1.bf16.xpose.msra.mxu0 0
      %1141 = vmatprep.subr.bf16.mxu0 0
      %1142 = vmatpush1.bf16.xpose.msra.mxu0 0
      %1143 = vmatprep.subr.bf16.mxu0 0
      %1144 = vmatpush1.bf16.xpose.msra.mxu0 0
      %1145 = vmatprep.subr.bf16.mxu0 0
      %1146 = vmatpush1.bf16.xpose.msra.mxu0 0
      %1147 = vmatprep.mubr.bf16.mxu0 0
      %1148 = vmatmul.mubr.bf16.gmra.mrb[0].mxu0 %v1107
      %v1149 = vpop.f32.mrb[0].mxu0
      %v1150 = vadd.f32 0.0, %v1149
      %v1151 = vpop.f32.mrb[0].mxu0
      %v1152 = vpop.f32.mrb[0].mxu0
      %v1153 = vadd.f32 0.0, %v1152
      %v1154 = vpop.f32.mrb[0].mxu0
      %1155 = vdwg.mxu0
      %v1156 = vmul.f32 %v1150, 0.35355338
      %v1157 = vmul.f32 %v1153, 0.35355338
      %v1158 = vadd.f32 %v1156, %v842
      %v1159 = vadd.f32 %v1157, %v843
      %v1160 = vsel %vm848, %v1158, -inf
      %1161 = vmax.xlane.f32.xlu0 %v1160
      %v1162 = vpop.xlane.xlu0 %1161
      %v1163 = vsel %vm848, %v1159, -inf
      %1164 = vmax.xlane.f32.xlu0 %v1163
      %v1165 = vpop.xlane.xlu0 %1164
      %v1166 = vsub.f32 %v1158, %v1162
      %v1167 = vsub.f32 %v1159, %v1165
      %v1168 = vmul.f32 %v1166, 1.442695
      %v1169 = vpow.pop %v1168
      %v1170 = vmul.f32 %v1167, 1.442695
      %v1171 = vpow.pop %v1170
      %v1172 = vsel %vm848, %v1169, 0.0
      %1173 = vadd.xlane.f32.xlu0 %v1172
      %v1174 = vpop.xlane.xlu0 %1173
      %v1175 = vsel %vm848, %v1171, 0.0
      %1176 = vadd.xlane.f32.xlu0 %v1175
      %v1177 = vpop.xlane.xlu0 %1176
      %v1178 = vrcp.pop %v1174
      %v1179 = vrcp.pop %v1177
      %v1180 = vmul.f32 %v1169, %v1178
      %v1181 = vmul.f32 %v1171, %v1179
      %v1182 = vpack.c.bf16 %v1181, %v1180
      %1185 = vrot.lane.b32.xlu0 %v1103, 96
      %v1186 = vpop.permute.xlu0 %1185
      %1187 = vrot.lane.b32.xlu0 %v1104, 96
      %v1188 = vpop.permute.xlu0 %1187
      %v1192 = vsel %vm848, %v1182, 0
      %1194 = vmatprep.subr.bf16.mxu0 0
      %1195 = vmatpush1.bf16.msra.mxu0 %v1186
      %1196 = vmatprep.subr.bf16.mxu0 0
      %1197 = vmatpush1.bf16.msra.mxu0 %v1188
      %1198 = vmatprep.subr.bf16.mxu0 0
      %1199 = vmatpush1.bf16.msra.mxu0 0
      %1200 = vmatprep.subr.bf16.mxu0 0
      %1201 = vmatpush1.bf16.msra.mxu0 0
      %1202 = vmatprep.subr.bf16.mxu0 0
      %1203 = vmatpush1.bf16.msra.mxu0 0
      %1204 = vmatprep.subr.bf16.mxu0 0
      %1205 = vmatpush1.bf16.msra.mxu0 0
      %1206 = vmatprep.subr.bf16.mxu0 0
      %1207 = vmatpush1.bf16.msra.mxu0 0
      %1208 = vmatprep.subr.bf16.mxu0 0
      %1209 = vmatpush1.bf16.msra.mxu0 0
      %1210 = vmatprep.subr.bf16.mxu0 0
      %1211 = vmatpush1.bf16.msra.mxu0 0
      %1212 = vmatprep.subr.bf16.mxu0 0
      %1213 = vmatpush1.bf16.msra.mxu0 0
      %1214 = vmatprep.subr.bf16.mxu0 0
      %1215 = vmatpush1.bf16.msra.mxu0 0
      %1216 = vmatprep.subr.bf16.mxu0 0
      %1217 = vmatpush1.bf16.msra.mxu0 0
      %1218 = vmatprep.subr.bf16.mxu0 0
      %1219 = vmatpush1.bf16.msra.mxu0 0
      %1220 = vmatprep.subr.bf16.mxu0 0
      %1221 = vmatpush1.bf16.msra.mxu0 0
      %1222 = vmatprep.subr.bf16.mxu0 0
      %1223 = vmatpush1.bf16.msra.mxu0 0
      %1224 = vmatprep.subr.bf16.mxu0 0
      %1225 = vmatpush1.bf16.msra.mxu0 0
      %1226 = vmatprep.mubr.bf16.mxu0 0
      %1227 = vmatmul.mubr.bf16.gmra.mrb[0].mxu0 %v1192
      %v1228 = vpop.f32.mrb[0].mxu0
      %v1229 = vadd.f32 0.0, %v1228
      %v1230 = vpop.f32.mrb[0].mxu0
      %v1231 = vpop.f32.mrb[0].mxu0
      %v1232 = vadd.f32 0.0, %v1231
      %v1233 = vpop.f32.mrb[0].mxu0
      %1234 = vdwg.mxu0
      %1235 = vst.msk [vmem:[#allocation2] sm:$0xff] %vm1105, %v1229
      %1236 = vst.msk [vmem:[#allocation2 + $0x8] sm:$0xff] %vm1105, %v1232
      %1238 = vrot.lane.b32.xlu0 %v1102, 120
      %v1239 = vpop.permute.xlu0 %1238
      %1240 = vrot.lane.b32.xlu0 %v1103, 120
      %v1241 = vpop.permute.xlu0 %1240
      %1242 = vrot.lane.b32.xlu0 %v1104, 120
      %v1243 = vpop.permute.xlu0 %1242
      %v1245 = vsel %vm1105, %v1239, 0
      %v1248 = vsel %vm1105, %v1241, 0
      %v1251 = vsel %vm1105, %v1243, 0
      %1253 = vmatprep.subr.bf16.mxu0 0
      %1254 = vmatpush1.bf16.xpose.msra.mxu0 %v1248
      %1255 = vmatprep.subr.bf16.mxu0 0
      %1256 = vmatpush1.bf16.xpose.msra.mxu0 %v1251
      %1257 = vmatprep.subr.bf16.mxu0 0
      %1258 = vmatpush1.bf16.xpose.msra.mxu0 0
      %1259 = vmatprep.subr.bf16.mxu0 0
      %1260 = vmatpush1.bf16.xpose.msra.mxu0 0
      %1261 = vmatprep.subr.bf16.mxu0 0
      %1262 = vmatpush1.bf16.xpose.msra.mxu0 0
      %1263 = vmatprep.subr.bf16.mxu0 0
      %1264 = vmatpush1.bf16.xpose.msra.mxu0 0
      %1265 = vmatprep.subr.bf16.mxu0 0
      %1266 = vmatpush1.bf16.xpose.msra.mxu0 0
      %1267 = vmatprep.subr.bf16.mxu0 0
      %1268 = vmatpush1.bf16.xpose.msra.mxu0 0
      %1269 = vmatprep.subr.bf16.mxu0 0
      %1270 = vmatpush1.bf16.xpose.msra.mxu0 0
      %1271 = vmatprep.subr.bf16.mxu0 0
      %1272 = vmatpush1.bf16.xpose.msra.mxu0 0
      %1273 = vmatprep.subr.bf16.mxu0 0
      %1274 = vmatpush1.bf16.xpose.msra.mxu0 0
      %1275 = vmatprep.subr.bf16.mxu0 0
      %1276 = vmatpush1.bf16.xpose.msra.mxu0 0
      %1277 = vmatprep.subr.bf16.mxu0 0
      %1278 = vmatpush1.bf16.xpose.msra.mxu0 0
      %1279 = vmatprep.subr.bf16.mxu0 0
      %1280 = vmatpush1.bf16.xpose.msra.mxu0 0
      %1281 = vmatprep.subr.bf16.mxu0 0
      %1282 = vmatpush1.bf16.xpose.msra.mxu0 0
      %1283 = vmatprep.subr.bf16.mxu0 0
      %1284 = vmatpush1.bf16.xpose.msra.mxu0 0
      %1285 = vmatprep.mubr.bf16.mxu0 0
      %1286 = vmatmul.mubr.bf16.gmra.mrb[0].mxu0 %v1245
      %v1287 = vpop.f32.mrb[0].mxu0
      %v1288 = vadd.f32 0.0, %v1287
      %v1289 = vpop.f32.mrb[0].mxu0
      %v1290 = vpop.f32.mrb[0].mxu0
      %v1291 = vadd.f32 0.0, %v1290
      %v1292 = vpop.f32.mrb[0].mxu0
      %1293 = vdwg.mxu0
      %v1294 = vmul.f32 %v1288, 0.35355338
      %v1295 = vmul.f32 %v1291, 0.35355338
      %v1296 = vadd.f32 %v1294, %v842
      %v1297 = vadd.f32 %v1295, %v843
      %v1298 = vsel %vm848, %v1296, -inf
      %1299 = vmax.xlane.f32.xlu0 %v1298
      %v1300 = vpop.xlane.xlu0 %1299
      %v1301 = vsel %vm848, %v1297, -inf
      %1302 = vmax.xlane.f32.xlu0 %v1301
      %v1303 = vpop.xlane.xlu0 %1302
      %v1304 = vsub.f32 %v1296, %v1300
      %v1305 = vsub.f32 %v1297, %v1303
      %v1306 = vmul.f32 %v1304, 1.442695
      %v1307 = vpow.pop %v1306
      %v1308 = vmul.f32 %v1305, 1.442695
      %v1309 = vpow.pop %v1308
      %v1310 = vsel %vm848, %v1307, 0.0
      %1311 = vadd.xlane.f32.xlu0 %v1310
      %v1312 = vpop.xlane.xlu0 %1311
      %v1313 = vsel %vm848, %v1309, 0.0
      %1314 = vadd.xlane.f32.xlu0 %v1313
      %v1315 = vpop.xlane.xlu0 %1314
      %v1316 = vrcp.pop %v1312
      %v1317 = vrcp.pop %v1315
      %v1318 = vmul.f32 %v1307, %v1316
      %v1319 = vmul.f32 %v1309, %v1317
      %v1320 = vpack.c.bf16 %v1319, %v1318
      %1321 = vrot.lane.b32.xlu0 %v1103, 88
      %v1322 = vpop.permute.xlu0 %1321
      %1323 = vrot.lane.b32.xlu0 %v1104, 88
      %v1324 = vpop.permute.xlu0 %1323
      %v1328 = vsel %vm848, %v1320, 0
      %1330 = vmatprep.subr.bf16.mxu0 0
      %1331 = vmatpush1.bf16.msra.mxu0 %v1322
      %1332 = vmatprep.subr.bf16.mxu0 0
      %1333 = vmatpush1.bf16.msra.mxu0 %v1324
      %1334 = vmatprep.subr.bf16.mxu0 0
      %1335 = vmatpush1.bf16.msra.mxu0 0
      %1336 = vmatprep.subr.bf16.mxu0 0
      %1337 = vmatpush1.bf16.msra.mxu0 0
      %1338 = vmatprep.subr.bf16.mxu0 0
      %1339 = vmatpush1.bf16.msra.mxu0 0
      %1340 = vmatprep.subr.bf16.mxu0 0
      %1341 = vmatpush1.bf16.msra.mxu0 0
      %1342 = vmatprep.subr.bf16.mxu0 0
      %1343 = vmatpush1.bf16.msra.mxu0 0
      %1344 = vmatprep.subr.bf16.mxu0 0
      %1345 = vmatpush1.bf16.msra.mxu0 0
      %1346 = vmatprep.subr.bf16.mxu0 0
      %1347 = vmatpush1.bf16.msra.mxu0 0
      %1348 = vmatprep.subr.bf16.mxu0 0
      %1349 = vmatpush1.bf16.msra.mxu0 0
      %1350 = vmatprep.subr.bf16.mxu0 0
      %1351 = vmatpush1.bf16.msra.mxu0 0
      %1352 = vmatprep.subr.bf16.mxu0 0
      %1353 = vmatpush1.bf16.msra.mxu0 0
      %1354 = vmatprep.subr.bf16.mxu0 0
      %1355 = vmatpush1.bf16.msra.mxu0 0
      %1356 = vmatprep.subr.bf16.mxu0 0
      %1357 = vmatpush1.bf16.msra.mxu0 0
      %1358 = vmatprep.subr.bf16.mxu0 0
      %1359 = vmatpush1.bf16.msra.mxu0 0
      %1360 = vmatprep.subr.bf16.mxu0 0
      %1361 = vmatpush1.bf16.msra.mxu0 0
      %1362 = vmatprep.mubr.bf16.mxu0 0
      %1363 = vmatmul.mubr.bf16.gmra.mrb[0].mxu0 %v1328
      %v1364 = vpop.f32.mrb[0].mxu0
      %v1365 = vadd.f32 0.0, %v1364
      %v1366 = vpop.f32.mrb[0].mxu0
      %v1367 = vpop.f32.mrb[0].mxu0
      %v1368 = vadd.f32 0.0, %v1367
      %v1369 = vpop.f32.mrb[0].mxu0
      %1370 = vdwg.mxu0
      %1373 = vrot.lane.b32.xlu0 %v1365, 8
      %v1374 = vpop.permute.xlu0 %1373
      %1375 = vrot.lane.b32.xlu0 %v1368, 8
      %v1376 = vpop.permute.xlu0 %1375
      %vm1379 = vcmask 130112
      %1380 = vst.msk [vmem:[#allocation2] sm:$0xff] %vm1379, %v1374
      %1381 = vst.msk [vmem:[#allocation2 + $0x8] sm:$0xff] %vm1379, %v1376
      %1382 = vrot.lane.b32.xlu0 %v1102, 112
      %v1383 = vpop.permute.xlu0 %1382
      %1384 = vrot.lane.b32.xlu0 %v1103, 112
      %v1385 = vpop.permute.xlu0 %1384
      %1386 = vrot.lane.b32.xlu0 %v1104, 112
      %v1387 = vpop.permute.xlu0 %1386
      %v1389 = vsel %vm1105, %v1383, 0
      %v1392 = vsel %vm1105, %v1385, 0
      %v1395 = vsel %vm1105, %v1387, 0
      %1397 = vmatprep.subr.bf16.mxu0 0
      %1398 = vmatpush1.bf16.xpose.msra.mxu0 %v1392
      %1399 = vmatprep.subr.bf16.mxu0 0
      %1400 = vmatpush1.bf16.xpose.msra.mxu0 %v1395
      %1401 = vmatprep.subr.bf16.mxu0 0
      %1402 = vmatpush1.bf16.xpose.msra.mxu0 0
      %1403 = vmatprep.subr.bf16.mxu0 0
      %1404 = vmatpush1.bf16.xpose.msra.mxu0 0
      %1405 = vmatprep.subr.bf16.mxu0 0
      %1406 = vmatpush1.bf16.xpose.msra.mxu0 0
      %1407 = vmatprep.subr.bf16.mxu0 0
      %1408 = vmatpush1.bf16.xpose.msra.mxu0 0
      %1409 = vmatprep.subr.bf16.mxu0 0
      %1410 = vmatpush1.bf16.xpose.msra.mxu0 0
      %1411 = vmatprep.subr.bf16.mxu0 0
      %1412 = vmatpush1.bf16.xpose.msra.mxu0 0
      %1413 = vmatprep.subr.bf16.mxu0 0
      %1414 = vmatpush1.bf16.xpose.msra.mxu0 0
      %1415 = vmatprep.subr.bf16.mxu0 0
      %1416 = vmatpush1.bf16.xpose.msra.mxu0 0
      %1417 = vmatprep.subr.bf16.mxu0 0
      %1418 = vmatpush1.bf16.xpose.msra.mxu0 0
      %1419 = vmatprep.subr.bf16.mxu0 0
      %1420 = vmatpush1.bf16.xpose.msra.mxu0 0
      %1421 = vmatprep.subr.bf16.mxu0 0
      %1422 = vmatpush1.bf16.xpose.msra.mxu0 0
      %1423 = vmatprep.subr.bf16.mxu0 0
      %1424 = vmatpush1.bf16.xpose.msra.mxu0 0
      %1425 = vmatprep.subr.bf16.mxu0 0
      %1426 = vmatpush1.bf16.xpose.msra.mxu0 0
      %1427 = vmatprep.subr.bf16.mxu0 0
      %1428 = vmatpush1.bf16.xpose.msra.mxu0 0
      %1429 = vmatprep.mubr.bf16.mxu0 0
      %1430 = vmatmul.mubr.bf16.gmra.mrb[0].mxu0 %v1389
      %v1431 = vpop.f32.mrb[0].mxu0
      %v1432 = vadd.f32 0.0, %v1431
      %v1433 = vpop.f32.mrb[0].mxu0
      %v1434 = vpop.f32.mrb[0].mxu0
      %v1435 = vadd.f32 0.0, %v1434
      %v1436 = vpop.f32.mrb[0].mxu0
      %1437 = vdwg.mxu0
      %v1438 = vmul.f32 %v1432, 0.35355338
      %v1439 = vmul.f32 %v1435, 0.35355338
      %v1440 = vadd.f32 %v1438, %v842
      %v1441 = vadd.f32 %v1439, %v843
      %v1442 = vsel %vm848, %v1440, -inf
      %1443 = vmax.xlane.f32.xlu0 %v1442
      %v1444 = vpop.xlane.xlu0 %1443
      %v1445 = vsel %vm848, %v1441, -inf
      %1446 = vmax.xlane.f32.xlu0 %v1445
      %v1447 = vpop.xlane.xlu0 %1446
      %v1448 = vsub.f32 %v1440, %v1444
      %v1449 = vsub.f32 %v1441, %v1447
      %v1450 = vmul.f32 %v1448, 1.442695
      %v1451 = vpow.pop %v1450
      %v1452 = vmul.f32 %v1449, 1.442695
      %v1453 = vpow.pop %v1452
      %v1454 = vsel %vm848, %v1451, 0.0
      %1455 = vadd.xlane.f32.xlu0 %v1454
      %v1456 = vpop.xlane.xlu0 %1455
      %v1457 = vsel %vm848, %v1453, 0.0
      %1458 = vadd.xlane.f32.xlu0 %v1457
      %v1459 = vpop.xlane.xlu0 %1458
      %v1460 = vrcp.pop %v1456
      %v1461 = vrcp.pop %v1459
      %v1462 = vmul.f32 %v1451, %v1460
      %v1463 = vmul.f32 %v1453, %v1461
      %v1464 = vpack.c.bf16 %v1463, %v1462
      %1465 = vrot.lane.b32.xlu0 %v1103, 80
      %v1466 = vpop.permute.xlu0 %1465
      %1467 = vrot.lane.b32.xlu0 %v1104, 80
      %v1468 = vpop.permute.xlu0 %1467
      %v1472 = vsel %vm848, %v1464, 0
      %1474 = vmatprep.subr.bf16.mxu0 0
      %1475 = vmatpush1.bf16.msra.mxu0 %v1466
      %1476 = vmatprep.subr.bf16.mxu0 0
      %1477 = vmatpush1.bf16.msra.mxu0 %v1468
      %1478 = vmatprep.subr.bf16.mxu0 0
      %1479 = vmatpush1.bf16.msra.mxu0 0
      %1480 = vmatprep.subr.bf16.mxu0 0
      %1481 = vmatpush1.bf16.msra.mxu0 0
      %1482 = vmatprep.subr.bf16.mxu0 0
      %1483 = vmatpush1.bf16.msra.mxu0 0
      %1484 = vmatprep.subr.bf16.mxu0 0
      %1485 = vmatpush1.bf16.msra.mxu0 0
      %1486 = vmatprep.subr.bf16.mxu0 0
      %1487 = vmatpush1.bf16.msra.mxu0 0
      %1488 = vmatprep.subr.bf16.mxu0 0
      %1489 = vmatpush1.bf16.msra.mxu0 0
      %1490 = vmatprep.subr.bf16.mxu0 0
      %1491 = vmatpush1.bf16.msra.mxu0 0
      %1492 = vmatprep.subr.bf16.mxu0 0
      %1493 = vmatpush1.bf16.msra.mxu0 0
      %1494 = vmatprep.subr.bf16.mxu0 0
      %1495 = vmatpush1.bf16.msra.mxu0 0
      %1496 = vmatprep.subr.bf16.mxu0 0
      %1497 = vmatpush1.bf16.msra.mxu0 0
      %1498 = vmatprep.subr.bf16.mxu0 0
      %1499 = vmatpush1.bf16.msra.mxu0 0
      %1500 = vmatprep.subr.bf16.mxu0 0
      %1501 = vmatpush1.bf16.msra.mxu0 0
      %1502 = vmatprep.subr.bf16.mxu0 0
      %1503 = vmatpush1.bf16.msra.mxu0 0
      %1504 = vmatprep.subr.bf16.mxu0 0
      %1505 = vmatpush1.bf16.msra.mxu0 0
      %1506 = vmatprep.mubr.bf16.mxu0 0
      %1507 = vmatmul.mubr.bf16.gmra.mrb[0].mxu0 %v1472
      %v1508 = vpop.f32.mrb[0].mxu0
      %v1509 = vadd.f32 0.0, %v1508
      %v1510 = vpop.f32.mrb[0].mxu0
      %v1511 = vpop.f32.mrb[0].mxu0
      %v1512 = vadd.f32 0.0, %v1511
      %v1513 = vpop.f32.mrb[0].mxu0
      %1514 = vdwg.mxu0
      %1517 = vrot.lane.b32.xlu0 %v1509, 16
      %v1518 = vpop.permute.xlu0 %1517
      %1519 = vrot.lane.b32.xlu0 %v1512, 16
      %v1520 = vpop.permute.xlu0 %1519
      %vm1523 = vcmask 195712
      %1524 = vst.msk [vmem:[#allocation2] sm:$0xff] %vm1523, %v1518
      %1525 = vst.msk [vmem:[#allocation2 + $0x8] sm:$0xff] %vm1523, %v1520
      %1526 = vrot.lane.b32.xlu0 %v1102, 104
      %v1527 = vpop.permute.xlu0 %1526
      %1528 = vrot.lane.b32.xlu0 %v1103, 104
      %v1529 = vpop.permute.xlu0 %1528
      %1530 = vrot.lane.b32.xlu0 %v1104, 104
      %v1531 = vpop.permute.xlu0 %1530
      %v1533 = vsel %vm1105, %v1527, 0
      %v1536 = vsel %vm1105, %v1529, 0
      %v1539 = vsel %vm1105, %v1531, 0
      %1541 = vmatprep.subr.bf16.mxu0 0
      %1542 = vmatpush1.bf16.xpose.msra.mxu0 %v1536
      %1543 = vmatprep.subr.bf16.mxu0 0
      %1544 = vmatpush1.bf16.xpose.msra.mxu0 %v1539
      %1545 = vmatprep.subr.bf16.mxu0 0
      %1546 = vmatpush1.bf16.xpose.msra.mxu0 0
      %1547 = vmatprep.subr.bf16.mxu0 0
      %1548 = vmatpush1.bf16.xpose.msra.mxu0 0
      %1549 = vmatprep.subr.bf16.mxu0 0
      %1550 = vmatpush1.bf16.xpose.msra.mxu0 0
      %1551 = vmatprep.subr.bf16.mxu0 0
      %1552 = vmatpush1.bf16.xpose.msra.mxu0 0
      %1553 = vmatprep.subr.bf16.mxu0 0
      %1554 = vmatpush1.bf16.xpose.msra.mxu0 0
      %1555 = vmatprep.subr.bf16.mxu0 0
      %1556 = vmatpush1.bf16.xpose.msra.mxu0 0
      %1557 = vmatprep.subr.bf16.mxu0 0
      %1558 = vmatpush1.bf16.xpose.msra.mxu0 0
      %1559 = vmatprep.subr.bf16.mxu0 0
      %1560 = vmatpush1.bf16.xpose.msra.mxu0 0
      %1561 = vmatprep.subr.bf16.mxu0 0
      %1562 = vmatpush1.bf16.xpose.msra.mxu0 0
      %1563 = vmatprep.subr.bf16.mxu0 0
      %1564 = vmatpush1.bf16.xpose.msra.mxu0 0
      %1565 = vmatprep.subr.bf16.mxu0 0
      %1566 = vmatpush1.bf16.xpose.msra.mxu0 0
      %1567 = vmatprep.subr.bf16.mxu0 0
      %1568 = vmatpush1.bf16.xpose.msra.mxu0 0
      %1569 = vmatprep.subr.bf16.mxu0 0
      %1570 = vmatpush1.bf16.xpose.msra.mxu0 0
      %1571 = vmatprep.subr.bf16.mxu0 0
      %1572 = vmatpush1.bf16.xpose.msra.mxu0 0
      %1573 = vmatprep.mubr.bf16.mxu0 0
      %1574 = vmatmul.mubr.bf16.gmra.mrb[0].mxu0 %v1533
      %v1575 = vpop.f32.mrb[0].mxu0
      %v1576 = vadd.f32 0.0, %v1575
      %v1577 = vpop.f32.mrb[0].mxu0
      %v1578 = vpop.f32.mrb[0].mxu0
      %v1579 = vadd.f32 0.0, %v1578
      %v1580 = vpop.f32.mrb[0].mxu0
      %1581 = vdwg.mxu0
      %v1582 = vmul.f32 %v1576, 0.35355338
      %v1583 = vmul.f32 %v1579, 0.35355338
      %v1584 = vadd.f32 %v1582, %v842
      %v1585 = vadd.f32 %v1583, %v843
      %v1586 = vsel %vm848, %v1584, -inf
      %1587 = vmax.xlane.f32.xlu0 %v1586
      %v1588 = vpop.xlane.xlu0 %1587
      %v1589 = vsel %vm848, %v1585, -inf
      %1590 = vmax.xlane.f32.xlu0 %v1589
      %v1591 = vpop.xlane.xlu0 %1590
      %v1592 = vsub.f32 %v1584, %v1588
      %v1593 = vsub.f32 %v1585, %v1591
      %v1594 = vmul.f32 %v1592, 1.442695
      %v1595 = vpow.pop %v1594
      %v1596 = vmul.f32 %v1593, 1.442695
      %v1597 = vpow.pop %v1596
      %v1598 = vsel %vm848, %v1595, 0.0
      %1599 = vadd.xlane.f32.xlu0 %v1598
      %v1600 = vpop.xlane.xlu0 %1599
      %v1601 = vsel %vm848, %v1597, 0.0
      %1602 = vadd.xlane.f32.xlu0 %v1601
      %v1603 = vpop.xlane.xlu0 %1602
      %v1604 = vrcp.pop %v1600
      %v1605 = vrcp.pop %v1603
      %v1606 = vmul.f32 %v1595, %v1604
      %v1607 = vmul.f32 %v1597, %v1605
      %v1608 = vpack.c.bf16 %v1607, %v1606
      %1609 = vrot.lane.b32.xlu0 %v1103, 72
      %v1610 = vpop.permute.xlu0 %1609
      %1611 = vrot.lane.b32.xlu0 %v1104, 72
      %v1612 = vpop.permute.xlu0 %1611
      %v1616 = vsel %vm848, %v1608, 0
      %1618 = vmatprep.subr.bf16.mxu0 0
      %1619 = vmatpush1.bf16.msra.mxu0 %v1610
      %1620 = vmatprep.subr.bf16.mxu0 0
      %1621 = vmatpush1.bf16.msra.mxu0 %v1612
      %1622 = vmatprep.subr.bf16.mxu0 0
      %1623 = vmatpush1.bf16.msra.mxu0 0
      %1624 = vmatprep.subr.bf16.mxu0 0
      %1625 = vmatpush1.bf16.msra.mxu0 0
      %1626 = vmatprep.subr.bf16.mxu0 0
      %1627 = vmatpush1.bf16.msra.mxu0 0
      %1628 = vmatprep.subr.bf16.mxu0 0
      %1629 = vmatpush1.bf16.msra.mxu0 0
      %1630 = vmatprep.subr.bf16.mxu0 0
      %1631 = vmatpush1.bf16.msra.mxu0 0
      %1632 = vmatprep.subr.bf16.mxu0 0
      %1633 = vmatpush1.bf16.msra.mxu0 0
      %1634 = vmatprep.subr.bf16.mxu0 0
      %1635 = vmatpush1.bf16.msra.mxu0 0
      %1636 = vmatprep.subr.bf16.mxu0 0
      %1637 = vmatpush1.bf16.msra.mxu0 0
      %1638 = vmatprep.subr.bf16.mxu0 0
      %1639 = vmatpush1.bf16.msra.mxu0 0
      %1640 = vmatprep.subr.bf16.mxu0 0
      %1641 = vmatpush1.bf16.msra.mxu0 0
      %1642 = vmatprep.subr.bf16.mxu0 0
      %1643 = vmatpush1.bf16.msra.mxu0 0
      %1644 = vmatprep.subr.bf16.mxu0 0
      %1645 = vmatpush1.bf16.msra.mxu0 0
      %1646 = vmatprep.subr.bf16.mxu0 0
      %1647 = vmatpush1.bf16.msra.mxu0 0
      %1648 = vmatprep.subr.bf16.mxu0 0
      %1649 = vmatpush1.bf16.msra.mxu0 0
      %1650 = vmatprep.mubr.bf16.mxu0 0
      %1651 = vmatmul.mubr.bf16.gmra.mrb[0].mxu0 %v1616
      %v1652 = vpop.f32.mrb[0].mxu0
      %v1653 = vadd.f32 0.0, %v1652
      %v1654 = vpop.f32.mrb[0].mxu0
      %v1655 = vpop.f32.mrb[0].mxu0
      %v1656 = vadd.f32 0.0, %v1655
      %v1657 = vpop.f32.mrb[0].mxu0
      %1658 = vdwg.mxu0
      %1661 = vrot.lane.b32.xlu0 %v1653, 24
      %v1662 = vpop.permute.xlu0 %1661
      %1663 = vrot.lane.b32.xlu0 %v1656, 24
      %v1664 = vpop.permute.xlu0 %1663
      %vm1667 = vcmask 261312
      %1668 = vst.msk [vmem:[#allocation2] sm:$0xff] %vm1667, %v1662
      %1669 = vst.msk [vmem:[#allocation2 + $0x8] sm:$0xff] %vm1667, %v1664
      %v1670 = vld [vmem:[#allocation2] sm:$0xff]
      %v1671 = vld [vmem:[#allocation2 + $0x8] sm:$0xff]
      %v1672 = vpack.c.bf16 %v1671, %v1670
      %v1673 = vld [vmem:[%s13] sm:$0xf]
      %v1674 = vld [vmem:[%s13 + $0x4] sm:$0xf]
      %v1675 = vld [vmem:[%s13 + $0x8] sm:$0xf]
      %v1676 = vld [vmem:[%s13 + $0xc] sm:$0xf]
      %v1681 = vunpack.c.l.b16 %v1673
      %v1682 = vunpack.c.l.b16 %v1674
      %v1683 = vunpack.c.l.b16 %v1675
      %v1684 = vunpack.c.l.b16 %v1676
      %v1685 = vpack.c.b16 %v1682, %v1681
      %v1686 = vpack.c.b16 %v1684, %v1683
      %v1690 = vsel %vm848, %v1672, 0
      %1692 = vmatprep.subr.bf16.mxu0 0
      %1693 = vmatpush1.bf16.msra.mxu0 %v1685
      %1694 = vmatprep.subr.bf16.mxu0 0
      %1695 = vmatpush1.bf16.msra.mxu0 %v1686
      %1696 = vmatprep.subr.bf16.mxu0 0
      %1697 = vmatpush1.bf16.msra.mxu0 0
      %1698 = vmatprep.subr.bf16.mxu0 0
      %1699 = vmatpush1.bf16.msra.mxu0 0
      %1700 = vmatprep.subr.bf16.mxu0 0
      %1701 = vmatpush1.bf16.msra.mxu0 0
      %1702 = vmatprep.subr.bf16.mxu0 0
      %1703 = vmatpush1.bf16.msra.mxu0 0
      %1704 = vmatprep.subr.bf16.mxu0 0
      %1705 = vmatpush1.bf16.msra.mxu0 0
      %1706 = vmatprep.subr.bf16.mxu0 0
      %1707 = vmatpush1.bf16.msra.mxu0 0
      %1708 = vmatprep.subr.bf16.mxu0 0
      %1709 = vmatpush1.bf16.msra.mxu0 0
      %1710 = vmatprep.subr.bf16.mxu0 0
      %1711 = vmatpush1.bf16.msra.mxu0 0
      %1712 = vmatprep.subr.bf16.mxu0 0
      %1713 = vmatpush1.bf16.msra.mxu0 0
      %1714 = vmatprep.subr.bf16.mxu0 0
      %1715 = vmatpush1.bf16.msra.mxu0 0
      %1716 = vmatprep.subr.bf16.mxu0 0
      %1717 = vmatpush1.bf16.msra.mxu0 0
      %1718 = vmatprep.subr.bf16.mxu0 0
      %1719 = vmatpush1.bf16.msra.mxu0 0
      %1720 = vmatprep.subr.bf16.mxu0 0
      %1721 = vmatpush1.bf16.msra.mxu0 0
      %1722 = vmatprep.subr.bf16.mxu0 0
      %1723 = vmatpush1.bf16.msra.mxu0 0
      %1724 = vmatprep.mubr.bf16.mxu0 0
      %1725 = vmatmul.mubr.bf16.gmra.mrb[0].mxu0 %v1690
      %v1726 = vpop.f32.mrb[0].mxu0
      %v1727 = vadd.f32 0.0, %v1726
      %v1728 = vpop.f32.mrb[0].mxu0
      %v1729 = vpop.f32.mrb[0].mxu0
      %v1730 = vadd.f32 0.0, %v1729
      %v1731 = vpop.f32.mrb[0].mxu0
      %1732 = vdwg.mxu0
      %v1733 = vadd.f32 %v846, %v1727
      %v1734 = vadd.f32 %v847, %v1730
      %v1735 = vsel %vm848, %v1733, 0.0
      %1736 = vadd.xlane.f32.xlu0 %v1735
      %v1737 = vpop.xlane.xlu0 %1736
      %v1738 = vsel %vm848, %v1734, 0.0
      %1739 = vadd.xlane.f32.xlu0 %v1738
      %v1740 = vpop.xlane.xlu0 %1739
      %v1741 = vmul.f32 %v1737, %v855
      %v1742 = vmul.f32 %v1740, %v855
      %v1743 = vsub.f32 %v1733, %v1741
      %v1744 = vsub.f32 %v1734, %v1742
      %v1745 = vmul.f32 %v1743, %v1743
      %v1746 = vmul.f32 %v1744, %v1744
      %v1747 = vsel %vm848, %v1745, 0.0
      %1748 = vadd.xlane.f32.xlu0 %v1747
      %v1749 = vpop.xlane.xlu0 %1748
      %v1750 = vsel %vm848, %v1746, 0.0
      %1751 = vadd.xlane.f32.xlu0 %v1750
      %v1752 = vpop.xlane.xlu0 %1751
      %v1753 = vmul.f32 %v1749, %v855
      %v1754 = vmul.f32 %v1752, %v855
      %v1755 = vadd.f32 %v1753, 1e-05
      %v1756 = vadd.f32 %v1754, 1e-05
      %v1757 = vrsqrt.pop %v1755
      %v1758 = vrsqrt.pop %v1756
      %v1759 = vmul.f32 %v1743, %v1757
      %v1760 = vmul.f32 %v1744, %v1758
      %v1761 = vld [vmem:[%s9] sm:$0x1]
      %v1763 = vlaneseq
      %v1764 = vshrl.u32 %v1763, 7
      %v1765 = vsub.s32 0, %v1764
      %v1766 = vrot.slane %v1761, %v1765
      %v1768 = vmul.f32 %v1759, %v1766
      %v1769 = vmul.f32 %v1760, %v1766
      %v1770 = vld [vmem:[%s10] sm:$0x1]
      %v1772 = vlaneseq
      %v1773 = vshrl.u32 %v1772, 7
      %v1774 = vsub.s32 0, %v1773
      %v1775 = vrot.slane %v1770, %v1774
      %v1777 = vadd.f32 %v1768, %v1775
      %v1778 = vadd.f32 %v1769, %v1775
      %v1779 = vpack.c.bf16 %v1778, %v1777
      %v1780 = vld [vmem:[%s14] sm:$0xf]
      %v1781 = vld [vmem:[%s14 + $0x4] sm:$0xf]
      %v1782 = vld [vmem:[%s14 + $0x8] sm:$0xf]
      %v1783 = vld [vmem:[%s14 + $0xc] sm:$0xf]
      %v1788 = vunpack.c.l.b16 %v1780
      %v1789 = vunpack.c.l.b16 %v1781
      %v1790 = vunpack.c.l.b16 %v1782
      %v1791 = vunpack.c.l.b16 %v1783
      %v1792 = vpack.c.b16 %v1789, %v1788
      %v1793 = vpack.c.b16 %v1791, %v1790
      %v1797 = vsel %vm848, %v1779, 0
      %1799 = vmatprep.subr.bf16.mxu0 0
      %1800 = vmatpush1.bf16.msra.mxu0 %v1792
      %1801 = vmatprep.subr.bf16.mxu0 0
      %1802 = vmatpush1.bf16.msra.mxu0 %v1793
      %1803 = vmatprep.subr.bf16.mxu0 0
      %1804 = vmatpush1.bf16.msra.mxu0 0
      %1805 = vmatprep.subr.bf16.mxu0 0
      %1806 = vmatpush1.bf16.msra.mxu0 0
      %1807 = vmatprep.subr.bf16.mxu0 0
      %1808 = vmatpush1.bf16.msra.mxu0 0
      %1809 = vmatprep.subr.bf16.mxu0 0
      %1810 = vmatpush1.bf16.msra.mxu0 0
      %1811 = vmatprep.subr.bf16.mxu0 0
      %1812 = vmatpush1.bf16.msra.mxu0 0
      %1813 = vmatprep.subr.bf16.mxu0 0
      %1814 = vmatpush1.bf16.msra.mxu0 0
      %1815 = vmatprep.subr.bf16.mxu0 0
      %1816 = vmatpush1.bf16.msra.mxu0 0
      %1817 = vmatprep.subr.bf16.mxu0 0
      %1818 = vmatpush1.bf16.msra.mxu0 0
      %1819 = vmatprep.subr.bf16.mxu0 0
      %1820 = vmatpush1.bf16.msra.mxu0 0
      %1821 = vmatprep.subr.bf16.mxu0 0
      %1822 = vmatpush1.bf16.msra.mxu0 0
      %1823 = vmatprep.subr.bf16.mxu0 0
      %1824 = vmatpush1.bf16.msra.mxu0 0
      %1825 = vmatprep.subr.bf16.mxu0 0
      %1826 = vmatpush1.bf16.msra.mxu0 0
      %1827 = vmatprep.subr.bf16.mxu0 0
      %1828 = vmatpush1.bf16.msra.mxu0 0
      %1829 = vmatprep.subr.bf16.mxu0 0
      %1830 = vmatpush1.bf16.msra.mxu0 0
      %1831 = vmatprep.mubr.bf16.mxu0 0
      %1832 = vmatmul.mubr.bf16.gmra.mrb[0].mxu0 %v1797
      %v1833 = vpop.f32.mrb[0].mxu0
      %v1834 = vadd.f32 0.0, %v1833
      %v1835 = vpop.f32.mrb[0].mxu0
      %v1836 = vpop.f32.mrb[0].mxu0
      %v1837 = vadd.f32 0.0, %v1836
      %v1838 = vpop.f32.mrb[0].mxu0
      %1839 = vdwg.mxu0
      %v1840 = vxor.u32 %v1834, 2147483648
      %v1841 = vxor.u32 %v1837, 2147483648
      %v1842 = vmul.f32 %v1840, 1.442695
      %v1843 = vpow.pop %v1842
      %v1844 = vmul.f32 %v1841, 1.442695
      %v1845 = vpow.pop %v1844
      %v1846 = vadd.f32 %v1843, 1.0
      %v1847 = vadd.f32 %v1845, 1.0
      %v1848 = vrcp.pop %v1846
      %v1849 = vmul.f32 1.0, %v1848
      %v1850 = vrcp.pop %v1847
      %v1851 = vmul.f32 1.0, %v1850
      %v1852 = vmul.f32 %v1834, %v1849
      %v1853 = vmul.f32 %v1837, %v1851
      %v1854 = vpack.c.bf16 %v1853, %v1852
      %v1855 = vld [vmem:[%s15] sm:$0xf]
      %v1856 = vld [vmem:[%s15 + $0x4] sm:$0xf]
      %v1857 = vld [vmem:[%s15 + $0x8] sm:$0xf]
      %v1858 = vld [vmem:[%s15 + $0xc] sm:$0xf]
      %v1863 = vunpack.c.l.b16 %v1855
      %v1864 = vunpack.c.l.b16 %v1856
      %v1865 = vunpack.c.l.b16 %v1857
      %v1866 = vunpack.c.l.b16 %v1858
      %v1867 = vpack.c.b16 %v1864, %v1863
      %v1868 = vpack.c.b16 %v1866, %v1865
      %v1872 = vsel %vm848, %v1854, 0
      %1874 = vmatprep.subr.bf16.mxu0 0
      %1875 = vmatpush1.bf16.msra.mxu0 %v1867
      %1876 = vmatprep.subr.bf16.mxu0 0
      %1877 = vmatpush1.bf16.msra.mxu0 %v1868
      %1878 = vmatprep.subr.bf16.mxu0 0
      %1879 = vmatpush1.bf16.msra.mxu0 0
      %1880 = vmatprep.subr.bf16.mxu0 0
      %1881 = vmatpush1.bf16.msra.mxu0 0
      %1882 = vmatprep.subr.bf16.mxu0 0
      %1883 = vmatpush1.bf16.msra.mxu0 0
      %1884 = vmatprep.subr.bf16.mxu0 0
      %1885 = vmatpush1.bf16.msra.mxu0 0
      %1886 = vmatprep.subr.bf16.mxu0 0
      %1887 = vmatpush1.bf16.msra.mxu0 0
      %1888 = vmatprep.subr.bf16.mxu0 0
      %1889 = vmatpush1.bf16.msra.mxu0 0
      %1890 = vmatprep.subr.bf16.mxu0 0
      %1891 = vmatpush1.bf16.msra.mxu0 0
      %1892 = vmatprep.subr.bf16.mxu0 0
      %1893 = vmatpush1.bf16.msra.mxu0 0
      %1894 = vmatprep.subr.bf16.mxu0 0
      %1895 = vmatpush1.bf16.msra.mxu0 0
      %1896 = vmatprep.subr.bf16.mxu0 0
      %1897 = vmatpush1.bf16.msra.mxu0 0
      %1898 = vmatprep.subr.bf16.mxu0 0
      %1899 = vmatpush1.bf16.msra.mxu0 0
      %1900 = vmatprep.subr.bf16.mxu0 0
      %1901 = vmatpush1.bf16.msra.mxu0 0
      %1902 = vmatprep.subr.bf16.mxu0 0
      %1903 = vmatpush1.bf16.msra.mxu0 0
      %1904 = vmatprep.subr.bf16.mxu0 0
      %1905 = vmatpush1.bf16.msra.mxu0 0
      %1906 = vmatprep.mubr.bf16.mxu0 0
      %1907 = vmatmul.mubr.bf16.gmra.mrb[0].mxu0 %v1872
      %v1908 = vpop.f32.mrb[0].mxu0
      %v1909 = vadd.f32 0.0, %v1908
      %v1910 = vpop.f32.mrb[0].mxu0
      %v1911 = vpop.f32.mrb[0].mxu0
      %v1912 = vadd.f32 0.0, %v1911
      %v1913 = vpop.f32.mrb[0].mxu0
      %1914 = vdwg.mxu0
      %v1915 = vadd.f32 %v1733, %v1909
      %v1916 = vadd.f32 %v1734, %v1912
      %v1917 = vsel %vm848, %v1915, 0.0
      %1918 = vadd.xlane.f32.xlu0 %v1917
      %v1919 = vpop.xlane.xlu0 %1918
      %v1920 = vsel %vm848, %v1916, 0.0
      %1921 = vadd.xlane.f32.xlu0 %v1920
      %v1922 = vpop.xlane.xlu0 %1921
      %v1923 = vmul.f32 %v1919, %v855
      %v1924 = vmul.f32 %v1922, %v855
      %v1925 = vsub.f32 %v1915, %v1923
      %v1926 = vsub.f32 %v1916, %v1924
      %v1927 = vmul.f32 %v1925, %v1925
      %v1928 = vmul.f32 %v1926, %v1926
      %v1929 = vsel %vm848, %v1927, 0.0
      %1930 = vadd.xlane.f32.xlu0 %v1929
      %v1931 = vpop.xlane.xlu0 %1930
      %v1932 = vsel %vm848, %v1928, 0.0
      %1933 = vadd.xlane.f32.xlu0 %v1932
      %v1934 = vpop.xlane.xlu0 %1933
      %v1935 = vmul.f32 %v1931, %v855
      %v1936 = vmul.f32 %v1934, %v855
      %v1937 = vadd.f32 %v1935, 1e-05
      %v1938 = vadd.f32 %v1936, 1e-05
      %v1939 = vrsqrt.pop %v1937
      %v1940 = vrsqrt.pop %v1938
      %v1941 = vmul.f32 %v1925, %v1939
      %v1942 = vmul.f32 %v1926, %v1940
      %v1943 = vld [vmem:[%s16] sm:$0x1]
      %v1945 = vlaneseq
      %v1946 = vshrl.u32 %v1945, 7
      %v1947 = vsub.s32 0, %v1946
      %v1948 = vrot.slane %v1943, %v1947
      %v1950 = vmul.f32 %v1941, %v1948
      %v1951 = vmul.f32 %v1942, %v1948
      %v1952 = vld [vmem:[%s17] sm:$0x1]
      %v1954 = vlaneseq
      %v1955 = vshrl.u32 %v1954, 7
      %v1956 = vsub.s32 0, %v1955
      %v1957 = vrot.slane %v1952, %v1956
      %v1959 = vadd.f32 %v1950, %v1957
      %v1960 = vadd.f32 %v1951, %v1957
      %v1961 = vpack.c.bf16 %v1960, %v1959
      %v1962 = vld [vmem:[%s18] sm:$0x1]
      %v1964 = vlaneseq
      %v1965 = vshrl.u32 %v1964, 7
      %v1966 = vsub.s32 0, %v1965
      %v1967 = vrot.slane %v1962, %v1966
      %v1969 = vmul.f32 %v1941, %v1967
      %v1970 = vmul.f32 %v1942, %v1967
      %v1971 = vld [vmem:[%s19] sm:$0x1]
      %v1973 = vlaneseq
      %v1974 = vshrl.u32 %v1973, 7
      %v1975 = vsub.s32 0, %v1974
      %v1976 = vrot.slane %v1971, %v1975
      %v1978 = vadd.f32 %v1969, %v1976
      %v1979 = vadd.f32 %v1970, %v1976
      %v1980 = vpack.c.bf16 %v1979, %v1978
      %v1981 = vld [vmem:[%s22] sm:$0xf]
      %v1982 = vld [vmem:[%s22 + $0x4] sm:$0xf]
      %v1983 = vld [vmem:[%s22 + $0x8] sm:$0xf]
      %v1984 = vld [vmem:[%s22 + $0xc] sm:$0xf]
      %v1989 = vunpack.c.l.b16 %v1981
      %v1990 = vunpack.c.l.b16 %v1982
      %v1991 = vunpack.c.l.b16 %v1983
      %v1992 = vunpack.c.l.b16 %v1984
      %v1993 = vpack.c.b16 %v1990, %v1989
      %v1994 = vpack.c.b16 %v1992, %v1991
      %v1998 = vsel %vm848, %v1961, 0
      %2000 = vmatprep.subr.bf16.mxu0 0
      %2001 = vmatpush1.bf16.msra.mxu0 %v1993
      %2002 = vmatprep.subr.bf16.mxu0 0
      %2003 = vmatpush1.bf16.msra.mxu0 %v1994
      %2004 = vmatprep.subr.bf16.mxu0 0
      %2005 = vmatpush1.bf16.msra.mxu0 0
      %2006 = vmatprep.subr.bf16.mxu0 0
      %2007 = vmatpush1.bf16.msra.mxu0 0
      %2008 = vmatprep.subr.bf16.mxu0 0
      %2009 = vmatpush1.bf16.msra.mxu0 0
      %2010 = vmatprep.subr.bf16.mxu0 0
      %2011 = vmatpush1.bf16.msra.mxu0 0
      %2012 = vmatprep.subr.bf16.mxu0 0
      %2013 = vmatpush1.bf16.msra.mxu0 0
      %2014 = vmatprep.subr.bf16.mxu0 0
      %2015 = vmatpush1.bf16.msra.mxu0 0
      %2016 = vmatprep.subr.bf16.mxu0 0
      %2017 = vmatpush1.bf16.msra.mxu0 0
      %2018 = vmatprep.subr.bf16.mxu0 0
      %2019 = vmatpush1.bf16.msra.mxu0 0
      %2020 = vmatprep.subr.bf16.mxu0 0
      %2021 = vmatpush1.bf16.msra.mxu0 0
      %2022 = vmatprep.subr.bf16.mxu0 0
      %2023 = vmatpush1.bf16.msra.mxu0 0
      %2024 = vmatprep.subr.bf16.mxu0 0
      %2025 = vmatpush1.bf16.msra.mxu0 0
      %2026 = vmatprep.subr.bf16.mxu0 0
      %2027 = vmatpush1.bf16.msra.mxu0 0
      %2028 = vmatprep.subr.bf16.mxu0 0
      %2029 = vmatpush1.bf16.msra.mxu0 0
      %2030 = vmatprep.subr.bf16.mxu0 0
      %2031 = vmatpush1.bf16.msra.mxu0 0
      %2032 = vmatprep.mubr.bf16.mxu0 0
      %2033 = vmatmul.mubr.bf16.gmra.mrb[0].mxu0 %v1998
      %v2034 = vpop.f32.mrb[0].mxu0
      %v2035 = vadd.f32 0.0, %v2034
      %v2036 = vpop.f32.mrb[0].mxu0
      %v2037 = vpop.f32.mrb[0].mxu0
      %v2038 = vadd.f32 0.0, %v2037
      %v2039 = vpop.f32.mrb[0].mxu0
      %2040 = vdwg.mxu0
      %v2041 = vld [vmem:[%s23] sm:$0xf]
      %v2042 = vld [vmem:[%s23 + $0x4] sm:$0xf]
      %v2043 = vld [vmem:[%s23 + $0x8] sm:$0xf]
      %v2044 = vld [vmem:[%s23 + $0xc] sm:$0xf]
      %v2049 = vunpack.c.l.b16 %v2041
      %v2050 = vunpack.c.l.b16 %v2042
      %v2051 = vunpack.c.l.b16 %v2043
      %v2052 = vunpack.c.l.b16 %v2044
      %v2053 = vpack.c.b16 %v2050, %v2049
      %v2054 = vpack.c.b16 %v2052, %v2051
      %v2058 = vsel %vm848, %v1980, 0
      %2060 = vmatprep.subr.bf16.mxu0 0
      %2061 = vmatpush1.bf16.msra.mxu0 %v2053
      %2062 = vmatprep.subr.bf16.mxu0 0
      %2063 = vmatpush1.bf16.msra.mxu0 %v2054
      %2064 = vmatprep.subr.bf16.mxu0 0
      %2065 = vmatpush1.bf16.msra.mxu0 0
      %2066 = vmatprep.subr.bf16.mxu0 0
      %2067 = vmatpush1.bf16.msra.mxu0 0
      %2068 = vmatprep.subr.bf16.mxu0 0
      %2069 = vmatpush1.bf16.msra.mxu0 0
      %2070 = vmatprep.subr.bf16.mxu0 0
      %2071 = vmatpush1.bf16.msra.mxu0 0
      %2072 = vmatprep.subr.bf16.mxu0 0
      %2073 = vmatpush1.bf16.msra.mxu0 0
      %2074 = vmatprep.subr.bf16.mxu0 0
      %2075 = vmatpush1.bf16.msra.mxu0 0
      %2076 = vmatprep.subr.bf16.mxu0 0
      %2077 = vmatpush1.bf16.msra.mxu0 0
      %2078 = vmatprep.subr.bf16.mxu0 0
      %2079 = vmatpush1.bf16.msra.mxu0 0
      %2080 = vmatprep.subr.bf16.mxu0 0
      %2081 = vmatpush1.bf16.msra.mxu0 0
      %2082 = vmatprep.subr.bf16.mxu0 0
      %2083 = vmatpush1.bf16.msra.mxu0 0
      %2084 = vmatprep.subr.bf16.mxu0 0
      %2085 = vmatpush1.bf16.msra.mxu0 0
      %2086 = vmatprep.subr.bf16.mxu0 0
      %2087 = vmatpush1.bf16.msra.mxu0 0
      %2088 = vmatprep.subr.bf16.mxu0 0
      %2089 = vmatpush1.bf16.msra.mxu0 0
      %2090 = vmatprep.subr.bf16.mxu0 0
      %2091 = vmatpush1.bf16.msra.mxu0 0
      %2092 = vmatprep.mubr.bf16.mxu0 0
      %2093 = vmatmul.mubr.bf16.gmra.mrb[0].mxu0 %v2058
      %v2094 = vpop.f32.mrb[0].mxu0
      %v2095 = vadd.f32 0.0, %v2094
      %v2096 = vpop.f32.mrb[0].mxu0
      %v2097 = vpop.f32.mrb[0].mxu0
      %v2098 = vadd.f32 0.0, %v2097
      %v2099 = vpop.f32.mrb[0].mxu0
      %2100 = vdwg.mxu0
      %v2101 = vpack.c.bf16 %v2038, %v2035
      %v2102 = vpack.c.bf16 %v2098, %v2095
      %v2104 = vsel %vm1105, %v2101, 0
      %v2107 = vsel %vm1105, %v2102, 0
      %2109 = vmatprep.subr.bf16.mxu0 0
      %2110 = vmatpush1.bf16.xpose.msra.mxu0 %v2107
      %2111 = vmatprep.subr.bf16.mxu0 0
      %2112 = vmatpush1.bf16.xpose.msra.mxu0 0
      %2113 = vmatprep.subr.bf16.mxu0 0
      %2114 = vmatpush1.bf16.xpose.msra.mxu0 0
      %2115 = vmatprep.subr.bf16.mxu0 0
      %2116 = vmatpush1.bf16.xpose.msra.mxu0 0
      %2117 = vmatprep.subr.bf16.mxu0 0
      %2118 = vmatpush1.bf16.xpose.msra.mxu0 0
      %2119 = vmatprep.subr.bf16.mxu0 0
      %2120 = vmatpush1.bf16.xpose.msra.mxu0 0
      %2121 = vmatprep.subr.bf16.mxu0 0
      %2122 = vmatpush1.bf16.xpose.msra.mxu0 0
      %2123 = vmatprep.subr.bf16.mxu0 0
      %2124 = vmatpush1.bf16.xpose.msra.mxu0 0
      %2125 = vmatprep.subr.bf16.mxu0 0
      %2126 = vmatpush1.bf16.xpose.msra.mxu0 0
      %2127 = vmatprep.subr.bf16.mxu0 0
      %2128 = vmatpush1.bf16.xpose.msra.mxu0 0
      %2129 = vmatprep.subr.bf16.mxu0 0
      %2130 = vmatpush1.bf16.xpose.msra.mxu0 0
      %2131 = vmatprep.subr.bf16.mxu0 0
      %2132 = vmatpush1.bf16.xpose.msra.mxu0 0
      %2133 = vmatprep.subr.bf16.mxu0 0
      %2134 = vmatpush1.bf16.xpose.msra.mxu0 0
      %2135 = vmatprep.subr.bf16.mxu0 0
      %2136 = vmatpush1.bf16.xpose.msra.mxu0 0
      %2137 = vmatprep.subr.bf16.mxu0 0
      %2138 = vmatpush1.bf16.xpose.msra.mxu0 0
      %2139 = vmatprep.subr.bf16.mxu0 0
      %2140 = vmatpush1.bf16.xpose.msra.mxu0 0
      %2141 = vmatprep.mubr.bf16.mxu0 0
      %2142 = vmatmul.mubr.bf16.gmra.mrb[0].mxu0 %v2104
      %v2143 = vpop.f32.mrb[0].mxu0
      %v2144 = vadd.f32 0.0, %v2143
      %v2145 = vpop.f32.mrb[0].mxu0
      %v2146 = vpop.f32.mrb[0].mxu0
      %v2147 = vadd.f32 0.0, %v2146
      %v2148 = vpop.f32.mrb[0].mxu0
      %2149 = vdwg.mxu0
      %v2150 = vmul.f32 %v2144, 0.35355338
      %v2151 = vmul.f32 %v2147, 0.35355338
      %v2152 = vadd.f32 %v2150, %v844
      %v2153 = vadd.f32 %v2151, %v845
      %vm2154 = vcmask 130048
      %v2155 = vsel %vm2154, %v2152, -inf
      %2156 = vmax.xlane.f32.xlu0 %v2155
      %v2157 = vpop.xlane.xlu0 %2156
      %v2158 = vsel %vm2154, %v2153, -inf
      %2159 = vmax.xlane.f32.xlu0 %v2158
      %v2160 = vpop.xlane.xlu0 %2159
      %v2161 = vsub.f32 %v2152, %v2157
      %v2162 = vsub.f32 %v2153, %v2160
      %v2163 = vmul.f32 %v2161, 1.442695
      %v2164 = vpow.pop %v2163
      %v2165 = vmul.f32 %v2162, 1.442695
      %v2166 = vpow.pop %v2165
      %v2167 = vsel %vm2154, %v2164, 0.0
      %2168 = vadd.xlane.f32.xlu0 %v2167
      %v2169 = vpop.xlane.xlu0 %2168
      %v2170 = vsel %vm2154, %v2166, 0.0
      %2171 = vadd.xlane.f32.xlu0 %v2170
      %v2172 = vpop.xlane.xlu0 %2171
      %v2173 = vrcp.pop %v2169
      %v2174 = vrcp.pop %v2172
      %v2175 = vmul.f32 %v2164, %v2173
      %v2176 = vmul.f32 %v2166, %v2174
      %v2177 = vpack.c.bf16 %v2176, %v2175
      %2179 = vrot.lane.b32.xlu0 %v2102, 96
      %v2180 = vpop.permute.xlu0 %2179
      %v2183 = vsel %vm2154, %v2177, 0
      %2185 = vmatprep.subr.bf16.mxu0 0
      %2186 = vmatpush1.bf16.msra.mxu0 %v2180
      %2187 = vmatprep.subr.bf16.mxu0 0
      %2188 = vmatpush1.bf16.msra.mxu0 0
      %2189 = vmatprep.subr.bf16.mxu0 0
      %2190 = vmatpush1.bf16.msra.mxu0 0
      %2191 = vmatprep.subr.bf16.mxu0 0
      %2192 = vmatpush1.bf16.msra.mxu0 0
      %2193 = vmatprep.subr.bf16.mxu0 0
      %2194 = vmatpush1.bf16.msra.mxu0 0
      %2195 = vmatprep.subr.bf16.mxu0 0
      %2196 = vmatpush1.bf16.msra.mxu0 0
      %2197 = vmatprep.subr.bf16.mxu0 0
      %2198 = vmatpush1.bf16.msra.mxu0 0
      %2199 = vmatprep.subr.bf16.mxu0 0
      %2200 = vmatpush1.bf16.msra.mxu0 0
      %2201 = vmatprep.subr.bf16.mxu0 0
      %2202 = vmatpush1.bf16.msra.mxu0 0
      %2203 = vmatprep.subr.bf16.mxu0 0
      %2204 = vmatpush1.bf16.msra.mxu0 0
      %2205 = vmatprep.subr.bf16.mxu0 0
      %2206 = vmatpush1.bf16.msra.mxu0 0
      %2207 = vmatprep.subr.bf16.mxu0 0
      %2208 = vmatpush1.bf16.msra.mxu0 0
      %2209 = vmatprep.subr.bf16.mxu0 0
      %2210 = vmatpush1.bf16.msra.mxu0 0
      %2211 = vmatprep.subr.bf16.mxu0 0
      %2212 = vmatpush1.bf16.msra.mxu0 0
      %2213 = vmatprep.subr.bf16.mxu0 0
      %2214 = vmatpush1.bf16.msra.mxu0 0
      %2215 = vmatprep.subr.bf16.mxu0 0
      %2216 = vmatpush1.bf16.msra.mxu0 0
      %2217 = vmatprep.mubr.bf16.mxu0 0
      %2218 = vmatmul.mubr.bf16.gmra.mrb[0].mxu0 %v2183
      %v2219 = vpop.f32.mrb[0].mxu0
      %v2220 = vadd.f32 0.0, %v2219
      %v2221 = vpop.f32.mrb[0].mxu0
      %v2222 = vpop.f32.mrb[0].mxu0
      %v2223 = vadd.f32 0.0, %v2222
      %v2224 = vpop.f32.mrb[0].mxu0
      %2225 = vdwg.mxu0
      %2226 = vst.msk [vmem:[#allocation2] sm:$0xff] %vm1105, %v2220
      %2227 = vst.msk [vmem:[#allocation2 + $0x8] sm:$0xff] %vm1105, %v2223
      %2229 = vrot.lane.b32.xlu0 %v2101, 120
      %v2230 = vpop.permute.xlu0 %2229
      %2231 = vrot.lane.b32.xlu0 %v2102, 120
      %v2232 = vpop.permute.xlu0 %2231
      %v2234 = vsel %vm1105, %v2230, 0
      %v2237 = vsel %vm1105, %v2232, 0
      %2239 = vmatprep.subr.bf16.mxu0 0
      %2240 = vmatpush1.bf16.xpose.msra.mxu0 %v2237
      %2241 = vmatprep.subr.bf16.mxu0 0
      %2242 = vmatpush1.bf16.xpose.msra.mxu0 0
      %2243 = vmatprep.subr.bf16.mxu0 0
      %2244 = vmatpush1.bf16.xpose.msra.mxu0 0
      %2245 = vmatprep.subr.bf16.mxu0 0
      %2246 = vmatpush1.bf16.xpose.msra.mxu0 0
      %2247 = vmatprep.subr.bf16.mxu0 0
      %2248 = vmatpush1.bf16.xpose.msra.mxu0 0
      %2249 = vmatprep.subr.bf16.mxu0 0
      %2250 = vmatpush1.bf16.xpose.msra.mxu0 0
      %2251 = vmatprep.subr.bf16.mxu0 0
      %2252 = vmatpush1.bf16.xpose.msra.mxu0 0
      %2253 = vmatprep.subr.bf16.mxu0 0
      %2254 = vmatpush1.bf16.xpose.msra.mxu0 0
      %2255 = vmatprep.subr.bf16.mxu0 0
      %2256 = vmatpush1.bf16.xpose.msra.mxu0 0
      %2257 = vmatprep.subr.bf16.mxu0 0
      %2258 = vmatpush1.bf16.xpose.msra.mxu0 0
      %2259 = vmatprep.subr.bf16.mxu0 0
      %2260 = vmatpush1.bf16.xpose.msra.mxu0 0
      %2261 = vmatprep.subr.bf16.mxu0 0
      %2262 = vmatpush1.bf16.xpose.msra.mxu0 0
      %2263 = vmatprep.subr.bf16.mxu0 0
      %2264 = vmatpush1.bf16.xpose.msra.mxu0 0
      %2265 = vmatprep.subr.bf16.mxu0 0
      %2266 = vmatpush1.bf16.xpose.msra.mxu0 0
      %2267 = vmatprep.subr.bf16.mxu0 0
      %2268 = vmatpush1.bf16.xpose.msra.mxu0 0
      %2269 = vmatprep.subr.bf16.mxu0 0
      %2270 = vmatpush1.bf16.xpose.msra.mxu0 0
      %2271 = vmatprep.mubr.bf16.mxu0 0
      %2272 = vmatmul.mubr.bf16.gmra.mrb[0].mxu0 %v2234
      %v2273 = vpop.f32.mrb[0].mxu0
      %v2274 = vadd.f32 0.0, %v2273
      %v2275 = vpop.f32.mrb[0].mxu0
      %v2276 = vpop.f32.mrb[0].mxu0
      %v2277 = vadd.f32 0.0, %v2276
      %v2278 = vpop.f32.mrb[0].mxu0
      %2279 = vdwg.mxu0
      %v2280 = vmul.f32 %v2274, 0.35355338
      %v2281 = vmul.f32 %v2277, 0.35355338
      %v2282 = vadd.f32 %v2280, %v844
      %v2283 = vadd.f32 %v2281, %v845
      %v2284 = vsel %vm2154, %v2282, -inf
      %2285 = vmax.xlane.f32.xlu0 %v2284
      %v2286 = vpop.xlane.xlu0 %2285
      %v2287 = vsel %vm2154, %v2283, -inf
      %2288 = vmax.xlane.f32.xlu0 %v2287
      %v2289 = vpop.xlane.xlu0 %2288
      %v2290 = vsub.f32 %v2282, %v2286
      %v2291 = vsub.f32 %v2283, %v2289
      %v2292 = vmul.f32 %v2290, 1.442695
      %v2293 = vpow.pop %v2292
      %v2294 = vmul.f32 %v2291, 1.442695
      %v2295 = vpow.pop %v2294
      %v2296 = vsel %vm2154, %v2293, 0.0
      %2297 = vadd.xlane.f32.xlu0 %v2296
      %v2298 = vpop.xlane.xlu0 %2297
      %v2299 = vsel %vm2154, %v2295, 0.0
      %2300 = vadd.xlane.f32.xlu0 %v2299
      %v2301 = vpop.xlane.xlu0 %2300
      %v2302 = vrcp.pop %v2298
      %v2303 = vrcp.pop %v2301
      %v2304 = vmul.f32 %v2293, %v2302
      %v2305 = vmul.f32 %v2295, %v2303
      %v2306 = vpack.c.bf16 %v2305, %v2304
      %2307 = vrot.lane.b32.xlu0 %v2102, 88
      %v2308 = vpop.permute.xlu0 %2307
      %v2311 = vsel %vm2154, %v2306, 0
      %2313 = vmatprep.subr.bf16.mxu0 0
      %2314 = vmatpush1.bf16.msra.mxu0 %v2308
      %2315 = vmatprep.subr.bf16.mxu0 0
      %2316 = vmatpush1.bf16.msra.mxu0 0
      %2317 = vmatprep.subr.bf16.mxu0 0
      %2318 = vmatpush1.bf16.msra.mxu0 0
      %2319 = vmatprep.subr.bf16.mxu0 0
      %2320 = vmatpush1.bf16.msra.mxu0 0
      %2321 = vmatprep.subr.bf16.mxu0 0
      %2322 = vmatpush1.bf16.msra.mxu0 0
      %2323 = vmatprep.subr.bf16.mxu0 0
      %2324 = vmatpush1.bf16.msra.mxu0 0
      %2325 = vmatprep.subr.bf16.mxu0 0
      %2326 = vmatpush1.bf16.msra.mxu0 0
      %2327 = vmatprep.subr.bf16.mxu0 0
      %2328 = vmatpush1.bf16.msra.mxu0 0
      %2329 = vmatprep.subr.bf16.mxu0 0
      %2330 = vmatpush1.bf16.msra.mxu0 0
      %2331 = vmatprep.subr.bf16.mxu0 0
      %2332 = vmatpush1.bf16.msra.mxu0 0
      %2333 = vmatprep.subr.bf16.mxu0 0
      %2334 = vmatpush1.bf16.msra.mxu0 0
      %2335 = vmatprep.subr.bf16.mxu0 0
      %2336 = vmatpush1.bf16.msra.mxu0 0
      %2337 = vmatprep.subr.bf16.mxu0 0
      %2338 = vmatpush1.bf16.msra.mxu0 0
      %2339 = vmatprep.subr.bf16.mxu0 0
      %2340 = vmatpush1.bf16.msra.mxu0 0
      %2341 = vmatprep.subr.bf16.mxu0 0
      %2342 = vmatpush1.bf16.msra.mxu0 0
      %2343 = vmatprep.subr.bf16.mxu0 0
      %2344 = vmatpush1.bf16.msra.mxu0 0
      %2345 = vmatprep.mubr.bf16.mxu0 0
      %2346 = vmatmul.mubr.bf16.gmra.mrb[0].mxu0 %v2311
      %v2347 = vpop.f32.mrb[0].mxu0
      %v2348 = vadd.f32 0.0, %v2347
      %v2349 = vpop.f32.mrb[0].mxu0
      %v2350 = vpop.f32.mrb[0].mxu0
      %v2351 = vadd.f32 0.0, %v2350
      %v2352 = vpop.f32.mrb[0].mxu0
      %2353 = vdwg.mxu0
      %2356 = vrot.lane.b32.xlu0 %v2348, 8
      %v2357 = vpop.permute.xlu0 %2356
      %2358 = vrot.lane.b32.xlu0 %v2351, 8
      %v2359 = vpop.permute.xlu0 %2358
      %2362 = vst.msk [vmem:[#allocation2] sm:$0xff] %vm1379, %v2357
      %2363 = vst.msk [vmem:[#allocation2 + $0x8] sm:$0xff] %vm1379, %v2359
      %2364 = vrot.lane.b32.xlu0 %v2101, 112
      %v2365 = vpop.permute.xlu0 %2364
      %2366 = vrot.lane.b32.xlu0 %v2102, 112
      %v2367 = vpop.permute.xlu0 %2366
      %v2369 = vsel %vm1105, %v2365, 0
      %v2372 = vsel %vm1105, %v2367, 0
      %2374 = vmatprep.subr.bf16.mxu0 0
      %2375 = vmatpush1.bf16.xpose.msra.mxu0 %v2372
      %2376 = vmatprep.subr.bf16.mxu0 0
      %2377 = vmatpush1.bf16.xpose.msra.mxu0 0
      %2378 = vmatprep.subr.bf16.mxu0 0
      %2379 = vmatpush1.bf16.xpose.msra.mxu0 0
      %2380 = vmatprep.subr.bf16.mxu0 0
      %2381 = vmatpush1.bf16.xpose.msra.mxu0 0
      %2382 = vmatprep.subr.bf16.mxu0 0
      %2383 = vmatpush1.bf16.xpose.msra.mxu0 0
      %2384 = vmatprep.subr.bf16.mxu0 0
      %2385 = vmatpush1.bf16.xpose.msra.mxu0 0
      %2386 = vmatprep.subr.bf16.mxu0 0
      %2387 = vmatpush1.bf16.xpose.msra.mxu0 0
      %2388 = vmatprep.subr.bf16.mxu0 0
      %2389 = vmatpush1.bf16.xpose.msra.mxu0 0
      %2390 = vmatprep.subr.bf16.mxu0 0
      %2391 = vmatpush1.bf16.xpose.msra.mxu0 0
      %2392 = vmatprep.subr.bf16.mxu0 0
      %2393 = vmatpush1.bf16.xpose.msra.mxu0 0
      %2394 = vmatprep.subr.bf16.mxu0 0
      %2395 = vmatpush1.bf16.xpose.msra.mxu0 0
      %2396 = vmatprep.subr.bf16.mxu0 0
      %2397 = vmatpush1.bf16.xpose.msra.mxu0 0
      %2398 = vmatprep.subr.bf16.mxu0 0
      %2399 = vmatpush1.bf16.xpose.msra.mxu0 0
      %2400 = vmatprep.subr.bf16.mxu0 0
      %2401 = vmatpush1.bf16.xpose.msra.mxu0 0
      %2402 = vmatprep.subr.bf16.mxu0 0
      %2403 = vmatpush1.bf16.xpose.msra.mxu0 0
      %2404 = vmatprep.subr.bf16.mxu0 0
      %2405 = vmatpush1.bf16.xpose.msra.mxu0 0
      %2406 = vmatprep.mubr.bf16.mxu0 0
      %2407 = vmatmul.mubr.bf16.gmra.mrb[0].mxu0 %v2369
      %v2408 = vpop.f32.mrb[0].mxu0
      %v2409 = vadd.f32 0.0, %v2408
      %v2410 = vpop.f32.mrb[0].mxu0
      %v2411 = vpop.f32.mrb[0].mxu0
      %v2412 = vadd.f32 0.0, %v2411
      %v2413 = vpop.f32.mrb[0].mxu0
      %2414 = vdwg.mxu0
      %v2415 = vmul.f32 %v2409, 0.35355338
      %v2416 = vmul.f32 %v2412, 0.35355338
      %v2417 = vadd.f32 %v2415, %v844
      %v2418 = vadd.f32 %v2416, %v845
      %v2419 = vsel %vm2154, %v2417, -inf
      %2420 = vmax.xlane.f32.xlu0 %v2419
      %v2421 = vpop.xlane.xlu0 %2420
      %v2422 = vsel %vm2154, %v2418, -inf
      %2423 = vmax.xlane.f32.xlu0 %v2422
      %v2424 = vpop.xlane.xlu0 %2423
      %v2425 = vsub.f32 %v2417, %v2421
      %v2426 = vsub.f32 %v2418, %v2424
      %v2427 = vmul.f32 %v2425, 1.442695
      %v2428 = vpow.pop %v2427
      %v2429 = vmul.f32 %v2426, 1.442695
      %v2430 = vpow.pop %v2429
      %v2431 = vsel %vm2154, %v2428, 0.0
      %2432 = vadd.xlane.f32.xlu0 %v2431
      %v2433 = vpop.xlane.xlu0 %2432
      %v2434 = vsel %vm2154, %v2430, 0.0
      %2435 = vadd.xlane.f32.xlu0 %v2434
      %v2436 = vpop.xlane.xlu0 %2435
      %v2437 = vrcp.pop %v2433
      %v2438 = vrcp.pop %v2436
      %v2439 = vmul.f32 %v2428, %v2437
      %v2440 = vmul.f32 %v2430, %v2438
      %v2441 = vpack.c.bf16 %v2440, %v2439
      %2442 = vrot.lane.b32.xlu0 %v2102, 80
      %v2443 = vpop.permute.xlu0 %2442
      %v2446 = vsel %vm2154, %v2441, 0
      %2448 = vmatprep.subr.bf16.mxu0 0
      %2449 = vmatpush1.bf16.msra.mxu0 %v2443
      %2450 = vmatprep.subr.bf16.mxu0 0
      %2451 = vmatpush1.bf16.msra.mxu0 0
      %2452 = vmatprep.subr.bf16.mxu0 0
      %2453 = vmatpush1.bf16.msra.mxu0 0
      %2454 = vmatprep.subr.bf16.mxu0 0
      %2455 = vmatpush1.bf16.msra.mxu0 0
      %2456 = vmatprep.subr.bf16.mxu0 0
      %2457 = vmatpush1.bf16.msra.mxu0 0
      %2458 = vmatprep.subr.bf16.mxu0 0
      %2459 = vmatpush1.bf16.msra.mxu0 0
      %2460 = vmatprep.subr.bf16.mxu0 0
      %2461 = vmatpush1.bf16.msra.mxu0 0
      %2462 = vmatprep.subr.bf16.mxu0 0
      %2463 = vmatpush1.bf16.msra.mxu0 0
      %2464 = vmatprep.subr.bf16.mxu0 0
      %2465 = vmatpush1.bf16.msra.mxu0 0
      %2466 = vmatprep.subr.bf16.mxu0 0
      %2467 = vmatpush1.bf16.msra.mxu0 0
      %2468 = vmatprep.subr.bf16.mxu0 0
      %2469 = vmatpush1.bf16.msra.mxu0 0
      %2470 = vmatprep.subr.bf16.mxu0 0
      %2471 = vmatpush1.bf16.msra.mxu0 0
      %2472 = vmatprep.subr.bf16.mxu0 0
      %2473 = vmatpush1.bf16.msra.mxu0 0
      %2474 = vmatprep.subr.bf16.mxu0 0
      %2475 = vmatpush1.bf16.msra.mxu0 0
      %2476 = vmatprep.subr.bf16.mxu0 0
      %2477 = vmatpush1.bf16.msra.mxu0 0
      %2478 = vmatprep.subr.bf16.mxu0 0
      %2479 = vmatpush1.bf16.msra.mxu0 0
      %2480 = vmatprep.mubr.bf16.mxu0 0
      %2481 = vmatmul.mubr.bf16.gmra.mrb[0].mxu0 %v2446
      %v2482 = vpop.f32.mrb[0].mxu0
      %v2483 = vadd.f32 0.0, %v2482
      %v2484 = vpop.f32.mrb[0].mxu0
      %v2485 = vpop.f32.mrb[0].mxu0
      %v2486 = vadd.f32 0.0, %v2485
      %v2487 = vpop.f32.mrb[0].mxu0
      %2488 = vdwg.mxu0
      %2491 = vrot.lane.b32.xlu0 %v2483, 16
      %v2492 = vpop.permute.xlu0 %2491
      %2493 = vrot.lane.b32.xlu0 %v2486, 16
      %v2494 = vpop.permute.xlu0 %2493
      %2497 = vst.msk [vmem:[#allocation2] sm:$0xff] %vm1523, %v2492
      %2498 = vst.msk [vmem:[#allocation2 + $0x8] sm:$0xff] %vm1523, %v2494
      %2499 = vrot.lane.b32.xlu0 %v2101, 104
      %v2500 = vpop.permute.xlu0 %2499
      %2501 = vrot.lane.b32.xlu0 %v2102, 104
      %v2502 = vpop.permute.xlu0 %2501
      %v2504 = vsel %vm1105, %v2500, 0
      %v2507 = vsel %vm1105, %v2502, 0
      %2509 = vmatprep.subr.bf16.mxu0 0
      %2510 = vmatpush1.bf16.xpose.msra.mxu0 %v2507
      %2511 = vmatprep.subr.bf16.mxu0 0
      %2512 = vmatpush1.bf16.xpose.msra.mxu0 0
      %2513 = vmatprep.subr.bf16.mxu0 0
      %2514 = vmatpush1.bf16.xpose.msra.mxu0 0
      %2515 = vmatprep.subr.bf16.mxu0 0
      %2516 = vmatpush1.bf16.xpose.msra.mxu0 0
      %2517 = vmatprep.subr.bf16.mxu0 0
      %2518 = vmatpush1.bf16.xpose.msra.mxu0 0
      %2519 = vmatprep.subr.bf16.mxu0 0
      %2520 = vmatpush1.bf16.xpose.msra.mxu0 0
      %2521 = vmatprep.subr.bf16.mxu0 0
      %2522 = vmatpush1.bf16.xpose.msra.mxu0 0
      %2523 = vmatprep.subr.bf16.mxu0 0
      %2524 = vmatpush1.bf16.xpose.msra.mxu0 0
      %2525 = vmatprep.subr.bf16.mxu0 0
      %2526 = vmatpush1.bf16.xpose.msra.mxu0 0
      %2527 = vmatprep.subr.bf16.mxu0 0
      %2528 = vmatpush1.bf16.xpose.msra.mxu0 0
      %2529 = vmatprep.subr.bf16.mxu0 0
      %2530 = vmatpush1.bf16.xpose.msra.mxu0 0
      %2531 = vmatprep.subr.bf16.mxu0 0
      %2532 = vmatpush1.bf16.xpose.msra.mxu0 0
      %2533 = vmatprep.subr.bf16.mxu0 0
      %2534 = vmatpush1.bf16.xpose.msra.mxu0 0
      %2535 = vmatprep.subr.bf16.mxu0 0
      %2536 = vmatpush1.bf16.xpose.msra.mxu0 0
      %2537 = vmatprep.subr.bf16.mxu0 0
      %2538 = vmatpush1.bf16.xpose.msra.mxu0 0
      %2539 = vmatprep.subr.bf16.mxu0 0
      %2540 = vmatpush1.bf16.xpose.msra.mxu0 0
      %2541 = vmatprep.mubr.bf16.mxu0 0
      %2542 = vmatmul.mubr.bf16.gmra.mrb[0].mxu0 %v2504
      %v2543 = vpop.f32.mrb[0].mxu0
      %v2544 = vadd.f32 0.0, %v2543
      %v2545 = vpop.f32.mrb[0].mxu0
      %v2546 = vpop.f32.mrb[0].mxu0
      %v2547 = vadd.f32 0.0, %v2546
      %v2548 = vpop.f32.mrb[0].mxu0
      %2549 = vdwg.mxu0
      %v2550 = vmul.f32 %v2544, 0.35355338
      %v2551 = vmul.f32 %v2547, 0.35355338
      %v2552 = vadd.f32 %v2550, %v844
      %v2553 = vadd.f32 %v2551, %v845
      %v2554 = vsel %vm2154, %v2552, -inf
      %2555 = vmax.xlane.f32.xlu0 %v2554
      %v2556 = vpop.xlane.xlu0 %2555
      %v2557 = vsel %vm2154, %v2553, -inf
      %2558 = vmax.xlane.f32.xlu0 %v2557
      %v2559 = vpop.xlane.xlu0 %2558
      %v2560 = vsub.f32 %v2552, %v2556
      %v2561 = vsub.f32 %v2553, %v2559
      %v2562 = vmul.f32 %v2560, 1.442695
      %v2563 = vpow.pop %v2562
      %v2564 = vmul.f32 %v2561, 1.442695
      %v2565 = vpow.pop %v2564
      %v2566 = vsel %vm2154, %v2563, 0.0
      %2567 = vadd.xlane.f32.xlu0 %v2566
      %v2568 = vpop.xlane.xlu0 %2567
      %v2569 = vsel %vm2154, %v2565, 0.0
      %2570 = vadd.xlane.f32.xlu0 %v2569
      %v2571 = vpop.xlane.xlu0 %2570
      %v2572 = vrcp.pop %v2568
      %v2573 = vrcp.pop %v2571
      %v2574 = vmul.f32 %v2563, %v2572
      %v2575 = vmul.f32 %v2565, %v2573
      %v2576 = vpack.c.bf16 %v2575, %v2574
      %2577 = vrot.lane.b32.xlu0 %v2102, 72
      %v2578 = vpop.permute.xlu0 %2577
      %v2581 = vsel %vm2154, %v2576, 0
      %2583 = vmatprep.subr.bf16.mxu0 0
      %2584 = vmatpush1.bf16.msra.mxu0 %v2578
      %2585 = vmatprep.subr.bf16.mxu0 0
      %2586 = vmatpush1.bf16.msra.mxu0 0
      %2587 = vmatprep.subr.bf16.mxu0 0
      %2588 = vmatpush1.bf16.msra.mxu0 0
      %2589 = vmatprep.subr.bf16.mxu0 0
      %2590 = vmatpush1.bf16.msra.mxu0 0
      %2591 = vmatprep.subr.bf16.mxu0 0
      %2592 = vmatpush1.bf16.msra.mxu0 0
      %2593 = vmatprep.subr.bf16.mxu0 0
      %2594 = vmatpush1.bf16.msra.mxu0 0
      %2595 = vmatprep.subr.bf16.mxu0 0
      %2596 = vmatpush1.bf16.msra.mxu0 0
      %2597 = vmatprep.subr.bf16.mxu0 0
      %2598 = vmatpush1.bf16.msra.mxu0 0
      %2599 = vmatprep.subr.bf16.mxu0 0
      %2600 = vmatpush1.bf16.msra.mxu0 0
      %2601 = vmatprep.subr.bf16.mxu0 0
      %2602 = vmatpush1.bf16.msra.mxu0 0
      %2603 = vmatprep.subr.bf16.mxu0 0
      %2604 = vmatpush1.bf16.msra.mxu0 0
      %2605 = vmatprep.subr.bf16.mxu0 0
      %2606 = vmatpush1.bf16.msra.mxu0 0
      %2607 = vmatprep.subr.bf16.mxu0 0
      %2608 = vmatpush1.bf16.msra.mxu0 0
      %2609 = vmatprep.subr.bf16.mxu0 0
      %2610 = vmatpush1.bf16.msra.mxu0 0
      %2611 = vmatprep.subr.bf16.mxu0 0
      %2612 = vmatpush1.bf16.msra.mxu0 0
      %2613 = vmatprep.subr.bf16.mxu0 0
      %2614 = vmatpush1.bf16.msra.mxu0 0
      %2615 = vmatprep.mubr.bf16.mxu0 0
      %2616 = vmatmul.mubr.bf16.gmra.mrb[0].mxu0 %v2581
      %v2617 = vpop.f32.mrb[0].mxu0
      %v2618 = vadd.f32 0.0, %v2617
      %v2619 = vpop.f32.mrb[0].mxu0
      %v2620 = vpop.f32.mrb[0].mxu0
      %v2621 = vadd.f32 0.0, %v2620
      %v2622 = vpop.f32.mrb[0].mxu0
      %2623 = vdwg.mxu0
      %2626 = vrot.lane.b32.xlu0 %v2618, 24
      %v2627 = vpop.permute.xlu0 %2626
      %2628 = vrot.lane.b32.xlu0 %v2621, 24
      %v2629 = vpop.permute.xlu0 %2628
      %2632 = vst.msk [vmem:[#allocation2] sm:$0xff] %vm1667, %v2627
      %2633 = vst.msk [vmem:[#allocation2 + $0x8] sm:$0xff] %vm1667, %v2629
      %v2634 = vld [vmem:[#allocation2] sm:$0xff]
      %v2635 = vld [vmem:[#allocation2 + $0x8] sm:$0xff]
      %v2636 = vpack.c.bf16 %v2635, %v2634
      %v2637 = vld [vmem:[%s24] sm:$0xf]
      %v2638 = vld [vmem:[%s24 + $0x4] sm:$0xf]
      %v2639 = vld [vmem:[%s24 + $0x8] sm:$0xf]
      %v2640 = vld [vmem:[%s24 + $0xc] sm:$0xf]
      %v2645 = vunpack.c.l.b16 %v2637
      %v2646 = vunpack.c.l.b16 %v2638
      %v2647 = vunpack.c.l.b16 %v2639
      %v2648 = vunpack.c.l.b16 %v2640
      %v2649 = vpack.c.b16 %v2646, %v2645
      %v2650 = vpack.c.b16 %v2648, %v2647
      %v2654 = vsel %vm848, %v2636, 0
      %2656 = vmatprep.subr.bf16.mxu0 0
      %2657 = vmatpush1.bf16.msra.mxu0 %v2649
      %2658 = vmatprep.subr.bf16.mxu0 0
      %2659 = vmatpush1.bf16.msra.mxu0 %v2650
      %2660 = vmatprep.subr.bf16.mxu0 0
      %2661 = vmatpush1.bf16.msra.mxu0 0
      %2662 = vmatprep.subr.bf16.mxu0 0
      %2663 = vmatpush1.bf16.msra.mxu0 0
      %2664 = vmatprep.subr.bf16.mxu0 0
      %2665 = vmatpush1.bf16.msra.mxu0 0
      %2666 = vmatprep.subr.bf16.mxu0 0
      %2667 = vmatpush1.bf16.msra.mxu0 0
      %2668 = vmatprep.subr.bf16.mxu0 0
      %2669 = vmatpush1.bf16.msra.mxu0 0
      %2670 = vmatprep.subr.bf16.mxu0 0
      %2671 = vmatpush1.bf16.msra.mxu0 0
      %2672 = vmatprep.subr.bf16.mxu0 0
      %2673 = vmatpush1.bf16.msra.mxu0 0
      %2674 = vmatprep.subr.bf16.mxu0 0
      %2675 = vmatpush1.bf16.msra.mxu0 0
      %2676 = vmatprep.subr.bf16.mxu0 0
      %2677 = vmatpush1.bf16.msra.mxu0 0
      %2678 = vmatprep.subr.bf16.mxu0 0
      %2679 = vmatpush1.bf16.msra.mxu0 0
      %2680 = vmatprep.subr.bf16.mxu0 0
      %2681 = vmatpush1.bf16.msra.mxu0 0
      %2682 = vmatprep.subr.bf16.mxu0 0
      %2683 = vmatpush1.bf16.msra.mxu0 0
      %2684 = vmatprep.subr.bf16.mxu0 0
      %2685 = vmatpush1.bf16.msra.mxu0 0
      %2686 = vmatprep.subr.bf16.mxu0 0
      %2687 = vmatpush1.bf16.msra.mxu0 0
      %2688 = vmatprep.mubr.bf16.mxu0 0
      %2689 = vmatmul.mubr.bf16.gmra.mrb[0].mxu0 %v2654
      %v2690 = vpop.f32.mrb[0].mxu0
      %v2691 = vadd.f32 0.0, %v2690
      %v2692 = vpop.f32.mrb[0].mxu0
      %v2693 = vpop.f32.mrb[0].mxu0
      %v2694 = vadd.f32 0.0, %v2693
      %v2695 = vpop.f32.mrb[0].mxu0
      %2696 = vdwg.mxu0
      %v2697 = vadd.f32 %v1915, %v2691
      %v2698 = vadd.f32 %v1916, %v2694
      %v2699 = vsel %vm848, %v2697, 0.0
      %2700 = vadd.xlane.f32.xlu0 %v2699
      %v2701 = vpop.xlane.xlu0 %2700
      %v2702 = vsel %vm848, %v2698, 0.0
      %2703 = vadd.xlane.f32.xlu0 %v2702
      %v2704 = vpop.xlane.xlu0 %2703
      %v2705 = vmul.f32 %v2701, %v855
      %v2706 = vmul.f32 %v2704, %v855
      %v2707 = vsub.f32 %v2697, %v2705
      %v2708 = vsub.f32 %v2698, %v2706
      %v2709 = vmul.f32 %v2707, %v2707
      %v2710 = vmul.f32 %v2708, %v2708
      %v2711 = vsel %vm848, %v2709, 0.0
      %2712 = vadd.xlane.f32.xlu0 %v2711
      %v2713 = vpop.xlane.xlu0 %2712
      %v2714 = vsel %vm848, %v2710, 0.0
      %2715 = vadd.xlane.f32.xlu0 %v2714
      %v2716 = vpop.xlane.xlu0 %2715
      %v2717 = vmul.f32 %v2713, %v855
      %v2718 = vmul.f32 %v2716, %v855
      %v2719 = vadd.f32 %v2717, 1e-05
      %v2720 = vadd.f32 %v2718, 1e-05
      %v2721 = vrsqrt.pop %v2719
      %v2722 = vrsqrt.pop %v2720
      %v2723 = vmul.f32 %v2707, %v2721
      %v2724 = vmul.f32 %v2708, %v2722
      %v2725 = vld [vmem:[%s20] sm:$0x1]
      %v2727 = vlaneseq
      %v2728 = vshrl.u32 %v2727, 7
      %v2729 = vsub.s32 0, %v2728
      %v2730 = vrot.slane %v2725, %v2729
      %v2732 = vmul.f32 %v2723, %v2730
      %v2733 = vmul.f32 %v2724, %v2730
      %v2734 = vld [vmem:[%s21] sm:$0x1]
      %v2736 = vlaneseq
      %v2737 = vshrl.u32 %v2736, 7
      %v2738 = vsub.s32 0, %v2737
      %v2739 = vrot.slane %v2734, %v2738
      %v2741 = vadd.f32 %v2732, %v2739
      %v2742 = vadd.f32 %v2733, %v2739
      %v2743 = vpack.c.bf16 %v2742, %v2741
      %v2744 = vld [vmem:[%s25] sm:$0xf]
      %v2745 = vld [vmem:[%s25 + $0x4] sm:$0xf]
      %v2746 = vld [vmem:[%s25 + $0x8] sm:$0xf]
      %v2747 = vld [vmem:[%s25 + $0xc] sm:$0xf]
      %v2752 = vunpack.c.l.b16 %v2744
      %v2753 = vunpack.c.l.b16 %v2745
      %v2754 = vunpack.c.l.b16 %v2746
      %v2755 = vunpack.c.l.b16 %v2747
      %v2756 = vpack.c.b16 %v2753, %v2752
      %v2757 = vpack.c.b16 %v2755, %v2754
      %v2761 = vsel %vm848, %v2743, 0
      %2763 = vmatprep.subr.bf16.mxu0 0
      %2764 = vmatpush1.bf16.msra.mxu0 %v2756
      %2765 = vmatprep.subr.bf16.mxu0 0
      %2766 = vmatpush1.bf16.msra.mxu0 %v2757
      %2767 = vmatprep.subr.bf16.mxu0 0
      %2768 = vmatpush1.bf16.msra.mxu0 0
      %2769 = vmatprep.subr.bf16.mxu0 0
      %2770 = vmatpush1.bf16.msra.mxu0 0
      %2771 = vmatprep.subr.bf16.mxu0 0
      %2772 = vmatpush1.bf16.msra.mxu0 0
      %2773 = vmatprep.subr.bf16.mxu0 0
      %2774 = vmatpush1.bf16.msra.mxu0 0
      %2775 = vmatprep.subr.bf16.mxu0 0
      %2776 = vmatpush1.bf16.msra.mxu0 0
      %2777 = vmatprep.subr.bf16.mxu0 0
      %2778 = vmatpush1.bf16.msra.mxu0 0
      %2779 = vmatprep.subr.bf16.mxu0 0
      %2780 = vmatpush1.bf16.msra.mxu0 0
      %2781 = vmatprep.subr.bf16.mxu0 0
      %2782 = vmatpush1.bf16.msra.mxu0 0
      %2783 = vmatprep.subr.bf16.mxu0 0
      %2784 = vmatpush1.bf16.msra.mxu0 0
      %2785 = vmatprep.subr.bf16.mxu0 0
      %2786 = vmatpush1.bf16.msra.mxu0 0
      %2787 = vmatprep.subr.bf16.mxu0 0
      %2788 = vmatpush1.bf16.msra.mxu0 0
      %2789 = vmatprep.subr.bf16.mxu0 0
      %2790 = vmatpush1.bf16.msra.mxu0 0
      %2791 = vmatprep.subr.bf16.mxu0 0
      %2792 = vmatpush1.bf16.msra.mxu0 0
      %2793 = vmatprep.subr.bf16.mxu0 0
      %2794 = vmatpush1.bf16.msra.mxu0 0
      %2795 = vmatprep.mubr.bf16.mxu0 0
      %2796 = vmatmul.mubr.bf16.gmra.mrb[0].mxu0 %v2761
      %v2797 = vpop.f32.mrb[0].mxu0
      %v2798 = vadd.f32 0.0, %v2797
      %v2799 = vpop.f32.mrb[0].mxu0
      %v2800 = vpop.f32.mrb[0].mxu0
      %v2801 = vadd.f32 0.0, %v2800
      %v2802 = vpop.f32.mrb[0].mxu0
      %2803 = vdwg.mxu0
      %v2804 = vxor.u32 %v2798, 2147483648
      %v2805 = vxor.u32 %v2801, 2147483648
      %v2806 = vmul.f32 %v2804, 1.442695
      %v2807 = vpow.pop %v2806
      %v2808 = vmul.f32 %v2805, 1.442695
      %v2809 = vpow.pop %v2808
      %v2810 = vadd.f32 %v2807, 1.0
      %v2811 = vadd.f32 %v2809, 1.0
      %v2812 = vrcp.pop %v2810
      %v2813 = vmul.f32 1.0, %v2812
      %v2814 = vrcp.pop %v2811
      %v2815 = vmul.f32 1.0, %v2814
      %v2816 = vmul.f32 %v2798, %v2813
      %v2817 = vmul.f32 %v2801, %v2815
      %v2818 = vpack.c.bf16 %v2817, %v2816
      %v2819 = vld [vmem:[%s26] sm:$0xf]
      %v2820 = vld [vmem:[%s26 + $0x4] sm:$0xf]
      %v2821 = vld [vmem:[%s26 + $0x8] sm:$0xf]
      %v2822 = vld [vmem:[%s26 + $0xc] sm:$0xf]
      %v2827 = vunpack.c.l.b16 %v2819
      %v2828 = vunpack.c.l.b16 %v2820
      %v2829 = vunpack.c.l.b16 %v2821
      %v2830 = vunpack.c.l.b16 %v2822
      %v2831 = vpack.c.b16 %v2828, %v2827
      %v2832 = vpack.c.b16 %v2830, %v2829
      %v2836 = vsel %vm848, %v2818, 0
      %2838 = vmatprep.subr.bf16.mxu0 0
      %2839 = vmatpush1.bf16.msra.mxu0 %v2831
      %2840 = vmatprep.subr.bf16.mxu0 0
      %2841 = vmatpush1.bf16.msra.mxu0 %v2832
      %2842 = vmatprep.subr.bf16.mxu0 0
      %2843 = vmatpush1.bf16.msra.mxu0 0
      %2844 = vmatprep.subr.bf16.mxu0 0
      %2845 = vmatpush1.bf16.msra.mxu0 0
      %2846 = vmatprep.subr.bf16.mxu0 0
      %2847 = vmatpush1.bf16.msra.mxu0 0
      %2848 = vmatprep.subr.bf16.mxu0 0
      %2849 = vmatpush1.bf16.msra.mxu0 0
      %2850 = vmatprep.subr.bf16.mxu0 0
      %2851 = vmatpush1.bf16.msra.mxu0 0
      %2852 = vmatprep.subr.bf16.mxu0 0
      %2853 = vmatpush1.bf16.msra.mxu0 0
      %2854 = vmatprep.subr.bf16.mxu0 0
      %2855 = vmatpush1.bf16.msra.mxu0 0
      %2856 = vmatprep.subr.bf16.mxu0 0
      %2857 = vmatpush1.bf16.msra.mxu0 0
      %2858 = vmatprep.subr.bf16.mxu0 0
      %2859 = vmatpush1.bf16.msra.mxu0 0
      %2860 = vmatprep.subr.bf16.mxu0 0
      %2861 = vmatpush1.bf16.msra.mxu0 0
      %2862 = vmatprep.subr.bf16.mxu0 0
      %2863 = vmatpush1.bf16.msra.mxu0 0
      %2864 = vmatprep.subr.bf16.mxu0 0
      %2865 = vmatpush1.bf16.msra.mxu0 0
      %2866 = vmatprep.subr.bf16.mxu0 0
      %2867 = vmatpush1.bf16.msra.mxu0 0
      %2868 = vmatprep.subr.bf16.mxu0 0
      %2869 = vmatpush1.bf16.msra.mxu0 0
      %2870 = vmatprep.mubr.bf16.mxu0 0
      %2871 = vmatmul.mubr.bf16.gmra.mrb[0].mxu0 %v2836
      %v2872 = vpop.f32.mrb[0].mxu0
      %v2873 = vadd.f32 0.0, %v2872
      %v2874 = vpop.f32.mrb[0].mxu0
      %v2875 = vpop.f32.mrb[0].mxu0
      %v2876 = vadd.f32 0.0, %v2875
      %v2877 = vpop.f32.mrb[0].mxu0
      %2878 = vdwg.mxu0
      %v2879 = vadd.f32 %v2697, %v2873
      %v2880 = vadd.f32 %v2698, %v2876
      %v2881 = vld [vmem:[%s4] sm:$0x3]
      %v2883 = vsel %vm2154, %v2881, 0
      %2885 = vmatprep.subr.mxu0 0.0
      %2886 = vmatpush1.msra.mxu0 %v2879
      %2887 = vmatprep.subr.mxu0 0.0
      %2888 = vmatpush1.msra.mxu0 %v2880
      %2889 = vmatprep.subr.mxu0 0.0
      %2890 = vmatpush1.msra.mxu0 0.0
      %2891 = vmatprep.subr.mxu0 0.0
      %2892 = vmatpush1.msra.mxu0 0.0
      %2893 = vmatprep.subr.mxu0 0.0
      %2894 = vmatpush1.msra.mxu0 0.0
      %2895 = vmatprep.subr.mxu0 0.0
      %2896 = vmatpush1.msra.mxu0 0.0
      %2897 = vmatprep.subr.mxu0 0.0
      %2898 = vmatpush1.msra.mxu0 0.0
      %2899 = vmatprep.subr.mxu0 0.0
      %2900 = vmatpush1.msra.mxu0 0.0
      %2901 = vmatprep.subr.mxu0 0.0
      %2902 = vmatpush1.msra.mxu0 0.0
      %2903 = vmatprep.subr.mxu0 0.0
      %2904 = vmatpush1.msra.mxu0 0.0
      %2905 = vmatprep.subr.mxu0 0.0
      %2906 = vmatpush1.msra.mxu0 0.0
      %2907 = vmatprep.subr.mxu0 0.0
      %2908 = vmatpush1.msra.mxu0 0.0
      %2909 = vmatprep.subr.mxu0 0.0
      %2910 = vmatpush1.msra.mxu0 0.0
      %2911 = vmatprep.subr.mxu0 0.0
      %2912 = vmatpush1.msra.mxu0 0.0
      %2913 = vmatprep.subr.mxu0 0.0
      %2914 = vmatpush1.msra.mxu0 0.0
      %2915 = vmatprep.subr.mxu0 0.0
      %2916 = vmatpush1.msra.mxu0 0.0
      %2917 = vmatprep.subr.mxu0 0.0
      %2918 = vmatpush1.msra.mxu0 0.0
      %2919 = vmatprep.subr.mxu0 0.0
      %2920 = vmatpush1.msra.mxu0 0.0
      %2921 = vmatprep.subr.mxu0 0.0
      %2922 = vmatpush1.msra.mxu0 0.0
      %2923 = vmatprep.subr.mxu0 0.0
      %2924 = vmatpush1.msra.mxu0 0.0
      %2925 = vmatprep.subr.mxu0 0.0
      %2926 = vmatpush1.msra.mxu0 0.0
      %2927 = vmatprep.subr.mxu0 0.0
      %2928 = vmatpush1.msra.mxu0 0.0
      %2929 = vmatprep.subr.mxu0 0.0
      %2930 = vmatpush1.msra.mxu0 0.0
      %2931 = vmatprep.subr.mxu0 0.0
      %2932 = vmatpush1.msra.mxu0 0.0
      %2933 = vmatprep.subr.mxu0 0.0
      %2934 = vmatpush1.msra.mxu0 0.0
      %2935 = vmatprep.subr.mxu0 0.0
      %2936 = vmatpush1.msra.mxu0 0.0
      %2937 = vmatprep.subr.mxu0 0.0
      %2938 = vmatpush1.msra.mxu0 0.0
      %2939 = vmatprep.subr.mxu0 0.0
      %2940 = vmatpush1.msra.mxu0 0.0
      %2941 = vmatprep.subr.mxu0 0.0
      %2942 = vmatpush1.msra.mxu0 0.0
      %2943 = vmatprep.subr.mxu0 0.0
      %2944 = vmatpush1.msra.mxu0 0.0
      %2945 = vmatprep.subr.mxu0 0.0
      %2946 = vmatpush1.msra.mxu0 0.0
      %2947 = vmatprep.subr.mxu0 0.0
      %2948 = vmatpush1.msra.mxu0 0.0
      %2949 = vmatprep.mubr.f32.mxu0 0.0
      %2950 = vmatmul.mubr.f32.gmra.mrb[0].mxu0 %v2883
      %v2951 = vpop.f32.mrb[0].mxu0
      %v2952 = vadd.f32 0.0, %v2951
      %v2953 = vpop.f32.mrb[0].mxu0
      %2954 = vdwg.mxu0
      %vm2955 = vcmask 254976
      %2956 = vst.msk [vmem:[%s836] sm:$0x3] %vm2955, %v2952
      %p2957 = scmp.lt.s32.totalorder %s38, 1
      %s2958 = scalar_select %p2957, %s38, 1
      %s2959 = smul.addr %s2958, 2
      %s2960 = scalar_lea.vmem %s27, %s2959
      // Predicated region
      $region129: #{model_forward.1} parent=127 // pred_check
        %p2961 = pneg %p633
      $region130: #{model_forward.1} parent=127 // pred_check_branch
        %2963 = sbr.rel (%p2961) target = $region132
      $region131: #{model_forward.1} parent=127 // pred_region
        _
      $region132: #{model_forward.1} parent=127 // pred_fallthru
        _
    $region128: #{model_forward.1} parent=5 // pred_fallthru
      _
    %p2964 = scmp.le.s32.totalorder 2, %s33
    // Predicated region
    $region133: #{model_forward.1} parent=5 // pred_check
      %p2965 = pneg %p2964
    $region134: #{model_forward.1} parent=5 // pred_check_branch
      %2967 = sbr.rel (%p2965) target = $region136
    $region135: #{model_forward.1} parent=5 // pred_region
      %s2968 = ssub.s32 %s33, 2
      // Predicated region
      $region137: #{model_forward.1} parent=135 // pred_check
        %p2969 = pneg %p639
      $region138: #{model_forward.1} parent=135 // pred_check_branch
        %2971 = sbr.rel (%p2969) target = $region140
      $region139: #{model_forward.1} parent=135 // pred_region
        %p2972 = scmp.lt.s32.totalorder %s39, 1
        %s2973 = scalar_select %p2972, %s39, 1
        %s2974 = smul.addr %s2973, 2
        %s2975 = scalar_lea.vmem %s27, %s2974
      $region140: #{model_forward.1} parent=135 // pred_fallthru
        _
    $region136: #{model_forward.1} parent=5 // pred_fallthru
      _
  $region6: #{model_forward.1} parent=0 // loop_footer
    %s37 = sadd.s32 1, %s33
  $region7: #{model_forward.1} parent=0 // loop_footer_branch
    %32 = sbr.rel target = $region3
  $region8: #{model_forward.1} parent=0 // loop_exit
    _

</llo_original>
